<compile_context>
chip_gen: v7x
topology: tpu7x:2x2x1
jax: 0.10.0
libtpu: 0.0.40
codegen_flags: <defaults>
</compile_context>

<pallas_src>
import math

import jax
import jax.numpy as jnp
from jax.experimental import pallas as pl
from jax.experimental.pallas import tpu as pltpu

# ---------------- synthetic BERT config (small) ----------------
VOCAB = 32
HIDDEN = 32
N_LAYERS = 2
N_HEADS = 4
HEAD_DIM = HIDDEN // N_HEADS
FFN = 64
MAX_POS = 16
TYPE_VOCAB = 2
N_CLASSES = 2
LN_EPS = 1e-12
NEG_INF = -1e9


# ---------------- single fused kernel (no grid, layers unrolled) -----------
def _make_kernel(B, S):
    scale = 1.0 / math.sqrt(HEAD_DIM)
    T = B * S

    def _mm(a, w):
        # bf16 MXU matmul, f32 accumulate (weights already bf16).
        return jnp.dot(a.astype(jnp.bfloat16), w,
                       preferred_element_type=jnp.float32)

    def _ln(y, g, b):
        mu = jnp.mean(y, axis=-1, keepdims=True)
        var = jnp.mean((y - mu) ** 2, axis=-1, keepdims=True)
        return (y - mu) * jax.lax.rsqrt(var + LN_EPS) * g + b

    def kernel(ids_ref, mask_ref, w_word_ref, w_pos_ref, w_type_ref,
               emb_g_ref, emb_b_ref,
               w_qkv_ref, b_qkv_ref, w_ao_ref, b_ao_ref,
               ln1_g_ref, ln1_b_ref, w_ff1_ref, b_ff1_ref,
               w_ff2_ref, b_ff2_ref, ln2_g_ref, ln2_b_ref,
               w_pool_ref, b_pool_ref, w_out_ref, b_out_ref,
               probs_ref):
        # ---- fused embeddings: one-hot gather on the MXU + pos/type + LN ----
        onehot = (jax.lax.broadcasted_iota(jnp.int32, (T, VOCAB), 1)
                  == ids_ref[...]).astype(jnp.float32)           # (T, VOCAB)
        word = jnp.dot(onehot, w_word_ref[...],
                       preferred_element_type=jnp.float32)        # (T, HIDDEN)
        pos = jnp.tile(w_pos_ref[0:S, :], (B, 1))                 # (T, HIDDEN)
        x = _ln(word + pos + w_type_ref[0:1, :],
                emb_g_ref[...], emb_b_ref[...])                   # (T, HIDDEN)

        # ---- loop-invariant: additive attention mask + per-head lane masks --
        add = ((1.0 - mask_ref[...]) * NEG_INF)[:, None, :]       # (B, 1, S)
        lane = jax.lax.broadcasted_iota(jnp.int32, (1, 1, HIDDEN), 2)
        head_masks = [((lane >= h * HEAD_DIM) & (lane < (h + 1) * HEAD_DIM)
                       ).astype(jnp.float32) for h in range(N_HEADS)]

        # ---- transformer layers (static unroll, all weights VMEM-resident) --
        for l in range(N_LAYERS):
            # fused QKV projection: one lane-wide matmul
            qkv = _mm(x, w_qkv_ref[l]) + b_qkv_ref[l]             # (T, 3*HIDDEN)
            q = qkv[:, 0:HIDDEN].reshape(B, S, HIDDEN) * scale
            k = qkv[:, HIDDEN:2 * HIDDEN].reshape(B, S, HIDDEN)
            v = qkv[:, 2 * HIDDEN:3 * HIDDEN].reshape(B, S, HIDDEN)

            # multi-head attention: heads via constant lane masks; the masked
            # full-width contraction gives head-h scores, and accumulating
            # P_h @ (V*mask_h) reconstructs the head-concat with no relayouts.
            ctx = jnp.zeros((B, S, HIDDEN), jnp.float32)
            for mh in head_masks:
                s = jnp.einsum("bqd,bkd->bqk", q * mh, k,
                               preferred_element_type=jnp.float32) + add
                m = jnp.max(s, axis=-1, keepdims=True)
                p = jnp.exp(s - m)
                p = p * pl.reciprocal(jnp.sum(p, axis=-1, keepdims=True),
                                      approx=True)
                ctx = ctx + jnp.einsum("bqk,bkd->bqd", p, v * mh,
                                       preferred_element_type=jnp.float32)
            ctx2 = ctx.reshape(T, HIDDEN)

            # attention output proj + residual + LN (fused)
            x1 = _ln(_mm(ctx2, w_ao_ref[l]) + b_ao_ref[l] + x,
                     ln1_g_ref[l], ln1_b_ref[l])

            # FFN + residual + LN (fused)
            # TODO(synk): HF BERT uses exact erf GELU; tanh approximation here.
            h1 = jax.nn.gelu(_mm(x1, w_ff1_ref[l]) + b_ff1_ref[l],
                             approximate=True)
            x = _ln(_mm(h1, w_ff2_ref[l]) + b_ff2_ref[l] + x1,
                    ln2_g_ref[l], ln2_b_ref[l])

        # ---- pooler([CLS]) -> dropout(identity) -> Linear -> Softmax --------
        # (pooler & classifier matmuls cannot be fused into one MXU push
        #  without changing the math: tanh sits between them.)
        cls = x.reshape(B, S, HIDDEN)[:, 0, :]                    # (B, HIDDEN)
        pooled = jnp.tanh(
            jnp.dot(cls, w_pool_ref[...],
                    preferred_element_type=jnp.float32) + b_pool_ref[...])
        # TODO(synk): train-mode Dropout(p=0.3) would need pltpu.prng_*;
        # identity at inference.
        logits = (jnp.dot(pooled, w_out_ref[...],
                          preferred_element_type=jnp.float32) + b_out_ref[...])
        e = jnp.exp(logits - jnp.max(logits, axis=-1, keepdims=True))
        probs_ref[...] = e / jnp.sum(e, axis=-1, keepdims=True)

    return kernel


# ---------------- deterministic parameter init ----------------
def init_params(key):
    def nrm(k, shape, dtype=jnp.float32):
        return (0.02 * jax.random.normal(k, shape, jnp.float32)).astype(dtype)

    keys = iter(jax.random.split(key, 32))
    return {
        "word_emb": nrm(next(keys), (VOCAB, HIDDEN)),
        "pos_emb": nrm(next(keys), (MAX_POS, HIDDEN)),
        "type_emb": nrm(next(keys), (TYPE_VOCAB, HIDDEN)),
        "emb_ln_g": jnp.ones((1, HIDDEN), jnp.float32),
        "emb_ln_b": jnp.zeros((1, HIDDEN), jnp.float32),
        # Per-layer weights stacked with a leading layer axis; the whole stack
        # (~32 KB) is VMEM-resident for the single kernel invocation. Matmul
        # weights in bf16 (MXU feed); biases / LN params stay f32.
        "w_qkv": nrm(next(keys), (N_LAYERS, HIDDEN, 3 * HIDDEN), jnp.bfloat16),
        "b_qkv": jnp.zeros((N_LAYERS, 1, 3 * HIDDEN), jnp.float32),
        "w_ao": nrm(next(keys), (N_LAYERS, HIDDEN, HIDDEN), jnp.bfloat16),
        "b_ao": jnp.zeros((N_LAYERS, 1, HIDDEN), jnp.float32),
        "ln1_g": jnp.ones((N_LAYERS, 1, HIDDEN), jnp.float32),
        "ln1_b": jnp.zeros((N_LAYERS, 1, HIDDEN), jnp.float32),
        "w_ff1": nrm(next(keys), (N_LAYERS, HIDDEN, FFN), jnp.bfloat16),
        "b_ff1": jnp.zeros((N_LAYERS, 1, FFN), jnp.float32),
        "w_ff2": nrm(next(keys), (N_LAYERS, FFN, HIDDEN), jnp.bfloat16),
        "b_ff2": jnp.zeros((N_LAYERS, 1, HIDDEN), jnp.float32),
        "ln2_g": jnp.ones((N_LAYERS, 1, HIDDEN), jnp.float32),
        "ln2_b": jnp.zeros((N_LAYERS, 1, HIDDEN), jnp.float32),
        "w_pool": nrm(next(keys), (HIDDEN, HIDDEN)),
        "b_pool": jnp.zeros((1, HIDDEN), jnp.float32),
        "w_out": nrm(next(keys), (HIDDEN, N_CLASSES)),
        "b_out": jnp.zeros((1, N_CLASSES), jnp.float32),
    }


# ---------------- forward (mirrors Classfier.forward) ----------------
def classifier_forward(params, input_ids, attention_mask):
    # torch.squeeze on the (B, 1, S) dataloader tensors (axis=1 so B=1 works).
    input_ids = jnp.squeeze(input_ids, axis=1)
    attention_mask = jnp.squeeze(attention_mask, axis=1)
    B, S = input_ids.shape
    assert S <= MAX_POS, "sequence length exceeds synthetic position table"

    ids = input_ids.reshape(B * S, 1).astype(jnp.int32)
    mask_f = attention_mask.astype(jnp.float32)

    operands = (
        ids, mask_f,
        params["word_emb"], params["pos_emb"], params["type_emb"],
        params["emb_ln_g"], params["emb_ln_b"],
        params["w_qkv"], params["b_qkv"], params["w_ao"], params["b_ao"],
        params["ln1_g"], params["ln1_b"], params["w_ff1"], params["b_ff1"],
        params["w_ff2"], params["b_ff2"], params["ln2_g"], params["ln2_b"],
        params["w_pool"], params["b_pool"], params["w_out"], params["b_out"],
    )
    vmem_spec = pl.BlockSpec(memory_space=pltpu.MemorySpace.VMEM)

    # Single invocation, no grid: everything (ids, tables, stacked layer
    # weights, activations) lives in VMEM for the whole encoder.
    probs = pl.pallas_call(
        _make_kernel(B, S),
        out_shape=jax.ShapeDtypeStruct((B, N_CLASSES), jnp.float32),
        in_specs=[vmem_spec] * len(operands),
        out_specs=vmem_spec,
    )(*operands)
    return probs  # (B, n_classes), rows sum to 1


if __name__ == "__main__":
    key = jax.random.PRNGKey(0)
    pkey, ikey = jax.random.split(key, 2)
    params = init_params(pkey)

    B, S = 2, 8
    input_ids = jax.random.randint(ikey, (B, 1, S), 0, VOCAB, dtype=jnp.int32)
    attention_mask = jnp.concatenate(
        [jnp.ones((B, 1, S - 2), jnp.int32), jnp.zeros((B, 1, 2), jnp.int32)],
        axis=-1)

    out = classifier_forward(params, input_ids, attention_mask)
    out = jax.block_until_ready(out)
    assert out.shape == (B, N_CLASSES)
    assert bool(jnp.allclose(jnp.sum(out, axis=1), 1.0, atol=1e-5))
    print("KERNEL_OK")
</pallas_src>

<mosaic_0001>
module attributes {stable_mosaic.version = 11 : i64} {
  func.func @kernel(%arg0: memref<16x1xi32, #tpu.memory_space<vmem>>, %arg1: memref<2x8xf32, #tpu.memory_space<vmem>>, %arg2: memref<32x32xf32, #tpu.memory_space<vmem>>, %arg3: memref<16x32xf32, #tpu.memory_space<vmem>>, %arg4: memref<2x32xf32, #tpu.memory_space<vmem>>, %arg5: memref<1x32xf32, #tpu.memory_space<vmem>>, %arg6: memref<1x32xf32, #tpu.memory_space<vmem>>, %arg7: memref<2x32x96xbf16, #tpu.memory_space<vmem>>, %arg8: memref<2x1x96xf32, #tpu.memory_space<vmem>>, %arg9: memref<2x32x32xbf16, #tpu.memory_space<vmem>>, %arg10: memref<2x1x32xf32, #tpu.memory_space<vmem>>, %arg11: memref<2x1x32xf32, #tpu.memory_space<vmem>>, %arg12: memref<2x1x32xf32, #tpu.memory_space<vmem>>, %arg13: memref<2x32x64xbf16, #tpu.memory_space<vmem>>, %arg14: memref<2x1x64xf32, #tpu.memory_space<vmem>>, %arg15: memref<2x64x32xbf16, #tpu.memory_space<vmem>>, %arg16: memref<2x1x32xf32, #tpu.memory_space<vmem>>, %arg17: memref<2x1x32xf32, #tpu.memory_space<vmem>>, %arg18: memref<2x1x32xf32, #tpu.memory_space<vmem>>, %arg19: memref<32x32xf32, #tpu.memory_space<vmem>>, %arg20: memref<1x32xf32, #tpu.memory_space<vmem>>, %arg21: memref<32x2xf32, #tpu.memory_space<vmem>>, %arg22: memref<1x2xf32, #tpu.memory_space<vmem>>, %arg23: memref<2x2xf32, #tpu.memory_space<vmem>>) attributes {dimension_semantics = [], scalar_prefetch = 0 : i64, scratch_operands = 0 : i64, tpu.core_type = #tpu.core_type<tc>} {
    %0 = tpu.iota {dimensions = array<i32: 1>} : vector<16x32xi32>
    %c0 = arith.constant 0 : index
    %c0_0 = arith.constant 0 : index
    %1 = vector.load %arg0[%c0, %c0_0] : memref<16x1xi32, #tpu.memory_space<vmem>>, vector<16x1xi32>
    %2 = vector.broadcast %1 : vector<16x1xi32> to vector<16x32xi32>
    %3 = arith.cmpi eq, %0, %2 : vector<16x32xi32>
    %4 = arith.extui %3 : vector<16x32xi1> to vector<16x32xi32>
    %5 = arith.sitofp %4 : vector<16x32xi32> to vector<16x32xf32>
    %c0_1 = arith.constant 0 : index
    %c0_2 = arith.constant 0 : index
    %6 = vector.load %arg2[%c0_1, %c0_2] : memref<32x32xf32, #tpu.memory_space<vmem>>, vector<32x32xf32>
    %cst = arith.constant dense<0.000000e+00> : vector<16x32xf32>
    %7 = tpu.matmul %5, %6, %cst {dimension_numbers = #tpu.dot_dimension_numbers<[1], [0], [0], [1], [0, 0, 1, 1], [], []>} : vector<16x32xf32>, vector<32x32xf32>, vector<16x32xf32> -> vector<16x32xf32>
    %c0_3 = arith.constant 0 : index
    %c0_4 = arith.constant 0 : index
    %8 = vector.load %arg3[%c0_3, %c0_4] : memref<16x32xf32, #tpu.memory_space<vmem>>, vector<8x32xf32>
    %9 = tpu.concatenate %8, %8 in 0 : vector<8x32xf32>, vector<8x32xf32> -> vector<16x32xf32>
    %10 = arith.addf %7, %9 : vector<16x32xf32>
    %c0_5 = arith.constant 0 : index
    %c0_6 = arith.constant 0 : index
    %11 = vector.load %arg4[%c0_5, %c0_6] : memref<2x32xf32, #tpu.memory_space<vmem>>, vector<1x32xf32>
    %12 = vector.broadcast %11 : vector<1x32xf32> to vector<16x32xf32>
    %13 = arith.addf %10, %12 : vector<16x32xf32>
    %c0_7 = arith.constant 0 : index
    %c0_8 = arith.constant 0 : index
    %14 = vector.load %arg5[%c0_7, %c0_8] : memref<1x32xf32, #tpu.memory_space<vmem>>, vector<1x32xf32>
    %c0_9 = arith.constant 0 : index
    %c0_10 = arith.constant 0 : index
    %15 = vector.load %arg6[%c0_9, %c0_10] : memref<1x32xf32, #tpu.memory_space<vmem>>, vector<1x32xf32>
    %cst_11 = arith.constant dense<0.000000e+00> : vector<16xf32>
    %16 = vector.multi_reduction <add>, %13, %cst_11 [1] : vector<16x32xf32> to vector<16xf32>
    %17 = vector.shape_cast %16 : vector<16xf32> to vector<16x1xf32>
    %cst_12 = arith.constant 3.200000e+01 : f32
    %18 = vector.broadcast %cst_12 : f32 to vector<16x1xf32>
    %19 = arith.divf %17, %18 : vector<16x1xf32>
    %20 = vector.broadcast %19 : vector<16x1xf32> to vector<16x32xf32>
    %21 = arith.subf %13, %20 : vector<16x32xf32>
    %22 = arith.mulf %21, %21 : vector<16x32xf32>
    %cst_13 = arith.constant dense<0.000000e+00> : vector<16xf32>
    %23 = vector.multi_reduction <add>, %22, %cst_13 [1] : vector<16x32xf32> to vector<16xf32>
    %24 = vector.shape_cast %23 : vector<16xf32> to vector<16x1xf32>
    %cst_14 = arith.constant 3.200000e+01 : f32
    %25 = vector.broadcast %cst_14 : f32 to vector<16x1xf32>
    %26 = arith.divf %24, %25 : vector<16x1xf32>
    %27 = vector.broadcast %19 : vector<16x1xf32> to vector<16x32xf32>
    %28 = arith.subf %13, %27 : vector<16x32xf32>
    %cst_15 = arith.constant 9.99999996E-13 : f32
    %29 = vector.broadcast %cst_15 : f32 to vector<16x1xf32>
    %30 = arith.addf %26, %29 : vector<16x1xf32>
    %31 = math.rsqrt %30 : vector<16x1xf32>
    %32 = vector.broadcast %31 : vector<16x1xf32> to vector<16x32xf32>
    %33 = arith.mulf %28, %32 : vector<16x32xf32>
    %34 = vector.broadcast %14 : vector<1x32xf32> to vector<16x32xf32>
    %35 = arith.mulf %33, %34 : vector<16x32xf32>
    %36 = vector.broadcast %15 : vector<1x32xf32> to vector<16x32xf32>
    %37 = arith.addf %35, %36 : vector<16x32xf32>
    %c0_16 = arith.constant 0 : index
    %c0_17 = arith.constant 0 : index
    %38 = vector.load %arg1[%c0_16, %c0_17] : memref<2x8xf32, #tpu.memory_space<vmem>>, vector<2x8xf32>
    %cst_18 = arith.constant 1.000000e+00 : f32
    %39 = vector.broadcast %cst_18 : f32 to vector<2x8xf32>
    %40 = arith.subf %39, %38 : vector<2x8xf32>
    %cst_19 = arith.constant -1.000000e+09 : f32
    %41 = vector.broadcast %cst_19 : f32 to vector<2x8xf32>
    %42 = arith.mulf %40, %41 : vector<2x8xf32>
    %43 = vector.shape_cast %42 : vector<2x8xf32> to vector<2x1x8xf32>
    %44 = tpu.iota {dimensions = array<i32: 2>} : vector<1x1x32xi32>
    %c0_i32 = arith.constant 0 : i32
    %45 = vector.broadcast %c0_i32 : i32 to vector<1x1x32xi32>
    %46 = arith.cmpi sge, %44, %45 : vector<1x1x32xi32>
    %c8_i32 = arith.constant 8 : i32
    %47 = vector.broadcast %c8_i32 : i32 to vector<1x1x32xi32>
    %48 = arith.cmpi slt, %44, %47 : vector<1x1x32xi32>
    %49 = arith.andi %46, %48 : vector<1x1x32xi1>
    %50 = arith.extui %49 : vector<1x1x32xi1> to vector<1x1x32xi32>
    %51 = arith.sitofp %50 : vector<1x1x32xi32> to vector<1x1x32xf32>
    %c8_i32_20 = arith.constant 8 : i32
    %52 = vector.broadcast %c8_i32_20 : i32 to vector<1x1x32xi32>
    %53 = arith.cmpi sge, %44, %52 : vector<1x1x32xi32>
    %c16_i32 = arith.constant 16 : i32
    %54 = vector.broadcast %c16_i32 : i32 to vector<1x1x32xi32>
    %55 = arith.cmpi slt, %44, %54 : vector<1x1x32xi32>
    %56 = arith.andi %53, %55 : vector<1x1x32xi1>
    %57 = arith.extui %56 : vector<1x1x32xi1> to vector<1x1x32xi32>
    %58 = arith.sitofp %57 : vector<1x1x32xi32> to vector<1x1x32xf32>
    %c16_i32_21 = arith.constant 16 : i32
    %59 = vector.broadcast %c16_i32_21 : i32 to vector<1x1x32xi32>
    %60 = arith.cmpi sge, %44, %59 : vector<1x1x32xi32>
    %c24_i32 = arith.constant 24 : i32
    %61 = vector.broadcast %c24_i32 : i32 to vector<1x1x32xi32>
    %62 = arith.cmpi slt, %44, %61 : vector<1x1x32xi32>
    %63 = arith.andi %60, %62 : vector<1x1x32xi1>
    %64 = arith.extui %63 : vector<1x1x32xi1> to vector<1x1x32xi32>
    %65 = arith.sitofp %64 : vector<1x1x32xi32> to vector<1x1x32xf32>
    %c24_i32_22 = arith.constant 24 : i32
    %66 = vector.broadcast %c24_i32_22 : i32 to vector<1x1x32xi32>
    %67 = arith.cmpi sge, %44, %66 : vector<1x1x32xi32>
    %c32_i32 = arith.constant 32 : i32
    %68 = vector.broadcast %c32_i32 : i32 to vector<1x1x32xi32>
    %69 = arith.cmpi slt, %44, %68 : vector<1x1x32xi32>
    %70 = arith.andi %67, %69 : vector<1x1x32xi1>
    %71 = arith.extui %70 : vector<1x1x32xi1> to vector<1x1x32xi32>
    %72 = arith.sitofp %71 : vector<1x1x32xi32> to vector<1x1x32xf32>
    %c0_23 = arith.constant 0 : index
    %c0_24 = arith.constant 0 : index
    %c0_25 = arith.constant 0 : index
    %73 = vector.load %arg7[%c0_23, %c0_24, %c0_25] : memref<2x32x96xbf16, #tpu.memory_space<vmem>>, vector<1x32x96xbf16>
    %74 = vector.shape_cast %73 : vector<1x32x96xbf16> to vector<32x96xbf16>
    %75 = arith.truncf %37 : vector<16x32xf32> to vector<16x32xbf16>
    %cst_26 = arith.constant dense<0.000000e+00> : vector<16x96xf32>
    %76 = tpu.matmul %75, %74, %cst_26 {dimension_numbers = #tpu.dot_dimension_numbers<[1], [0], [0], [1], [0, 0, 1, 1], [], []>} : vector<16x32xbf16>, vector<32x96xbf16>, vector<16x96xf32> -> vector<16x96xf32>
    %c0_27 = arith.constant 0 : index
    %c0_28 = arith.constant 0 : index
    %c0_29 = arith.constant 0 : index
    %77 = vector.load %arg8[%c0_27, %c0_28, %c0_29] : memref<2x1x96xf32, #tpu.memory_space<vmem>>, vector<1x1x96xf32>
    %78 = vector.shape_cast %77 : vector<1x1x96xf32> to vector<1x96xf32>
    %79 = vector.broadcast %78 : vector<1x96xf32> to vector<16x96xf32>
    %80 = arith.addf %76, %79 : vector<16x96xf32>
    %81 = vector.extract_strided_slice %80 {offsets = [0, 0], sizes = [16, 32], strides = [1, 1]} : vector<16x96xf32> to vector<16x32xf32>
    %82 = vector.shape_cast %81 : vector<16x32xf32> to vector<2x8x32xf32>
    %cst_30 = arith.constant 0.353553385 : f32
    %83 = vector.broadcast %cst_30 : f32 to vector<2x8x32xf32>
    %84 = arith.mulf %82, %83 : vector<2x8x32xf32>
    %85 = vector.extract_strided_slice %80 {offsets = [0, 32], sizes = [16, 32], strides = [1, 1]} : vector<16x96xf32> to vector<16x32xf32>
    %86 = vector.shape_cast %85 : vector<16x32xf32> to vector<2x8x32xf32>
    %87 = vector.extract_strided_slice %80 {offsets = [0, 64], sizes = [16, 32], strides = [1, 1]} : vector<16x96xf32> to vector<16x32xf32>
    %88 = vector.shape_cast %87 : vector<16x32xf32> to vector<2x8x32xf32>
    %cst_31 = arith.constant 0.000000e+00 : f32
    %89 = vector.broadcast %cst_31 : f32 to vector<2x8x32xf32>
    %90 = vector.broadcast %51 : vector<1x1x32xf32> to vector<2x8x32xf32>
    %91 = arith.mulf %84, %90 : vector<2x8x32xf32>
    "tpu.trace_start"() <{level = 10 : i32, message = "bqd,bkd->bqk"}> : () -> ()
    %cst_32 = arith.constant dense<0.000000e+00> : vector<2x8x8xf32>
    %92 = tpu.matmul %91, %86, %cst_32 {dimension_numbers = #tpu.dot_dimension_numbers<[2], [2], [1], [1], [0, 0, 0, 1, 1, 1], [0], [0]>} : vector<2x8x32xf32>, vector<2x8x32xf32>, vector<2x8x8xf32> -> vector<2x8x8xf32>
    "tpu.trace_stop"() : () -> ()
    %93 = vector.broadcast %43 : vector<2x1x8xf32> to vector<2x8x8xf32>
    %94 = arith.addf %92, %93 : vector<2x8x8xf32>
    %cst_33 = arith.constant dense<0xFF800000> : vector<2x8xf32>
    %95 = vector.multi_reduction <maximumf>, %94, %cst_33 [2] : vector<2x8x8xf32> to vector<2x8xf32>
    %96 = vector.shape_cast %95 : vector<2x8xf32> to vector<2x8x1xf32>
    %97 = vector.broadcast %96 : vector<2x8x1xf32> to vector<2x8x8xf32>
    %98 = arith.subf %94, %97 : vector<2x8x8xf32>
    %99 = math.exp %98 : vector<2x8x8xf32>
    %cst_34 = arith.constant dense<0.000000e+00> : vector<2x8xf32>
    %100 = vector.multi_reduction <add>, %99, %cst_34 [2] : vector<2x8x8xf32> to vector<2x8xf32>
    %101 = vector.shape_cast %100 : vector<2x8xf32> to vector<2x8x1xf32>
    %102 = tpu.reciprocal %101 {approx = true} : vector<2x8x1xf32> -> vector<2x8x1xf32>
    %103 = vector.broadcast %102 : vector<2x8x1xf32> to vector<2x8x8xf32>
    %104 = arith.mulf %99, %103 : vector<2x8x8xf32>
    %105 = vector.broadcast %51 : vector<1x1x32xf32> to vector<2x8x32xf32>
    %106 = arith.mulf %88, %105 : vector<2x8x32xf32>
    "tpu.trace_start"() <{level = 10 : i32, message = "bqk,bkd->bqd"}> : () -> ()
    %cst_35 = arith.constant dense<0.000000e+00> : vector<2x8x32xf32>
    %107 = tpu.matmul %104, %106, %cst_35 {dimension_numbers = #tpu.dot_dimension_numbers<[2], [1], [1], [2], [0, 0, 0, 1, 1, 2], [0], [0]>} : vector<2x8x8xf32>, vector<2x8x32xf32>, vector<2x8x32xf32> -> vector<2x8x32xf32>
    "tpu.trace_stop"() : () -> ()
    %108 = arith.addf %89, %107 : vector<2x8x32xf32>
    %109 = vector.broadcast %58 : vector<1x1x32xf32> to vector<2x8x32xf32>
    %110 = arith.mulf %84, %109 : vector<2x8x32xf32>
    "tpu.trace_start"() <{level = 10 : i32, message = "bqd,bkd->bqk"}> : () -> ()
    %cst_36 = arith.constant dense<0.000000e+00> : vector<2x8x8xf32>
    %111 = tpu.matmul %110, %86, %cst_36 {dimension_numbers = #tpu.dot_dimension_numbers<[2], [2], [1], [1], [0, 0, 0, 1, 1, 1], [0], [0]>} : vector<2x8x32xf32>, vector<2x8x32xf32>, vector<2x8x8xf32> -> vector<2x8x8xf32>
    "tpu.trace_stop"() : () -> ()
    %112 = vector.broadcast %43 : vector<2x1x8xf32> to vector<2x8x8xf32>
    %113 = arith.addf %111, %112 : vector<2x8x8xf32>
    %cst_37 = arith.constant dense<0xFF800000> : vector<2x8xf32>
    %114 = vector.multi_reduction <maximumf>, %113, %cst_37 [2] : vector<2x8x8xf32> to vector<2x8xf32>
    %115 = vector.shape_cast %114 : vector<2x8xf32> to vector<2x8x1xf32>
    %116 = vector.broadcast %115 : vector<2x8x1xf32> to vector<2x8x8xf32>
    %117 = arith.subf %113, %116 : vector<2x8x8xf32>
    %118 = math.exp %117 : vector<2x8x8xf32>
    %cst_38 = arith.constant dense<0.000000e+00> : vector<2x8xf32>
    %119 = vector.multi_reduction <add>, %118, %cst_38 [2] : vector<2x8x8xf32> to vector<2x8xf32>
    %120 = vector.shape_cast %119 : vector<2x8xf32> to vector<2x8x1xf32>
    %121 = tpu.reciprocal %120 {approx = true} : vector<2x8x1xf32> -> vector<2x8x1xf32>
    %122 = vector.broadcast %121 : vector<2x8x1xf32> to vector<2x8x8xf32>
    %123 = arith.mulf %118, %122 : vector<2x8x8xf32>
    %124 = vector.broadcast %58 : vector<1x1x32xf32> to vector<2x8x32xf32>
    %125 = arith.mulf %88, %124 : vector<2x8x32xf32>
    "tpu.trace_start"() <{level = 10 : i32, message = "bqk,bkd->bqd"}> : () -> ()
    %cst_39 = arith.constant dense<0.000000e+00> : vector<2x8x32xf32>
    %126 = tpu.matmul %123, %125, %cst_39 {dimension_numbers = #tpu.dot_dimension_numbers<[2], [1], [1], [2], [0, 0, 0, 1, 1, 2], [0], [0]>} : vector<2x8x8xf32>, vector<2x8x32xf32>, vector<2x8x32xf32> -> vector<2x8x32xf32>
    "tpu.trace_stop"() : () -> ()
    %127 = arith.addf %108, %126 : vector<2x8x32xf32>
    %128 = vector.broadcast %65 : vector<1x1x32xf32> to vector<2x8x32xf32>
    %129 = arith.mulf %84, %128 : vector<2x8x32xf32>
    "tpu.trace_start"() <{level = 10 : i32, message = "bqd,bkd->bqk"}> : () -> ()
    %cst_40 = arith.constant dense<0.000000e+00> : vector<2x8x8xf32>
    %130 = tpu.matmul %129, %86, %cst_40 {dimension_numbers = #tpu.dot_dimension_numbers<[2], [2], [1], [1], [0, 0, 0, 1, 1, 1], [0], [0]>} : vector<2x8x32xf32>, vector<2x8x32xf32>, vector<2x8x8xf32> -> vector<2x8x8xf32>
    "tpu.trace_stop"() : () -> ()
    %131 = vector.broadcast %43 : vector<2x1x8xf32> to vector<2x8x8xf32>
    %132 = arith.addf %130, %131 : vector<2x8x8xf32>
    %cst_41 = arith.constant dense<0xFF800000> : vector<2x8xf32>
    %133 = vector.multi_reduction <maximumf>, %132, %cst_41 [2] : vector<2x8x8xf32> to vector<2x8xf32>
    %134 = vector.shape_cast %133 : vector<2x8xf32> to vector<2x8x1xf32>
    %135 = vector.broadcast %134 : vector<2x8x1xf32> to vector<2x8x8xf32>
    %136 = arith.subf %132, %135 : vector<2x8x8xf32>
    %137 = math.exp %136 : vector<2x8x8xf32>
    %cst_42 = arith.constant dense<0.000000e+00> : vector<2x8xf32>
    %138 = vector.multi_reduction <add>, %137, %cst_42 [2] : vector<2x8x8xf32> to vector<2x8xf32>
    %139 = vector.shape_cast %138 : vector<2x8xf32> to vector<2x8x1xf32>
    %140 = tpu.reciprocal %139 {approx = true} : vector<2x8x1xf32> -> vector<2x8x1xf32>
    %141 = vector.broadcast %140 : vector<2x8x1xf32> to vector<2x8x8xf32>
    %142 = arith.mulf %137, %141 : vector<2x8x8xf32>
    %143 = vector.broadcast %65 : vector<1x1x32xf32> to vector<2x8x32xf32>
    %144 = arith.mulf %88, %143 : vector<2x8x32xf32>
    "tpu.trace_start"() <{level = 10 : i32, message = "bqk,bkd->bqd"}> : () -> ()
    %cst_43 = arith.constant dense<0.000000e+00> : vector<2x8x32xf32>
    %145 = tpu.matmul %142, %144, %cst_43 {dimension_numbers = #tpu.dot_dimension_numbers<[2], [1], [1], [2], [0, 0, 0, 1, 1, 2], [0], [0]>} : vector<2x8x8xf32>, vector<2x8x32xf32>, vector<2x8x32xf32> -> vector<2x8x32xf32>
    "tpu.trace_stop"() : () -> ()
    %146 = arith.addf %127, %145 : vector<2x8x32xf32>
    %147 = vector.broadcast %72 : vector<1x1x32xf32> to vector<2x8x32xf32>
    %148 = arith.mulf %84, %147 : vector<2x8x32xf32>
    "tpu.trace_start"() <{level = 10 : i32, message = "bqd,bkd->bqk"}> : () -> ()
    %cst_44 = arith.constant dense<0.000000e+00> : vector<2x8x8xf32>
    %149 = tpu.matmul %148, %86, %cst_44 {dimension_numbers = #tpu.dot_dimension_numbers<[2], [2], [1], [1], [0, 0, 0, 1, 1, 1], [0], [0]>} : vector<2x8x32xf32>, vector<2x8x32xf32>, vector<2x8x8xf32> -> vector<2x8x8xf32>
    "tpu.trace_stop"() : () -> ()
    %150 = vector.broadcast %43 : vector<2x1x8xf32> to vector<2x8x8xf32>
    %151 = arith.addf %149, %150 : vector<2x8x8xf32>
    %cst_45 = arith.constant dense<0xFF800000> : vector<2x8xf32>
    %152 = vector.multi_reduction <maximumf>, %151, %cst_45 [2] : vector<2x8x8xf32> to vector<2x8xf32>
    %153 = vector.shape_cast %152 : vector<2x8xf32> to vector<2x8x1xf32>
    %154 = vector.broadcast %153 : vector<2x8x1xf32> to vector<2x8x8xf32>
    %155 = arith.subf %151, %154 : vector<2x8x8xf32>
    %156 = math.exp %155 : vector<2x8x8xf32>
    %cst_46 = arith.constant dense<0.000000e+00> : vector<2x8xf32>
    %157 = vector.multi_reduction <add>, %156, %cst_46 [2] : vector<2x8x8xf32> to vector<2x8xf32>
    %158 = vector.shape_cast %157 : vector<2x8xf32> to vector<2x8x1xf32>
    %159 = tpu.reciprocal %158 {approx = true} : vector<2x8x1xf32> -> vector<2x8x1xf32>
    %160 = vector.broadcast %159 : vector<2x8x1xf32> to vector<2x8x8xf32>
    %161 = arith.mulf %156, %160 : vector<2x8x8xf32>
    %162 = vector.broadcast %72 : vector<1x1x32xf32> to vector<2x8x32xf32>
    %163 = arith.mulf %88, %162 : vector<2x8x32xf32>
    "tpu.trace_start"() <{level = 10 : i32, message = "bqk,bkd->bqd"}> : () -> ()
    %cst_47 = arith.constant dense<0.000000e+00> : vector<2x8x32xf32>
    %164 = tpu.matmul %161, %163, %cst_47 {dimension_numbers = #tpu.dot_dimension_numbers<[2], [1], [1], [2], [0, 0, 0, 1, 1, 2], [0], [0]>} : vector<2x8x8xf32>, vector<2x8x32xf32>, vector<2x8x32xf32> -> vector<2x8x32xf32>
    "tpu.trace_stop"() : () -> ()
    %165 = arith.addf %146, %164 : vector<2x8x32xf32>
    %166 = vector.shape_cast %165 : vector<2x8x32xf32> to vector<16x32xf32>
    %c0_48 = arith.constant 0 : index
    %c0_49 = arith.constant 0 : index
    %c0_50 = arith.constant 0 : index
    %167 = vector.load %arg9[%c0_48, %c0_49, %c0_50] : memref<2x32x32xbf16, #tpu.memory_space<vmem>>, vector<1x32x32xbf16>
    %168 = vector.shape_cast %167 : vector<1x32x32xbf16> to vector<32x32xbf16>
    %169 = arith.truncf %166 : vector<16x32xf32> to vector<16x32xbf16>
    %cst_51 = arith.constant dense<0.000000e+00> : vector<16x32xf32>
    %170 = tpu.matmul %169, %168, %cst_51 {dimension_numbers = #tpu.dot_dimension_numbers<[1], [0], [0], [1], [0, 0, 1, 1], [], []>} : vector<16x32xbf16>, vector<32x32xbf16>, vector<16x32xf32> -> vector<16x32xf32>
    %c0_52 = arith.constant 0 : index
    %c0_53 = arith.constant 0 : index
    %c0_54 = arith.constant 0 : index
    %171 = vector.load %arg10[%c0_52, %c0_53, %c0_54] : memref<2x1x32xf32, #tpu.memory_space<vmem>>, vector<1x1x32xf32>
    %172 = vector.shape_cast %171 : vector<1x1x32xf32> to vector<1x32xf32>
    %173 = vector.broadcast %172 : vector<1x32xf32> to vector<16x32xf32>
    %174 = arith.addf %170, %173 : vector<16x32xf32>
    %175 = arith.addf %174, %37 : vector<16x32xf32>
    %c0_55 = arith.constant 0 : index
    %c0_56 = arith.constant 0 : index
    %c0_57 = arith.constant 0 : index
    %176 = vector.load %arg11[%c0_55, %c0_56, %c0_57] : memref<2x1x32xf32, #tpu.memory_space<vmem>>, vector<1x1x32xf32>
    %177 = vector.shape_cast %176 : vector<1x1x32xf32> to vector<1x32xf32>
    %c0_58 = arith.constant 0 : index
    %c0_59 = arith.constant 0 : index
    %c0_60 = arith.constant 0 : index
    %178 = vector.load %arg12[%c0_58, %c0_59, %c0_60] : memref<2x1x32xf32, #tpu.memory_space<vmem>>, vector<1x1x32xf32>
    %179 = vector.shape_cast %178 : vector<1x1x32xf32> to vector<1x32xf32>
    %cst_61 = arith.constant dense<0.000000e+00> : vector<16xf32>
    %180 = vector.multi_reduction <add>, %175, %cst_61 [1] : vector<16x32xf32> to vector<16xf32>
    %181 = vector.shape_cast %180 : vector<16xf32> to vector<16x1xf32>
    %cst_62 = arith.constant 3.200000e+01 : f32
    %182 = vector.broadcast %cst_62 : f32 to vector<16x1xf32>
    %183 = arith.divf %181, %182 : vector<16x1xf32>
    %184 = vector.broadcast %183 : vector<16x1xf32> to vector<16x32xf32>
    %185 = arith.subf %175, %184 : vector<16x32xf32>
    %186 = arith.mulf %185, %185 : vector<16x32xf32>
    %cst_63 = arith.constant dense<0.000000e+00> : vector<16xf32>
    %187 = vector.multi_reduction <add>, %186, %cst_63 [1] : vector<16x32xf32> to vector<16xf32>
    %188 = vector.shape_cast %187 : vector<16xf32> to vector<16x1xf32>
    %cst_64 = arith.constant 3.200000e+01 : f32
    %189 = vector.broadcast %cst_64 : f32 to vector<16x1xf32>
    %190 = arith.divf %188, %189 : vector<16x1xf32>
    %191 = vector.broadcast %183 : vector<16x1xf32> to vector<16x32xf32>
    %192 = arith.subf %175, %191 : vector<16x32xf32>
    %cst_65 = arith.constant 9.99999996E-13 : f32
    %193 = vector.broadcast %cst_65 : f32 to vector<16x1xf32>
    %194 = arith.addf %190, %193 : vector<16x1xf32>
    %195 = math.rsqrt %194 : vector<16x1xf32>
    %196 = vector.broadcast %195 : vector<16x1xf32> to vector<16x32xf32>
    %197 = arith.mulf %192, %196 : vector<16x32xf32>
    %198 = vector.broadcast %177 : vector<1x32xf32> to vector<16x32xf32>
    %199 = arith.mulf %197, %198 : vector<16x32xf32>
    %200 = vector.broadcast %179 : vector<1x32xf32> to vector<16x32xf32>
    %201 = arith.addf %199, %200 : vector<16x32xf32>
    %c0_66 = arith.constant 0 : index
    %c0_67 = arith.constant 0 : index
    %c0_68 = arith.constant 0 : index
    %202 = vector.load %arg13[%c0_66, %c0_67, %c0_68] : memref<2x32x64xbf16, #tpu.memory_space<vmem>>, vector<1x32x64xbf16>
    %203 = vector.shape_cast %202 : vector<1x32x64xbf16> to vector<32x64xbf16>
    %204 = arith.truncf %201 : vector<16x32xf32> to vector<16x32xbf16>
    %cst_69 = arith.constant dense<0.000000e+00> : vector<16x64xf32>
    %205 = tpu.matmul %204, %203, %cst_69 {dimension_numbers = #tpu.dot_dimension_numbers<[1], [0], [0], [1], [0, 0, 1, 1], [], []>} : vector<16x32xbf16>, vector<32x64xbf16>, vector<16x64xf32> -> vector<16x64xf32>
    %c0_70 = arith.constant 0 : index
    %c0_71 = arith.constant 0 : index
    %c0_72 = arith.constant 0 : index
    %206 = vector.load %arg14[%c0_70, %c0_71, %c0_72] : memref<2x1x64xf32, #tpu.memory_space<vmem>>, vector<1x1x64xf32>
    %207 = vector.shape_cast %206 : vector<1x1x64xf32> to vector<1x64xf32>
    %208 = vector.broadcast %207 : vector<1x64xf32> to vector<16x64xf32>
    %209 = arith.addf %205, %208 : vector<16x64xf32>
    %210 = arith.mulf %209, %209 : vector<16x64xf32>
    %211 = arith.mulf %209, %210 : vector<16x64xf32>
    %cst_73 = arith.constant 4.471500e-02 : f32
    %212 = vector.broadcast %cst_73 : f32 to vector<16x64xf32>
    %213 = arith.mulf %212, %211 : vector<16x64xf32>
    %214 = arith.addf %209, %213 : vector<16x64xf32>
    %cst_74 = arith.constant 0.797884583 : f32
    %215 = vector.broadcast %cst_74 : f32 to vector<16x64xf32>
    %216 = arith.mulf %215, %214 : vector<16x64xf32>
    %217 = math.tanh %216 : vector<16x64xf32>
    %cst_75 = arith.constant 1.000000e+00 : f32
    %218 = vector.broadcast %cst_75 : f32 to vector<16x64xf32>
    %219 = arith.addf %218, %217 : vector<16x64xf32>
    %cst_76 = arith.constant 5.000000e-01 : f32
    %220 = vector.broadcast %cst_76 : f32 to vector<16x64xf32>
    %221 = arith.mulf %220, %219 : vector<16x64xf32>
    %222 = arith.mulf %209, %221 : vector<16x64xf32>
    %c0_77 = arith.constant 0 : index
    %c0_78 = arith.constant 0 : index
    %c0_79 = arith.constant 0 : index
    %223 = vector.load %arg15[%c0_77, %c0_78, %c0_79] : memref<2x64x32xbf16, #tpu.memory_space<vmem>>, vector<1x64x32xbf16>
    %224 = vector.shape_cast %223 : vector<1x64x32xbf16> to vector<64x32xbf16>
    %225 = arith.truncf %222 : vector<16x64xf32> to vector<16x64xbf16>
    %cst_80 = arith.constant dense<0.000000e+00> : vector<16x32xf32>
    %226 = tpu.matmul %225, %224, %cst_80 {dimension_numbers = #tpu.dot_dimension_numbers<[1], [0], [0], [1], [0, 0, 1, 1], [], []>} : vector<16x64xbf16>, vector<64x32xbf16>, vector<16x32xf32> -> vector<16x32xf32>
    %c0_81 = arith.constant 0 : index
    %c0_82 = arith.constant 0 : index
    %c0_83 = arith.constant 0 : index
    %227 = vector.load %arg16[%c0_81, %c0_82, %c0_83] : memref<2x1x32xf32, #tpu.memory_space<vmem>>, vector<1x1x32xf32>
    %228 = vector.shape_cast %227 : vector<1x1x32xf32> to vector<1x32xf32>
    %229 = vector.broadcast %228 : vector<1x32xf32> to vector<16x32xf32>
    %230 = arith.addf %226, %229 : vector<16x32xf32>
    %231 = arith.addf %230, %201 : vector<16x32xf32>
    %c0_84 = arith.constant 0 : index
    %c0_85 = arith.constant 0 : index
    %c0_86 = arith.constant 0 : index
    %232 = vector.load %arg17[%c0_84, %c0_85, %c0_86] : memref<2x1x32xf32, #tpu.memory_space<vmem>>, vector<1x1x32xf32>
    %233 = vector.shape_cast %232 : vector<1x1x32xf32> to vector<1x32xf32>
    %c0_87 = arith.constant 0 : index
    %c0_88 = arith.constant 0 : index
    %c0_89 = arith.constant 0 : index
    %234 = vector.load %arg18[%c0_87, %c0_88, %c0_89] : memref<2x1x32xf32, #tpu.memory_space<vmem>>, vector<1x1x32xf32>
    %235 = vector.shape_cast %234 : vector<1x1x32xf32> to vector<1x32xf32>
    %cst_90 = arith.constant dense<0.000000e+00> : vector<16xf32>
    %236 = vector.multi_reduction <add>, %231, %cst_90 [1] : vector<16x32xf32> to vector<16xf32>
    %237 = vector.shape_cast %236 : vector<16xf32> to vector<16x1xf32>
    %cst_91 = arith.constant 3.200000e+01 : f32
    %238 = vector.broadcast %cst_91 : f32 to vector<16x1xf32>
    %239 = arith.divf %237, %238 : vector<16x1xf32>
    %240 = vector.broadcast %239 : vector<16x1xf32> to vector<16x32xf32>
    %241 = arith.subf %231, %240 : vector<16x32xf32>
    %242 = arith.mulf %241, %241 : vector<16x32xf32>
    %cst_92 = arith.constant dense<0.000000e+00> : vector<16xf32>
    %243 = vector.multi_reduction <add>, %242, %cst_92 [1] : vector<16x32xf32> to vector<16xf32>
    %244 = vector.shape_cast %243 : vector<16xf32> to vector<16x1xf32>
    %cst_93 = arith.constant 3.200000e+01 : f32
    %245 = vector.broadcast %cst_93 : f32 to vector<16x1xf32>
    %246 = arith.divf %244, %245 : vector<16x1xf32>
    %247 = vector.broadcast %239 : vector<16x1xf32> to vector<16x32xf32>
    %248 = arith.subf %231, %247 : vector<16x32xf32>
    %cst_94 = arith.constant 9.99999996E-13 : f32
    %249 = vector.broadcast %cst_94 : f32 to vector<16x1xf32>
    %250 = arith.addf %246, %249 : vector<16x1xf32>
    %251 = math.rsqrt %250 : vector<16x1xf32>
    %252 = vector.broadcast %251 : vector<16x1xf32> to vector<16x32xf32>
    %253 = arith.mulf %248, %252 : vector<16x32xf32>
    %254 = vector.broadcast %233 : vector<1x32xf32> to vector<16x32xf32>
    %255 = arith.mulf %253, %254 : vector<16x32xf32>
    %256 = vector.broadcast %235 : vector<1x32xf32> to vector<16x32xf32>
    %257 = arith.addf %255, %256 : vector<16x32xf32>
    %c1 = arith.constant 1 : index
    %c0_95 = arith.constant 0 : index
    %c0_96 = arith.constant 0 : index
    %258 = vector.load %arg7[%c1, %c0_95, %c0_96] : memref<2x32x96xbf16, #tpu.memory_space<vmem>>, vector<1x32x96xbf16>
    %259 = vector.shape_cast %258 : vector<1x32x96xbf16> to vector<32x96xbf16>
    %260 = arith.truncf %257 : vector<16x32xf32> to vector<16x32xbf16>
    %cst_97 = arith.constant dense<0.000000e+00> : vector<16x96xf32>
    %261 = tpu.matmul %260, %259, %cst_97 {dimension_numbers = #tpu.dot_dimension_numbers<[1], [0], [0], [1], [0, 0, 1, 1], [], []>} : vector<16x32xbf16>, vector<32x96xbf16>, vector<16x96xf32> -> vector<16x96xf32>
    %c1_98 = arith.constant 1 : index
    %c0_99 = arith.constant 0 : index
    %c0_100 = arith.constant 0 : index
    %262 = vector.load %arg8[%c1_98, %c0_99, %c0_100] : memref<2x1x96xf32, #tpu.memory_space<vmem>>, vector<1x1x96xf32>
    %263 = vector.shape_cast %262 : vector<1x1x96xf32> to vector<1x96xf32>
    %264 = vector.broadcast %263 : vector<1x96xf32> to vector<16x96xf32>
    %265 = arith.addf %261, %264 : vector<16x96xf32>
    %266 = vector.extract_strided_slice %265 {offsets = [0, 0], sizes = [16, 32], strides = [1, 1]} : vector<16x96xf32> to vector<16x32xf32>
    %267 = vector.shape_cast %266 : vector<16x32xf32> to vector<2x8x32xf32>
    %cst_101 = arith.constant 0.353553385 : f32
    %268 = vector.broadcast %cst_101 : f32 to vector<2x8x32xf32>
    %269 = arith.mulf %267, %268 : vector<2x8x32xf32>
    %270 = vector.extract_strided_slice %265 {offsets = [0, 32], sizes = [16, 32], strides = [1, 1]} : vector<16x96xf32> to vector<16x32xf32>
    %271 = vector.shape_cast %270 : vector<16x32xf32> to vector<2x8x32xf32>
    %272 = vector.extract_strided_slice %265 {offsets = [0, 64], sizes = [16, 32], strides = [1, 1]} : vector<16x96xf32> to vector<16x32xf32>
    %273 = vector.shape_cast %272 : vector<16x32xf32> to vector<2x8x32xf32>
    %cst_102 = arith.constant 0.000000e+00 : f32
    %274 = vector.broadcast %cst_102 : f32 to vector<2x8x32xf32>
    %275 = vector.broadcast %51 : vector<1x1x32xf32> to vector<2x8x32xf32>
    %276 = arith.mulf %269, %275 : vector<2x8x32xf32>
    "tpu.trace_start"() <{level = 10 : i32, message = "bqd,bkd->bqk"}> : () -> ()
    %cst_103 = arith.constant dense<0.000000e+00> : vector<2x8x8xf32>
    %277 = tpu.matmul %276, %271, %cst_103 {dimension_numbers = #tpu.dot_dimension_numbers<[2], [2], [1], [1], [0, 0, 0, 1, 1, 1], [0], [0]>} : vector<2x8x32xf32>, vector<2x8x32xf32>, vector<2x8x8xf32> -> vector<2x8x8xf32>
    "tpu.trace_stop"() : () -> ()
    %278 = vector.broadcast %43 : vector<2x1x8xf32> to vector<2x8x8xf32>
    %279 = arith.addf %277, %278 : vector<2x8x8xf32>
    %cst_104 = arith.constant dense<0xFF800000> : vector<2x8xf32>
    %280 = vector.multi_reduction <maximumf>, %279, %cst_104 [2] : vector<2x8x8xf32> to vector<2x8xf32>
    %281 = vector.shape_cast %280 : vector<2x8xf32> to vector<2x8x1xf32>
    %282 = vector.broadcast %281 : vector<2x8x1xf32> to vector<2x8x8xf32>
    %283 = arith.subf %279, %282 : vector<2x8x8xf32>
    %284 = math.exp %283 : vector<2x8x8xf32>
    %cst_105 = arith.constant dense<0.000000e+00> : vector<2x8xf32>
    %285 = vector.multi_reduction <add>, %284, %cst_105 [2] : vector<2x8x8xf32> to vector<2x8xf32>
    %286 = vector.shape_cast %285 : vector<2x8xf32> to vector<2x8x1xf32>
    %287 = tpu.reciprocal %286 {approx = true} : vector<2x8x1xf32> -> vector<2x8x1xf32>
    %288 = vector.broadcast %287 : vector<2x8x1xf32> to vector<2x8x8xf32>
    %289 = arith.mulf %284, %288 : vector<2x8x8xf32>
    %290 = vector.broadcast %51 : vector<1x1x32xf32> to vector<2x8x32xf32>
    %291 = arith.mulf %273, %290 : vector<2x8x32xf32>
    "tpu.trace_start"() <{level = 10 : i32, message = "bqk,bkd->bqd"}> : () -> ()
    %cst_106 = arith.constant dense<0.000000e+00> : vector<2x8x32xf32>
    %292 = tpu.matmul %289, %291, %cst_106 {dimension_numbers = #tpu.dot_dimension_numbers<[2], [1], [1], [2], [0, 0, 0, 1, 1, 2], [0], [0]>} : vector<2x8x8xf32>, vector<2x8x32xf32>, vector<2x8x32xf32> -> vector<2x8x32xf32>
    "tpu.trace_stop"() : () -> ()
    %293 = arith.addf %274, %292 : vector<2x8x32xf32>
    %294 = vector.broadcast %58 : vector<1x1x32xf32> to vector<2x8x32xf32>
    %295 = arith.mulf %269, %294 : vector<2x8x32xf32>
    "tpu.trace_start"() <{level = 10 : i32, message = "bqd,bkd->bqk"}> : () -> ()
    %cst_107 = arith.constant dense<0.000000e+00> : vector<2x8x8xf32>
    %296 = tpu.matmul %295, %271, %cst_107 {dimension_numbers = #tpu.dot_dimension_numbers<[2], [2], [1], [1], [0, 0, 0, 1, 1, 1], [0], [0]>} : vector<2x8x32xf32>, vector<2x8x32xf32>, vector<2x8x8xf32> -> vector<2x8x8xf32>
    "tpu.trace_stop"() : () -> ()
    %297 = vector.broadcast %43 : vector<2x1x8xf32> to vector<2x8x8xf32>
    %298 = arith.addf %296, %297 : vector<2x8x8xf32>
    %cst_108 = arith.constant dense<0xFF800000> : vector<2x8xf32>
    %299 = vector.multi_reduction <maximumf>, %298, %cst_108 [2] : vector<2x8x8xf32> to vector<2x8xf32>
    %300 = vector.shape_cast %299 : vector<2x8xf32> to vector<2x8x1xf32>
    %301 = vector.broadcast %300 : vector<2x8x1xf32> to vector<2x8x8xf32>
    %302 = arith.subf %298, %301 : vector<2x8x8xf32>
    %303 = math.exp %302 : vector<2x8x8xf32>
    %cst_109 = arith.constant dense<0.000000e+00> : vector<2x8xf32>
    %304 = vector.multi_reduction <add>, %303, %cst_109 [2] : vector<2x8x8xf32> to vector<2x8xf32>
    %305 = vector.shape_cast %304 : vector<2x8xf32> to vector<2x8x1xf32>
    %306 = tpu.reciprocal %305 {approx = true} : vector<2x8x1xf32> -> vector<2x8x1xf32>
    %307 = vector.broadcast %306 : vector<2x8x1xf32> to vector<2x8x8xf32>
    %308 = arith.mulf %303, %307 : vector<2x8x8xf32>
    %309 = vector.broadcast %58 : vector<1x1x32xf32> to vector<2x8x32xf32>
    %310 = arith.mulf %273, %309 : vector<2x8x32xf32>
    "tpu.trace_start"() <{level = 10 : i32, message = "bqk,bkd->bqd"}> : () -> ()
    %cst_110 = arith.constant dense<0.000000e+00> : vector<2x8x32xf32>
    %311 = tpu.matmul %308, %310, %cst_110 {dimension_numbers = #tpu.dot_dimension_numbers<[2], [1], [1], [2], [0, 0, 0, 1, 1, 2], [0], [0]>} : vector<2x8x8xf32>, vector<2x8x32xf32>, vector<2x8x32xf32> -> vector<2x8x32xf32>
    "tpu.trace_stop"() : () -> ()
    %312 = arith.addf %293, %311 : vector<2x8x32xf32>
    %313 = vector.broadcast %65 : vector<1x1x32xf32> to vector<2x8x32xf32>
    %314 = arith.mulf %269, %313 : vector<2x8x32xf32>
    "tpu.trace_start"() <{level = 10 : i32, message = "bqd,bkd->bqk"}> : () -> ()
    %cst_111 = arith.constant dense<0.000000e+00> : vector<2x8x8xf32>
    %315 = tpu.matmul %314, %271, %cst_111 {dimension_numbers = #tpu.dot_dimension_numbers<[2], [2], [1], [1], [0, 0, 0, 1, 1, 1], [0], [0]>} : vector<2x8x32xf32>, vector<2x8x32xf32>, vector<2x8x8xf32> -> vector<2x8x8xf32>
    "tpu.trace_stop"() : () -> ()
    %316 = vector.broadcast %43 : vector<2x1x8xf32> to vector<2x8x8xf32>
    %317 = arith.addf %315, %316 : vector<2x8x8xf32>
    %cst_112 = arith.constant dense<0xFF800000> : vector<2x8xf32>
    %318 = vector.multi_reduction <maximumf>, %317, %cst_112 [2] : vector<2x8x8xf32> to vector<2x8xf32>
    %319 = vector.shape_cast %318 : vector<2x8xf32> to vector<2x8x1xf32>
    %320 = vector.broadcast %319 : vector<2x8x1xf32> to vector<2x8x8xf32>
    %321 = arith.subf %317, %320 : vector<2x8x8xf32>
    %322 = math.exp %321 : vector<2x8x8xf32>
    %cst_113 = arith.constant dense<0.000000e+00> : vector<2x8xf32>
    %323 = vector.multi_reduction <add>, %322, %cst_113 [2] : vector<2x8x8xf32> to vector<2x8xf32>
    %324 = vector.shape_cast %323 : vector<2x8xf32> to vector<2x8x1xf32>
    %325 = tpu.reciprocal %324 {approx = true} : vector<2x8x1xf32> -> vector<2x8x1xf32>
    %326 = vector.broadcast %325 : vector<2x8x1xf32> to vector<2x8x8xf32>
    %327 = arith.mulf %322, %326 : vector<2x8x8xf32>
    %328 = vector.broadcast %65 : vector<1x1x32xf32> to vector<2x8x32xf32>
    %329 = arith.mulf %273, %328 : vector<2x8x32xf32>
    "tpu.trace_start"() <{level = 10 : i32, message = "bqk,bkd->bqd"}> : () -> ()
    %cst_114 = arith.constant dense<0.000000e+00> : vector<2x8x32xf32>
    %330 = tpu.matmul %327, %329, %cst_114 {dimension_numbers = #tpu.dot_dimension_numbers<[2], [1], [1], [2], [0, 0, 0, 1, 1, 2], [0], [0]>} : vector<2x8x8xf32>, vector<2x8x32xf32>, vector<2x8x32xf32> -> vector<2x8x32xf32>
    "tpu.trace_stop"() : () -> ()
    %331 = arith.addf %312, %330 : vector<2x8x32xf32>
    %332 = vector.broadcast %72 : vector<1x1x32xf32> to vector<2x8x32xf32>
    %333 = arith.mulf %269, %332 : vector<2x8x32xf32>
    "tpu.trace_start"() <{level = 10 : i32, message = "bqd,bkd->bqk"}> : () -> ()
    %cst_115 = arith.constant dense<0.000000e+00> : vector<2x8x8xf32>
    %334 = tpu.matmul %333, %271, %cst_115 {dimension_numbers = #tpu.dot_dimension_numbers<[2], [2], [1], [1], [0, 0, 0, 1, 1, 1], [0], [0]>} : vector<2x8x32xf32>, vector<2x8x32xf32>, vector<2x8x8xf32> -> vector<2x8x8xf32>
    "tpu.trace_stop"() : () -> ()
    %335 = vector.broadcast %43 : vector<2x1x8xf32> to vector<2x8x8xf32>
    %336 = arith.addf %334, %335 : vector<2x8x8xf32>
    %cst_116 = arith.constant dense<0xFF800000> : vector<2x8xf32>
    %337 = vector.multi_reduction <maximumf>, %336, %cst_116 [2] : vector<2x8x8xf32> to vector<2x8xf32>
    %338 = vector.shape_cast %337 : vector<2x8xf32> to vector<2x8x1xf32>
    %339 = vector.broadcast %338 : vector<2x8x1xf32> to vector<2x8x8xf32>
    %340 = arith.subf %336, %339 : vector<2x8x8xf32>
    %341 = math.exp %340 : vector<2x8x8xf32>
    %cst_117 = arith.constant dense<0.000000e+00> : vector<2x8xf32>
    %342 = vector.multi_reduction <add>, %341, %cst_117 [2] : vector<2x8x8xf32> to vector<2x8xf32>
    %343 = vector.shape_cast %342 : vector<2x8xf32> to vector<2x8x1xf32>
    %344 = tpu.reciprocal %343 {approx = true} : vector<2x8x1xf32> -> vector<2x8x1xf32>
    %345 = vector.broadcast %344 : vector<2x8x1xf32> to vector<2x8x8xf32>
    %346 = arith.mulf %341, %345 : vector<2x8x8xf32>
    %347 = vector.broadcast %72 : vector<1x1x32xf32> to vector<2x8x32xf32>
    %348 = arith.mulf %273, %347 : vector<2x8x32xf32>
    "tpu.trace_start"() <{level = 10 : i32, message = "bqk,bkd->bqd"}> : () -> ()
    %cst_118 = arith.constant dense<0.000000e+00> : vector<2x8x32xf32>
    %349 = tpu.matmul %346, %348, %cst_118 {dimension_numbers = #tpu.dot_dimension_numbers<[2], [1], [1], [2], [0, 0, 0, 1, 1, 2], [0], [0]>} : vector<2x8x8xf32>, vector<2x8x32xf32>, vector<2x8x32xf32> -> vector<2x8x32xf32>
    "tpu.trace_stop"() : () -> ()
    %350 = arith.addf %331, %349 : vector<2x8x32xf32>
    %351 = vector.shape_cast %350 : vector<2x8x32xf32> to vector<16x32xf32>
    %c1_119 = arith.constant 1 : index
    %c0_120 = arith.constant 0 : index
    %c0_121 = arith.constant 0 : index
    %352 = vector.load %arg9[%c1_119, %c0_120, %c0_121] : memref<2x32x32xbf16, #tpu.memory_space<vmem>>, vector<1x32x32xbf16>
    %353 = vector.shape_cast %352 : vector<1x32x32xbf16> to vector<32x32xbf16>
    %354 = arith.truncf %351 : vector<16x32xf32> to vector<16x32xbf16>
    %cst_122 = arith.constant dense<0.000000e+00> : vector<16x32xf32>
    %355 = tpu.matmul %354, %353, %cst_122 {dimension_numbers = #tpu.dot_dimension_numbers<[1], [0], [0], [1], [0, 0, 1, 1], [], []>} : vector<16x32xbf16>, vector<32x32xbf16>, vector<16x32xf32> -> vector<16x32xf32>
    %c1_123 = arith.constant 1 : index
    %c0_124 = arith.constant 0 : index
    %c0_125 = arith.constant 0 : index
    %356 = vector.load %arg10[%c1_123, %c0_124, %c0_125] : memref<2x1x32xf32, #tpu.memory_space<vmem>>, vector<1x1x32xf32>
    %357 = vector.shape_cast %356 : vector<1x1x32xf32> to vector<1x32xf32>
    %358 = vector.broadcast %357 : vector<1x32xf32> to vector<16x32xf32>
    %359 = arith.addf %355, %358 : vector<16x32xf32>
    %360 = arith.addf %359, %257 : vector<16x32xf32>
    %c1_126 = arith.constant 1 : index
    %c0_127 = arith.constant 0 : index
    %c0_128 = arith.constant 0 : index
    %361 = vector.load %arg11[%c1_126, %c0_127, %c0_128] : memref<2x1x32xf32, #tpu.memory_space<vmem>>, vector<1x1x32xf32>
    %362 = vector.shape_cast %361 : vector<1x1x32xf32> to vector<1x32xf32>
    %c1_129 = arith.constant 1 : index
    %c0_130 = arith.constant 0 : index
    %c0_131 = arith.constant 0 : index
    %363 = vector.load %arg12[%c1_129, %c0_130, %c0_131] : memref<2x1x32xf32, #tpu.memory_space<vmem>>, vector<1x1x32xf32>
    %364 = vector.shape_cast %363 : vector<1x1x32xf32> to vector<1x32xf32>
    %cst_132 = arith.constant dense<0.000000e+00> : vector<16xf32>
    %365 = vector.multi_reduction <add>, %360, %cst_132 [1] : vector<16x32xf32> to vector<16xf32>
    %366 = vector.shape_cast %365 : vector<16xf32> to vector<16x1xf32>
    %cst_133 = arith.constant 3.200000e+01 : f32
    %367 = vector.broadcast %cst_133 : f32 to vector<16x1xf32>
    %368 = arith.divf %366, %367 : vector<16x1xf32>
    %369 = vector.broadcast %368 : vector<16x1xf32> to vector<16x32xf32>
    %370 = arith.subf %360, %369 : vector<16x32xf32>
    %371 = arith.mulf %370, %370 : vector<16x32xf32>
    %cst_134 = arith.constant dense<0.000000e+00> : vector<16xf32>
    %372 = vector.multi_reduction <add>, %371, %cst_134 [1] : vector<16x32xf32> to vector<16xf32>
    %373 = vector.shape_cast %372 : vector<16xf32> to vector<16x1xf32>
    %cst_135 = arith.constant 3.200000e+01 : f32
    %374 = vector.broadcast %cst_135 : f32 to vector<16x1xf32>
    %375 = arith.divf %373, %374 : vector<16x1xf32>
    %376 = vector.broadcast %368 : vector<16x1xf32> to vector<16x32xf32>
    %377 = arith.subf %360, %376 : vector<16x32xf32>
    %cst_136 = arith.constant 9.99999996E-13 : f32
    %378 = vector.broadcast %cst_136 : f32 to vector<16x1xf32>
    %379 = arith.addf %375, %378 : vector<16x1xf32>
    %380 = math.rsqrt %379 : vector<16x1xf32>
    %381 = vector.broadcast %380 : vector<16x1xf32> to vector<16x32xf32>
    %382 = arith.mulf %377, %381 : vector<16x32xf32>
    %383 = vector.broadcast %362 : vector<1x32xf32> to vector<16x32xf32>
    %384 = arith.mulf %382, %383 : vector<16x32xf32>
    %385 = vector.broadcast %364 : vector<1x32xf32> to vector<16x32xf32>
    %386 = arith.addf %384, %385 : vector<16x32xf32>
    %c1_137 = arith.constant 1 : index
    %c0_138 = arith.constant 0 : index
    %c0_139 = arith.constant 0 : index
    %387 = vector.load %arg13[%c1_137, %c0_138, %c0_139] : memref<2x32x64xbf16, #tpu.memory_space<vmem>>, vector<1x32x64xbf16>
    %388 = vector.shape_cast %387 : vector<1x32x64xbf16> to vector<32x64xbf16>
    %389 = arith.truncf %386 : vector<16x32xf32> to vector<16x32xbf16>
    %cst_140 = arith.constant dense<0.000000e+00> : vector<16x64xf32>
    %390 = tpu.matmul %389, %388, %cst_140 {dimension_numbers = #tpu.dot_dimension_numbers<[1], [0], [0], [1], [0, 0, 1, 1], [], []>} : vector<16x32xbf16>, vector<32x64xbf16>, vector<16x64xf32> -> vector<16x64xf32>
    %c1_141 = arith.constant 1 : index
    %c0_142 = arith.constant 0 : index
    %c0_143 = arith.constant 0 : index
    %391 = vector.load %arg14[%c1_141, %c0_142, %c0_143] : memref<2x1x64xf32, #tpu.memory_space<vmem>>, vector<1x1x64xf32>
    %392 = vector.shape_cast %391 : vector<1x1x64xf32> to vector<1x64xf32>
    %393 = vector.broadcast %392 : vector<1x64xf32> to vector<16x64xf32>
    %394 = arith.addf %390, %393 : vector<16x64xf32>
    %395 = arith.mulf %394, %394 : vector<16x64xf32>
    %396 = arith.mulf %394, %395 : vector<16x64xf32>
    %cst_144 = arith.constant 4.471500e-02 : f32
    %397 = vector.broadcast %cst_144 : f32 to vector<16x64xf32>
    %398 = arith.mulf %397, %396 : vector<16x64xf32>
    %399 = arith.addf %394, %398 : vector<16x64xf32>
    %cst_145 = arith.constant 0.797884583 : f32
    %400 = vector.broadcast %cst_145 : f32 to vector<16x64xf32>
    %401 = arith.mulf %400, %399 : vector<16x64xf32>
    %402 = math.tanh %401 : vector<16x64xf32>
    %cst_146 = arith.constant 1.000000e+00 : f32
    %403 = vector.broadcast %cst_146 : f32 to vector<16x64xf32>
    %404 = arith.addf %403, %402 : vector<16x64xf32>
    %cst_147 = arith.constant 5.000000e-01 : f32
    %405 = vector.broadcast %cst_147 : f32 to vector<16x64xf32>
    %406 = arith.mulf %405, %404 : vector<16x64xf32>
    %407 = arith.mulf %394, %406 : vector<16x64xf32>
    %c1_148 = arith.constant 1 : index
    %c0_149 = arith.constant 0 : index
    %c0_150 = arith.constant 0 : index
    %408 = vector.load %arg15[%c1_148, %c0_149, %c0_150] : memref<2x64x32xbf16, #tpu.memory_space<vmem>>, vector<1x64x32xbf16>
    %409 = vector.shape_cast %408 : vector<1x64x32xbf16> to vector<64x32xbf16>
    %410 = arith.truncf %407 : vector<16x64xf32> to vector<16x64xbf16>
    %cst_151 = arith.constant dense<0.000000e+00> : vector<16x32xf32>
    %411 = tpu.matmul %410, %409, %cst_151 {dimension_numbers = #tpu.dot_dimension_numbers<[1], [0], [0], [1], [0, 0, 1, 1], [], []>} : vector<16x64xbf16>, vector<64x32xbf16>, vector<16x32xf32> -> vector<16x32xf32>
    %c1_152 = arith.constant 1 : index
    %c0_153 = arith.constant 0 : index
    %c0_154 = arith.constant 0 : index
    %412 = vector.load %arg16[%c1_152, %c0_153, %c0_154] : memref<2x1x32xf32, #tpu.memory_space<vmem>>, vector<1x1x32xf32>
    %413 = vector.shape_cast %412 : vector<1x1x32xf32> to vector<1x32xf32>
    %414 = vector.broadcast %413 : vector<1x32xf32> to vector<16x32xf32>
    %415 = arith.addf %411, %414 : vector<16x32xf32>
    %416 = arith.addf %415, %386 : vector<16x32xf32>
    %c1_155 = arith.constant 1 : index
    %c0_156 = arith.constant 0 : index
    %c0_157 = arith.constant 0 : index
    %417 = vector.load %arg17[%c1_155, %c0_156, %c0_157] : memref<2x1x32xf32, #tpu.memory_space<vmem>>, vector<1x1x32xf32>
    %418 = vector.shape_cast %417 : vector<1x1x32xf32> to vector<1x32xf32>
    %c1_158 = arith.constant 1 : index
    %c0_159 = arith.constant 0 : index
    %c0_160 = arith.constant 0 : index
    %419 = vector.load %arg18[%c1_158, %c0_159, %c0_160] : memref<2x1x32xf32, #tpu.memory_space<vmem>>, vector<1x1x32xf32>
    %420 = vector.shape_cast %419 : vector<1x1x32xf32> to vector<1x32xf32>
    %cst_161 = arith.constant dense<0.000000e+00> : vector<16xf32>
    %421 = vector.multi_reduction <add>, %416, %cst_161 [1] : vector<16x32xf32> to vector<16xf32>
    %422 = vector.shape_cast %421 : vector<16xf32> to vector<16x1xf32>
    %cst_162 = arith.constant 3.200000e+01 : f32
    %423 = vector.broadcast %cst_162 : f32 to vector<16x1xf32>
    %424 = arith.divf %422, %423 : vector<16x1xf32>
    %425 = vector.broadcast %424 : vector<16x1xf32> to vector<16x32xf32>
    %426 = arith.subf %416, %425 : vector<16x32xf32>
    %427 = arith.mulf %426, %426 : vector<16x32xf32>
    %cst_163 = arith.constant dense<0.000000e+00> : vector<16xf32>
    %428 = vector.multi_reduction <add>, %427, %cst_163 [1] : vector<16x32xf32> to vector<16xf32>
    %429 = vector.shape_cast %428 : vector<16xf32> to vector<16x1xf32>
    %cst_164 = arith.constant 3.200000e+01 : f32
    %430 = vector.broadcast %cst_164 : f32 to vector<16x1xf32>
    %431 = arith.divf %429, %430 : vector<16x1xf32>
    %432 = vector.broadcast %424 : vector<16x1xf32> to vector<16x32xf32>
    %433 = arith.subf %416, %432 : vector<16x32xf32>
    %cst_165 = arith.constant 9.99999996E-13 : f32
    %434 = vector.broadcast %cst_165 : f32 to vector<16x1xf32>
    %435 = arith.addf %431, %434 : vector<16x1xf32>
    %436 = math.rsqrt %435 : vector<16x1xf32>
    %437 = vector.broadcast %436 : vector<16x1xf32> to vector<16x32xf32>
    %438 = arith.mulf %433, %437 : vector<16x32xf32>
    %439 = vector.broadcast %418 : vector<1x32xf32> to vector<16x32xf32>
    %440 = arith.mulf %438, %439 : vector<16x32xf32>
    %441 = vector.broadcast %420 : vector<1x32xf32> to vector<16x32xf32>
    %442 = arith.addf %440, %441 : vector<16x32xf32>
    %443 = vector.shape_cast %442 : vector<16x32xf32> to vector<2x8x32xf32>
    %444 = vector.extract_strided_slice %443 {offsets = [0, 0, 0], sizes = [2, 1, 32], strides = [1, 1, 1]} : vector<2x8x32xf32> to vector<2x1x32xf32>
    %445 = vector.shape_cast %444 : vector<2x1x32xf32> to vector<2x32xf32>
    %c0_166 = arith.constant 0 : index
    %c0_167 = arith.constant 0 : index
    %446 = vector.load %arg19[%c0_166, %c0_167] : memref<32x32xf32, #tpu.memory_space<vmem>>, vector<32x32xf32>
    %cst_168 = arith.constant dense<0.000000e+00> : vector<2x32xf32>
    %447 = tpu.matmul %445, %446, %cst_168 {dimension_numbers = #tpu.dot_dimension_numbers<[1], [0], [0], [1], [0, 0, 1, 1], [], []>} : vector<2x32xf32>, vector<32x32xf32>, vector<2x32xf32> -> vector<2x32xf32>
    %c0_169 = arith.constant 0 : index
    %c0_170 = arith.constant 0 : index
    %448 = vector.load %arg20[%c0_169, %c0_170] : memref<1x32xf32, #tpu.memory_space<vmem>>, vector<1x32xf32>
    %449 = vector.broadcast %448 : vector<1x32xf32> to vector<2x32xf32>
    %450 = arith.addf %447, %449 : vector<2x32xf32>
    %451 = math.tanh %450 : vector<2x32xf32>
    %c0_171 = arith.constant 0 : index
    %c0_172 = arith.constant 0 : index
    %452 = vector.load %arg21[%c0_171, %c0_172] : memref<32x2xf32, #tpu.memory_space<vmem>>, vector<32x2xf32>
    %cst_173 = arith.constant dense<0.000000e+00> : vector<2x2xf32>
    %453 = tpu.matmul %451, %452, %cst_173 {dimension_numbers = #tpu.dot_dimension_numbers<[1], [0], [0], [1], [0, 0, 1, 1], [], []>} : vector<2x32xf32>, vector<32x2xf32>, vector<2x2xf32> -> vector<2x2xf32>
    %c0_174 = arith.constant 0 : index
    %c0_175 = arith.constant 0 : index
    %454 = vector.load %arg22[%c0_174, %c0_175] : memref<1x2xf32, #tpu.memory_space<vmem>>, vector<1x2xf32>
    %455 = vector.broadcast %454 : vector<1x2xf32> to vector<2x2xf32>
    %456 = arith.addf %453, %455 : vector<2x2xf32>
    %cst_176 = arith.constant dense<0xFF800000> : vector<2xf32>
    %457 = vector.multi_reduction <maximumf>, %456, %cst_176 [1] : vector<2x2xf32> to vector<2xf32>
    %458 = vector.shape_cast %457 : vector<2xf32> to vector<2x1xf32>
    %459 = vector.broadcast %458 : vector<2x1xf32> to vector<2x2xf32>
    %460 = arith.subf %456, %459 : vector<2x2xf32>
    %461 = math.exp %460 : vector<2x2xf32>
    %cst_177 = arith.constant dense<0.000000e+00> : vector<2xf32>
    %462 = vector.multi_reduction <add>, %461, %cst_177 [1] : vector<2x2xf32> to vector<2xf32>
    %463 = vector.shape_cast %462 : vector<2xf32> to vector<2x1xf32>
    %464 = vector.broadcast %463 : vector<2x1xf32> to vector<2x2xf32>
    %465 = arith.divf %461, %464 : vector<2x2xf32>
    %c0_178 = arith.constant 0 : index
    %c0_179 = arith.constant 0 : index
    %466 = vector.load %arg23[%c0_178, %c0_179] : memref<2x2xf32, #tpu.memory_space<vmem>>, vector<2x2xf32>
    tpu.vector_store %arg23[%c0_178, %c0_179], %465 {strides = array<i32>} : memref<2x2xf32, #tpu.memory_space<vmem>>, vector<2x2xf32>,
    return
  }
}

</mosaic_0001>

<llo_original>
// kernel: tpu_custom_call.1
$region0: #{tpu_custom_call.1}
  #allocation0 [shape = 'u32[]', space=smem, size = 0x4, offset = 0x4, fixed_abs, tag = 'smem constant byte address 0x4 - core index']
  #allocation1 [shape = 'u32[144,128]{1,0:T(1,128)}', space=vmem, size = 0x12000, scoped, tag = 'internal scratch']
  %s0 = inlined_call_operand.vmem [shape: s32[16,1], index: 0, kind: input, shape index: {}]
  %s1 = inlined_call_operand.hbm [shape: f32[2,8], index: 1, kind: input, shape index: {}]
  %s2 = inlined_call_operand.vmem [shape: f32[32,32], index: 2, kind: input, shape index: {}]
  %s3 = inlined_call_operand.hbm [shape: f32[16,32], index: 3, kind: input, shape index: {}]
  %s4 = inlined_call_operand.hbm [shape: f32[2,32], index: 4, kind: input, shape index: {}]
  %s5 = inlined_call_operand.hbm [shape: f32[1,32], index: 5, kind: input, shape index: {}]
  %s6 = inlined_call_operand.hbm [shape: f32[1,32], index: 6, kind: input, shape index: {}]
  %s7 = inlined_call_operand.vmem [shape: bf16[2,32,96], index: 7, kind: input, shape index: {}]
  %s8 = inlined_call_operand.hbm [shape: f32[2,1,96], index: 8, kind: input, shape index: {}]
  %s9 = inlined_call_operand.vmem [shape: bf16[2,32,32], index: 9, kind: input, shape index: {}]
  %s10 = inlined_call_operand.hbm [shape: f32[2,1,32], index: 10, kind: input, shape index: {}]
  %s11 = inlined_call_operand.hbm [shape: f32[2,1,32], index: 11, kind: input, shape index: {}]
  %s12 = inlined_call_operand.hbm [shape: f32[2,1,32], index: 12, kind: input, shape index: {}]
  %s13 = inlined_call_operand.vmem [shape: bf16[2,32,64], index: 13, kind: input, shape index: {}]
  %s14 = inlined_call_operand.vmem [shape: f32[2,1,64], index: 14, kind: input, shape index: {}]
  %s15 = inlined_call_operand.vmem [shape: bf16[2,64,32], index: 15, kind: input, shape index: {}]
  %s16 = inlined_call_operand.vmem [shape: f32[2,1,32], index: 16, kind: input, shape index: {}]
  %s17 = inlined_call_operand.vmem [shape: f32[2,1,32], index: 17, kind: input, shape index: {}]
  %s18 = inlined_call_operand.vmem [shape: f32[2,1,32], index: 18, kind: input, shape index: {}]
  %s19 = inlined_call_operand.vmem [shape: f32[32,32], index: 19, kind: input, shape index: {}]
  %s20 = inlined_call_operand.vmem [shape: f32[1,32], index: 20, kind: input, shape index: {}]
  %s21 = inlined_call_operand.vmem [shape: f32[32,2], index: 21, kind: input, shape index: {}]
  %s22 = inlined_call_operand.vmem [shape: f32[1,2], index: 22, kind: input, shape index: {}]
  %s23 = inlined_call_operand.hbm [shape: f32[2,2], index: 23, kind: output, shape index: {}]
  %s24 = sld [smem:[#allocation0]]
  $region138: #{tpu_custom_call.1} parent=0
    _
  %s26 = ssub.s32 1, %s24
  %s27 = scalar_select 0, %s26, %s24
  $region1: #{tpu_custom_call.1} parent=0
    #allocation2 [shape = 'u8[1024]{0}', space=vmem, size = 0x400, scoped, tag = 'input window, operand 1, single buffered']
    #allocation3 [shape = 's32[1]{0}', space=sflag, size = 0x4, scoped, tag = 'scoped memory for tpu_custom_call.1']
    #allocation4 [shape = 's32[1]{0}', space=sflag, size = 0x4, scoped, tag = 'scoped memory for tpu_custom_call.1']
    #allocation5 [shape = 'u8[8192]{0}', space=vmem, size = 0x2000, scoped, tag = 'input window, operand 3, single buffered']
    #allocation6 [shape = 's32[1]{0}', space=sflag, size = 0x4, scoped, tag = 'scoped memory for tpu_custom_call.1']
    #allocation7 [shape = 'u8[1024]{0}', space=vmem, size = 0x400, scoped, tag = 'input window, operand 4, single buffered']
    #allocation8 [shape = 'u8[512]{0}', space=vmem, size = 0x400, scoped, tag = 'input window, operand 5, single buffered']
    #allocation9 [shape = 's32[1]{0}', space=sflag, size = 0x4, scoped, tag = 'scoped memory for tpu_custom_call.1']
    #allocation10 [shape = 'u8[512]{0}', space=vmem, size = 0x400, scoped, tag = 'input window, operand 6, single buffered']
    #allocation11 [shape = 'u8[1024]{0}', space=vmem, size = 0x400, scoped, tag = 'input window, operand 8, single buffered']
    #allocation12 [shape = 's32[1]{0}', space=sflag, size = 0x4, scoped, tag = 'scoped memory for tpu_custom_call.1']
    #allocation13 [shape = 'u8[1024]{0}', space=vmem, size = 0x400, scoped, tag = 'input window, operand 10, single buffered']
    #allocation14 [shape = 'u8[1024]{0}', space=vmem, size = 0x400, scoped, tag = 'input window, operand 11, single buffered']
    #allocation15 [shape = 's32[1]{0}', space=sflag, size = 0x4, scoped, tag = 'scoped memory for tpu_custom_call.1']
    #allocation16 [shape = 'u8[1024]{0}', space=vmem, size = 0x400, scoped, tag = 'input window, operand 12, single buffered']
    #allocation17 [shape = 'u8[1024]{0}', space=vmem, size = 0x400, scoped, tag = 'output window, operand 0, single buffered']
    %28 = vsyncpa [#allocation3], 0
    %29 = vsyncpa [#allocation6], 0
    %30 = vsyncpa [#allocation9], 0
    %31 = vsyncpa [#allocation12], 0
    %32 = vsyncpa [#allocation15], 0
    %33 = vsyncpa [#allocation4], 0
    // Predicated region
    $region2: #{tpu_custom_call.1} parent=1 // pred_check
      _
    $region3: #{tpu_custom_call.1} parent=1 // pred_check_branch
      %35 = sbr.rel (0) target = $region5
    $region4: #{tpu_custom_call.1} parent=1 // pred_region
      _
    $region5: #{tpu_custom_call.1} parent=1 // pred_fallthru
      _
    // Predicated region
    $region6: #{tpu_custom_call.1} parent=1 // pred_check
      _
    $region7: #{tpu_custom_call.1} parent=1 // pred_check_branch
      %37 = sbr.rel (0) target = $region9
    $region8: #{tpu_custom_call.1} parent=1 // pred_region
      %s39 = ssub.s32 32, 32
      %40 = vsyncadd [#allocation3], %s39
      %s42 = sshll.u32 [#allocation2], 4
      %s43 = int_to_ptr.vmem [resolvable:$true] %s42
      %45 = dma.hbm_to_vmem [thread:$0]  %s1, 32, %s43, [#allocation3]
    $region9: #{tpu_custom_call.1} parent=1 // pred_fallthru
      _
    // Predicated region
    $region10: #{tpu_custom_call.1} parent=1 // pred_check
      _
    $region11: #{tpu_custom_call.1} parent=1 // pred_check_branch
      %47 = sbr.rel (0) target = $region13
    $region12: #{tpu_custom_call.1} parent=1 // pred_region
      _
    $region13: #{tpu_custom_call.1} parent=1 // pred_fallthru
      _
    // Predicated region
    $region14: #{tpu_custom_call.1} parent=1 // pred_check
      _
    $region15: #{tpu_custom_call.1} parent=1 // pred_check_branch
      %49 = sbr.rel (0) target = $region17
    $region16: #{tpu_custom_call.1} parent=1 // pred_region
      %s51 = ssub.s32 256, 256
      %52 = vsyncadd [#allocation6], %s51
      %s53 = sshll.u32 [#allocation5], 4
      %s54 = int_to_ptr.vmem [resolvable:$true] %s53
      %59 = dma.hbm_to_vmem [thread:$0]  %s3, 256, %s54, [#allocation6], 128, 128, 8
    $region17: #{tpu_custom_call.1} parent=1 // pred_fallthru
      _
    // Predicated region
    $region18: #{tpu_custom_call.1} parent=1 // pred_check
      _
    $region19: #{tpu_custom_call.1} parent=1 // pred_check_branch
      %61 = sbr.rel (0) target = $region21
    $region20: #{tpu_custom_call.1} parent=1 // pred_region
      %s63 = ssub.s32 32, 32
      %64 = vsyncadd [#allocation6], %s63
      %s66 = sshll.u32 [#allocation7], 4
      %s67 = int_to_ptr.vmem [resolvable:$true] %s66
      %69 = dma.hbm_to_vmem [thread:$0]  %s4, 32, %s67, [#allocation6]
    $region21: #{tpu_custom_call.1} parent=1 // pred_fallthru
      _
    // Predicated region
    $region22: #{tpu_custom_call.1} parent=1 // pred_check
      _
    $region23: #{tpu_custom_call.1} parent=1 // pred_check_branch
      %71 = sbr.rel (0) target = $region25
    $region24: #{tpu_custom_call.1} parent=1 // pred_region
      %s73 = ssub.s32 16, 16
      %74 = vsyncadd [#allocation9], %s73
      %s76 = sshll.u32 [#allocation8], 4
      %s77 = int_to_ptr.vmem [resolvable:$true] %s76
      %79 = dma.hbm_to_vmem [thread:$0]  %s5, 16, %s77, [#allocation9]
    $region25: #{tpu_custom_call.1} parent=1 // pred_fallthru
      _
    // Predicated region
    $region26: #{tpu_custom_call.1} parent=1 // pred_check
      _
    $region27: #{tpu_custom_call.1} parent=1 // pred_check_branch
      %81 = sbr.rel (0) target = $region29
    $region28: #{tpu_custom_call.1} parent=1 // pred_region
      %s83 = ssub.s32 16, 16
      %84 = vsyncadd [#allocation9], %s83
      %s86 = sshll.u32 [#allocation10], 4
      %s87 = int_to_ptr.vmem [resolvable:$true] %s86
      %89 = dma.hbm_to_vmem [thread:$0]  %s6, 16, %s87, [#allocation9]
    $region29: #{tpu_custom_call.1} parent=1 // pred_fallthru
      _
    // Predicated region
    $region30: #{tpu_custom_call.1} parent=1 // pred_check
      _
    $region31: #{tpu_custom_call.1} parent=1 // pred_check_branch
      %91 = sbr.rel (0) target = $region33
    $region32: #{tpu_custom_call.1} parent=1 // pred_region
      _
    $region33: #{tpu_custom_call.1} parent=1 // pred_fallthru
      _
    // Predicated region
    $region34: #{tpu_custom_call.1} parent=1 // pred_check
      _
    $region35: #{tpu_custom_call.1} parent=1 // pred_check_branch
      %93 = sbr.rel (0) target = $region37
    $region36: #{tpu_custom_call.1} parent=1 // pred_region
      %s95 = ssub.s32 32, 32
      %96 = vsyncadd [#allocation12], %s95
      %s97 = sshll.u32 [#allocation11], 4
      %s98 = int_to_ptr.vmem [resolvable:$true] %s97
      %103 = dma.hbm_to_vmem [thread:$0]  %s8, 32, %s98, [#allocation12], 16, 16, 1
    $region37: #{tpu_custom_call.1} parent=1 // pred_fallthru
      _
    // Predicated region
    $region38: #{tpu_custom_call.1} parent=1 // pred_check
      _
    $region39: #{tpu_custom_call.1} parent=1 // pred_check_branch
      %105 = sbr.rel (0) target = $region41
    $region40: #{tpu_custom_call.1} parent=1 // pred_region
      _
    $region41: #{tpu_custom_call.1} parent=1 // pred_fallthru
      _
    // Predicated region
    $region42: #{tpu_custom_call.1} parent=1 // pred_check
      _
    $region43: #{tpu_custom_call.1} parent=1 // pred_check_branch
      %107 = sbr.rel (0) target = $region45
    $region44: #{tpu_custom_call.1} parent=1 // pred_region
      %s109 = ssub.s32 32, 32
      %110 = vsyncadd [#allocation12], %s109
      %s111 = sshll.u32 [#allocation13], 4
      %s112 = int_to_ptr.vmem [resolvable:$true] %s111
      %117 = dma.hbm_to_vmem [thread:$0]  %s10, 32, %s112, [#allocation12], 16, 16, 1
    $region45: #{tpu_custom_call.1} parent=1 // pred_fallthru
      _
    // Predicated region
    $region46: #{tpu_custom_call.1} parent=1 // pred_check
      _
    $region47: #{tpu_custom_call.1} parent=1 // pred_check_branch
      %119 = sbr.rel (0) target = $region49
    $region48: #{tpu_custom_call.1} parent=1 // pred_region
      %s121 = ssub.s32 32, 32
      %122 = vsyncadd [#allocation15], %s121
      %s123 = sshll.u32 [#allocation14], 4
      %s124 = int_to_ptr.vmem [resolvable:$true] %s123
      %129 = dma.hbm_to_vmem [thread:$0]  %s11, 32, %s124, [#allocation15], 16, 16, 1
    $region49: #{tpu_custom_call.1} parent=1 // pred_fallthru
      _
    // Predicated region
    $region50: #{tpu_custom_call.1} parent=1 // pred_check
      _
    $region51: #{tpu_custom_call.1} parent=1 // pred_check_branch
      %131 = sbr.rel (0) target = $region53
    $region52: #{tpu_custom_call.1} parent=1 // pred_region
      %s133 = ssub.s32 32, 32
      %134 = vsyncadd [#allocation15], %s133
      %s135 = sshll.u32 [#allocation16], 4
      %s136 = int_to_ptr.vmem [resolvable:$true] %s135
      %141 = dma.hbm_to_vmem [thread:$0]  %s12, 32, %s136, [#allocation15], 16, 16, 1
    $region53: #{tpu_custom_call.1} parent=1 // pred_fallthru
      _
    // Predicated region
    $region54: #{tpu_custom_call.1} parent=1 // pred_check
      _
    $region55: #{tpu_custom_call.1} parent=1 // pred_check_branch
      %143 = sbr.rel (0) target = $region57
    $region56: #{tpu_custom_call.1} parent=1 // pred_region
      _
    $region57: #{tpu_custom_call.1} parent=1 // pred_fallthru
      _
    // Predicated region
    $region58: #{tpu_custom_call.1} parent=1 // pred_check
      _
    $region59: #{tpu_custom_call.1} parent=1 // pred_check_branch
      %145 = sbr.rel (0) target = $region61
    $region60: #{tpu_custom_call.1} parent=1 // pred_region
      _
    $region61: #{tpu_custom_call.1} parent=1 // pred_fallthru
      _
    // Predicated region
    $region62: #{tpu_custom_call.1} parent=1 // pred_check
      _
    $region63: #{tpu_custom_call.1} parent=1 // pred_check_branch
      %147 = sbr.rel (0) target = $region65
    $region64: #{tpu_custom_call.1} parent=1 // pred_region
      _
    $region65: #{tpu_custom_call.1} parent=1 // pred_fallthru
      _
    // Predicated region
    $region66: #{tpu_custom_call.1} parent=1 // pred_check
      _
    $region67: #{tpu_custom_call.1} parent=1 // pred_check_branch
      %149 = sbr.rel (0) target = $region69
    $region68: #{tpu_custom_call.1} parent=1 // pred_region
      _
    $region69: #{tpu_custom_call.1} parent=1 // pred_fallthru
      _
    // Predicated region
    $region70: #{tpu_custom_call.1} parent=1 // pred_check
      _
    $region71: #{tpu_custom_call.1} parent=1 // pred_check_branch
      %151 = sbr.rel (0) target = $region73
    $region72: #{tpu_custom_call.1} parent=1 // pred_region
      _
    $region73: #{tpu_custom_call.1} parent=1 // pred_fallthru
      _
    // Predicated region
    $region74: #{tpu_custom_call.1} parent=1 // pred_check
      _
    $region75: #{tpu_custom_call.1} parent=1 // pred_check_branch
      %153 = sbr.rel (0) target = $region77
    $region76: #{tpu_custom_call.1} parent=1 // pred_region
      _
    $region77: #{tpu_custom_call.1} parent=1 // pred_fallthru
      _
    // Predicated region
    $region78: #{tpu_custom_call.1} parent=1 // pred_check
      _
    $region79: #{tpu_custom_call.1} parent=1 // pred_check_branch
      %155 = sbr.rel (0) target = $region81
    $region80: #{tpu_custom_call.1} parent=1 // pred_region
      _
    $region81: #{tpu_custom_call.1} parent=1 // pred_fallthru
      _
    // Predicated region
    $region82: #{tpu_custom_call.1} parent=1 // pred_check
      _
    $region83: #{tpu_custom_call.1} parent=1 // pred_check_branch
      %157 = sbr.rel (0) target = $region85
    $region84: #{tpu_custom_call.1} parent=1 // pred_region
      _
    $region85: #{tpu_custom_call.1} parent=1 // pred_fallthru
      _
    // Predicated region
    $region86: #{tpu_custom_call.1} parent=1 // pred_check
      _
    $region87: #{tpu_custom_call.1} parent=1 // pred_check_branch
      %159 = sbr.rel (0) target = $region89
    $region88: #{tpu_custom_call.1} parent=1 // pred_region
      _
    $region89: #{tpu_custom_call.1} parent=1 // pred_fallthru
      _
    // Predicated region
    $region90: #{tpu_custom_call.1} parent=1 // pred_check
      _
    $region91: #{tpu_custom_call.1} parent=1 // pred_check_branch
      %161 = sbr.rel (0) target = $region93
    $region92: #{tpu_custom_call.1} parent=1 // pred_region
      _
    $region93: #{tpu_custom_call.1} parent=1 // pred_fallthru
      _
    // Predicated region
    $region94: #{tpu_custom_call.1} parent=1 // pred_check
      _
    $region95: #{tpu_custom_call.1} parent=1 // pred_check_branch
      %163 = sbr.rel (0) target = $region97
    $region96: #{tpu_custom_call.1} parent=1 // pred_region
      %164 = dma.done [#allocation3], 32
    $region97: #{tpu_custom_call.1} parent=1 // pred_fallthru
      _
    // Predicated region
    $region98: #{tpu_custom_call.1} parent=1 // pred_check
      _
    $region99: #{tpu_custom_call.1} parent=1 // pred_check_branch
      %166 = sbr.rel (0) target = $region101
    $region100: #{tpu_custom_call.1} parent=1 // pred_region
      %167 = dma.done [#allocation6], 256
    $region101: #{tpu_custom_call.1} parent=1 // pred_fallthru
      _
    // Predicated region
    $region102: #{tpu_custom_call.1} parent=1 // pred_check
      _
    $region103: #{tpu_custom_call.1} parent=1 // pred_check_branch
      %169 = sbr.rel (0) target = $region105
    $region104: #{tpu_custom_call.1} parent=1 // pred_region
      %170 = dma.done [#allocation6], 32
    $region105: #{tpu_custom_call.1} parent=1 // pred_fallthru
      _
    // Predicated region
    $region106: #{tpu_custom_call.1} parent=1 // pred_check
      _
    $region107: #{tpu_custom_call.1} parent=1 // pred_check_branch
      %172 = sbr.rel (0) target = $region109
    $region108: #{tpu_custom_call.1} parent=1 // pred_region
      %173 = dma.done [#allocation9], 16
    $region109: #{tpu_custom_call.1} parent=1 // pred_fallthru
      _
    // Predicated region
    $region110: #{tpu_custom_call.1} parent=1 // pred_check
      _
    $region111: #{tpu_custom_call.1} parent=1 // pred_check_branch
      %175 = sbr.rel (0) target = $region113
    $region112: #{tpu_custom_call.1} parent=1 // pred_region
      %176 = dma.done [#allocation9], 16
    $region113: #{tpu_custom_call.1} parent=1 // pred_fallthru
      _
    // Predicated region
    $region114: #{tpu_custom_call.1} parent=1 // pred_check
      _
    $region115: #{tpu_custom_call.1} parent=1 // pred_check_branch
      %178 = sbr.rel (0) target = $region117
    $region116: #{tpu_custom_call.1} parent=1 // pred_region
      %179 = dma.done [#allocation12], 32
    $region117: #{tpu_custom_call.1} parent=1 // pred_fallthru
      _
    // Predicated region
    $region118: #{tpu_custom_call.1} parent=1 // pred_check
      _
    $region119: #{tpu_custom_call.1} parent=1 // pred_check_branch
      %181 = sbr.rel (0) target = $region121
    $region120: #{tpu_custom_call.1} parent=1 // pred_region
      %182 = dma.done [#allocation12], 32
    $region121: #{tpu_custom_call.1} parent=1 // pred_fallthru
      _
    // Predicated region
    $region122: #{tpu_custom_call.1} parent=1 // pred_check
      _
    $region123: #{tpu_custom_call.1} parent=1 // pred_check_branch
      %184 = sbr.rel (0) target = $region125
    $region124: #{tpu_custom_call.1} parent=1 // pred_region
      %185 = dma.done [#allocation15], 32
    $region125: #{tpu_custom_call.1} parent=1 // pred_fallthru
      _
    // Predicated region
    $region126: #{tpu_custom_call.1} parent=1 // pred_check
      _
    $region127: #{tpu_custom_call.1} parent=1 // pred_check_branch
      %187 = sbr.rel (0) target = $region129
    $region128: #{tpu_custom_call.1} parent=1 // pred_region
      %188 = dma.done [#allocation15], 32
    $region129: #{tpu_custom_call.1} parent=1 // pred_fallthru
      _
    %v190 = vlaneseq
    %v191 = vand.u32 %v190, 127
    %v192 = vld [vmem:[%s0] sm:$0xff]
    %v193 = vld [vmem:[%s0 + $0x8] sm:$0xff]
    %194 = vset.pattern.permute.xlu0 0
    %195 = vperm.xlu0 %194, %v192
    %v196 = vpop.permute.xlu0 %195
    %197 = vset.pattern.permute.xlu0 0
    %198 = vperm.xlu0 %197, %v193
    %v199 = vpop.permute.xlu0 %198
    %vm200 = vcmp.eq.s32.totalorder %v191, %v196
    %vm201 = vcmp.eq.s32.totalorder %v191, %v199
    %v202 = vsel %vm200, 1, 0
    %v203 = vsel %vm201, 1, 0
    %v204 = vcvt.s32.f32 %v202
    %v205 = vcvt.s32.f32 %v203
    %v206 = vld [vmem:[%s2] sm:$0xff]
    %v207 = vld [vmem:[%s2 + $0x8] sm:$0xff]
    %v208 = vld [vmem:[%s2 + $0x10] sm:$0xff]
    %v209 = vld [vmem:[%s2 + $0x18] sm:$0xff]
    %v210 = vld [vmem:[#allocation5] sm:$0xff]
    %vm211 = vcmask 261120
    %v213 = vsel %vm211, %v204, 0
    %v216 = vsel %vm211, %v205, 0
    %218 = vmatprep.subr.mxu0 0.0
    %219 = vmatpush1.msra.mxu0 %v206
    %220 = vmatprep.subr.mxu0 0.0
    %221 = vmatpush1.msra.mxu0 %v207
    %222 = vmatprep.subr.mxu0 0.0
    %223 = vmatpush1.msra.mxu0 %v208
    %224 = vmatprep.subr.mxu0 0.0
    %225 = vmatpush1.msra.mxu0 %v209
    %226 = vmatprep.subr.mxu0 0.0
    %227 = vmatpush1.msra.mxu0 0.0
    %228 = vmatprep.subr.mxu0 0.0
    %229 = vmatpush1.msra.mxu0 0.0
    %230 = vmatprep.subr.mxu0 0.0
    %231 = vmatpush1.msra.mxu0 0.0
    %232 = vmatprep.subr.mxu0 0.0
    %233 = vmatpush1.msra.mxu0 0.0
    %234 = vmatprep.subr.mxu0 0.0
    %235 = vmatpush1.msra.mxu0 0.0
    %236 = vmatprep.subr.mxu0 0.0
    %237 = vmatpush1.msra.mxu0 0.0
    %238 = vmatprep.subr.mxu0 0.0
    %239 = vmatpush1.msra.mxu0 0.0
    %240 = vmatprep.subr.mxu0 0.0
    %241 = vmatpush1.msra.mxu0 0.0
    %242 = vmatprep.subr.mxu0 0.0
    %243 = vmatpush1.msra.mxu0 0.0
    %244 = vmatprep.subr.mxu0 0.0
    %245 = vmatpush1.msra.mxu0 0.0
    %246 = vmatprep.subr.mxu0 0.0
    %247 = vmatpush1.msra.mxu0 0.0
    %248 = vmatprep.subr.mxu0 0.0
    %249 = vmatpush1.msra.mxu0 0.0
    %250 = vmatprep.subr.mxu0 0.0
    %251 = vmatpush1.msra.mxu0 0.0
    %252 = vmatprep.subr.mxu0 0.0
    %253 = vmatpush1.msra.mxu0 0.0
    %254 = vmatprep.subr.mxu0 0.0
    %255 = vmatpush1.msra.mxu0 0.0
    %256 = vmatprep.subr.mxu0 0.0
    %257 = vmatpush1.msra.mxu0 0.0
    %258 = vmatprep.subr.mxu0 0.0
    %259 = vmatpush1.msra.mxu0 0.0
    %260 = vmatprep.subr.mxu0 0.0
    %261 = vmatpush1.msra.mxu0 0.0
    %262 = vmatprep.subr.mxu0 0.0
    %263 = vmatpush1.msra.mxu0 0.0
    %264 = vmatprep.subr.mxu0 0.0
    %265 = vmatpush1.msra.mxu0 0.0
    %266 = vmatprep.subr.mxu0 0.0
    %267 = vmatpush1.msra.mxu0 0.0
    %268 = vmatprep.subr.mxu0 0.0
    %269 = vmatpush1.msra.mxu0 0.0
    %270 = vmatprep.subr.mxu0 0.0
    %271 = vmatpush1.msra.mxu0 0.0
    %272 = vmatprep.subr.mxu0 0.0
    %273 = vmatpush1.msra.mxu0 0.0
    %274 = vmatprep.subr.mxu0 0.0
    %275 = vmatpush1.msra.mxu0 0.0
    %276 = vmatprep.subr.mxu0 0.0
    %277 = vmatpush1.msra.mxu0 0.0
    %278 = vmatprep.subr.mxu0 0.0
    %279 = vmatpush1.msra.mxu0 0.0
    %280 = vmatprep.subr.mxu0 0.0
    %281 = vmatpush1.msra.mxu0 0.0
    %282 = vmatprep.mubr.f32.mxu0 0.0
    %283 = vmatmul.mubr.f32.gmra.mrb[0].mxu0 %v213
    %v284 = vpop.f32.mrb[0].mxu0
    %v285 = vadd.f32 %v210, %v284
    %v286 = vpop.f32.mrb[0].mxu0
    %287 = vmatprep.mubr.f32.mxu0 0.0
    %288 = vmatmul.mubr.f32.gmra.mrb[0].mxu0 %v216
    %v289 = vpop.f32.mrb[0].mxu0
    %v290 = vadd.f32 %v210, %v289
    %v291 = vpop.f32.mrb[0].mxu0
    %292 = vdwg.mxu0
    %v293 = vld [vmem:[#allocation7] sm:$0x1]
    %v294 = vlaneseq
    %v295 = vshrl.u32 %v294, 7
    %v296 = vsub.s32 0, %v295
    %v297 = vrot.slane %v293, %v296
    %v298 = vadd.f32 %v285, %v297
    %v299 = vadd.f32 %v290, %v297
    %v300 = vld [vmem:[#allocation8] sm:$0x1]
    %v301 = vld [vmem:[#allocation10] sm:$0x1]
    %v302 = vsel %vm211, %v298, 0.0
    %303 = vadd.xlane.f32.xlu0 %v302
    %v304 = vpop.xlane.xlu0 %303
    %v305 = vsel %vm211, %v299, 0.0
    %306 = vadd.xlane.f32.xlu0 %v305
    %v307 = vpop.xlane.xlu0 %306
    %v308 = vrcp.pop 32.0
    %v309 = vmul.f32 %v304, %v308
    %v310 = vmul.f32 %v307, %v308
    %v311 = vsub.f32 %v298, %v309
    %v312 = vsub.f32 %v299, %v310
    %v313 = vmul.f32 %v311, %v311
    %v314 = vmul.f32 %v312, %v312
    %v315 = vsel %vm211, %v313, 0.0
    %316 = vadd.xlane.f32.xlu0 %v315
    %v317 = vpop.xlane.xlu0 %316
    %v318 = vsel %vm211, %v314, 0.0
    %319 = vadd.xlane.f32.xlu0 %v318
    %v320 = vpop.xlane.xlu0 %319
    %v321 = vmul.f32 %v317, %v308
    %v322 = vmul.f32 %v320, %v308
    %v323 = vadd.f32 %v321, 1e-12
    %v324 = vadd.f32 %v322, 1e-12
    %v325 = vrsqrt.pop %v323
    %v326 = vrsqrt.pop %v324
    %v327 = vmul.f32 %v311, %v325
    %v328 = vmul.f32 %v312, %v326
    %v330 = vlaneseq
    %v331 = vshrl.u32 %v330, 7
    %v332 = vsub.s32 0, %v331
    %v333 = vrot.slane %v300, %v332
    %v335 = vmul.f32 %v327, %v333
    %v336 = vmul.f32 %v328, %v333
    %v338 = vlaneseq
    %v339 = vshrl.u32 %v338, 7
    %v340 = vsub.s32 0, %v339
    %v341 = vrot.slane %v301, %v340
    %v343 = vadd.f32 %v335, %v341
    %v344 = vadd.f32 %v336, %v341
    %v345 = vld [vmem:[#allocation2] sm:$0x3]
    %v346 = vsub.f32 1.0, %v345
    %v347 = vmul.f32 %v346, -1e+09
    %v350 = vunpack.c.l.s4 1966171168
    %v351 = vunpack.c.0.s8 %v350
    %v352 = vlaneseq
    %v353 = vshrl.u32 %v352, 7
    %v354 = vsub.s32 %v351, %v353
    %v355 = vrot.slane %v347, %v354
    %v356 = vcombine.high %v355, %v355
    %v358 = vunpack.c.l.s4 1966171168
    %v359 = vunpack.c.0.s8 %v358
    %v360 = vlaneseq
    %v361 = vshrl.u32 %v360, 7
    %v362 = vsub.s32 %v359, %v361
    %v363 = vrot.slane %v355, %v362
    %v365 = vunpack.c.l.s4 1966171168
    %v366 = vunpack.c.0.s8 %v365
    %v367 = vlaneseq
    %v368 = vshrl.u32 %v367, 7
    %v369 = vsub.s32 %v366, %v368
    %v370 = vrot.slane %v356, %v369
    %vm371 = vcmp.ge.s32.totalorder %v191, 0
    %vm372 = vcmp.lt.s32.totalorder %v191, 8
    %vm373 = vmand %vm371, %vm372
    %v374 = vsel %vm373, 1, 0
    %v375 = vcvt.s32.f32 %v374
    %vm376 = vcmp.ge.s32.totalorder %v191, 8
    %vm377 = vcmp.lt.s32.totalorder %v191, 16
    %vm378 = vmand %vm376, %vm377
    %v379 = vsel %vm378, 1, 0
    %v380 = vcvt.s32.f32 %v379
    %vm381 = vcmp.ge.s32.totalorder %v191, 16
    %vm382 = vcmp.lt.s32.totalorder %v191, 24
    %vm383 = vmand %vm381, %vm382
    %v384 = vsel %vm383, 1, 0
    %v385 = vcvt.s32.f32 %v384
    %vm386 = vcmp.ge.s32.totalorder %v191, 24
    %vm387 = vcmp.lt.s32.totalorder %v191, 32
    %vm388 = vmand %vm386, %vm387
    %v389 = vsel %vm388, 1, 0
    %v390 = vcvt.s32.f32 %v389
    %v391 = vld [vmem:[%s7] sm:$0xf]
    %v392 = vld [vmem:[%s7 + $0x4] sm:$0xf]
    %v393 = vld [vmem:[%s7 + $0x8] sm:$0xf]
    %v394 = vld [vmem:[%s7 + $0xc] sm:$0xf]
    %v395 = vpack.c.bf16 %v344, %v343
    %v396 = vld [vmem:[#allocation11] sm:$0x1]
    %v398 = vlaneseq
    %v399 = vshrl.u32 %v398, 7
    %v400 = vsub.s32 0, %v399
    %v401 = vrot.slane %v396, %v400
    %v407 = vunpack.c.l.b16 %v391
    %v408 = vunpack.c.l.b16 %v392
    %v409 = vunpack.c.l.b16 %v393
    %v410 = vunpack.c.l.b16 %v394
    %v411 = vpack.c.b16 %v408, %v407
    %v412 = vpack.c.b16 %v410, %v409
    %v416 = vsel %vm211, %v395, 0
    %418 = vmatprep.subr.bf16.mxu0 0
    %419 = vmatpush1.bf16.msra.mxu0 %v411
    %420 = vmatprep.subr.bf16.mxu0 0
    %421 = vmatpush1.bf16.msra.mxu0 %v412
    %422 = vmatprep.subr.bf16.mxu0 0
    %423 = vmatpush1.bf16.msra.mxu0 0
    %424 = vmatprep.subr.bf16.mxu0 0
    %425 = vmatpush1.bf16.msra.mxu0 0
    %426 = vmatprep.subr.bf16.mxu0 0
    %427 = vmatpush1.bf16.msra.mxu0 0
    %428 = vmatprep.subr.bf16.mxu0 0
    %429 = vmatpush1.bf16.msra.mxu0 0
    %430 = vmatprep.subr.bf16.mxu0 0
    %431 = vmatpush1.bf16.msra.mxu0 0
    %432 = vmatprep.subr.bf16.mxu0 0
    %433 = vmatpush1.bf16.msra.mxu0 0
    %434 = vmatprep.subr.bf16.mxu0 0
    %435 = vmatpush1.bf16.msra.mxu0 0
    %436 = vmatprep.subr.bf16.mxu0 0
    %437 = vmatpush1.bf16.msra.mxu0 0
    %438 = vmatprep.subr.bf16.mxu0 0
    %439 = vmatpush1.bf16.msra.mxu0 0
    %440 = vmatprep.subr.bf16.mxu0 0
    %441 = vmatpush1.bf16.msra.mxu0 0
    %442 = vmatprep.subr.bf16.mxu0 0
    %443 = vmatpush1.bf16.msra.mxu0 0
    %444 = vmatprep.subr.bf16.mxu0 0
    %445 = vmatpush1.bf16.msra.mxu0 0
    %446 = vmatprep.subr.bf16.mxu0 0
    %447 = vmatpush1.bf16.msra.mxu0 0
    %448 = vmatprep.subr.bf16.mxu0 0
    %449 = vmatpush1.bf16.msra.mxu0 0
    %450 = vmatprep.mubr.bf16.mxu0 0
    %451 = vmatmul.mubr.bf16.gmra.mrb[0].mxu0 %v416
    %v452 = vpop.f32.mrb[0].mxu0
    %v453 = vadd.f32 %v401, %v452
    %v454 = vpop.f32.mrb[0].mxu0
    %v455 = vpop.f32.mrb[0].mxu0
    %v456 = vadd.f32 %v401, %v455
    %v457 = vpop.f32.mrb[0].mxu0
    %458 = vdwg.mxu0
    %v459 = vmul.f32 %v453, 0.35355338
    %v460 = vmul.f32 %v456, 0.35355338
    %v461 = vmul.f32 %v459, %v375
    %v462 = vmul.f32 %v460, %v375
    %v463 = vlaneseq
    %v464 = vshrl.u32 %v463, 7
    %v465 = vsub.s32 0, %v464
    %v466 = vrot.slane %v363, %v465
    %v467 = vlaneseq
    %v468 = vshrl.u32 %v467, 7
    %v469 = vsub.s32 0, %v468
    %v470 = vrot.slane %v370, %v469
    %474 = vrot.lane.b32.xlu0 %v453, 96
    %v475 = vpop.permute.xlu0 %474
    %v477 = vsel %vm211, %v461, 0
    %v479 = vsel %vm211, %v475, 0
    %481 = vmatprep.subr.mxu0 0.0
    %482 = vmatpush1.xpose.msra.mxu0 %v479
    %483 = vmatprep.subr.mxu0 0.0
    %484 = vmatpush1.xpose.msra.mxu0 0.0
    %485 = vmatprep.subr.mxu0 0.0
    %486 = vmatpush1.xpose.msra.mxu0 0.0
    %487 = vmatprep.subr.mxu0 0.0
    %488 = vmatpush1.xpose.msra.mxu0 0.0
    %489 = vmatprep.subr.mxu0 0.0
    %490 = vmatpush1.xpose.msra.mxu0 0.0
    %491 = vmatprep.subr.mxu0 0.0
    %492 = vmatpush1.xpose.msra.mxu0 0.0
    %493 = vmatprep.subr.mxu0 0.0
    %494 = vmatpush1.xpose.msra.mxu0 0.0
    %495 = vmatprep.subr.mxu0 0.0
    %496 = vmatpush1.xpose.msra.mxu0 0.0
    %497 = vmatprep.subr.mxu0 0.0
    %498 = vmatpush1.xpose.msra.mxu0 0.0
    %499 = vmatprep.subr.mxu0 0.0
    %500 = vmatpush1.xpose.msra.mxu0 0.0
    %501 = vmatprep.subr.mxu0 0.0
    %502 = vmatpush1.xpose.msra.mxu0 0.0
    %503 = vmatprep.subr.mxu0 0.0
    %504 = vmatpush1.xpose.msra.mxu0 0.0
    %505 = vmatprep.subr.mxu0 0.0
    %506 = vmatpush1.xpose.msra.mxu0 0.0
    %507 = vmatprep.subr.mxu0 0.0
    %508 = vmatpush1.xpose.msra.mxu0 0.0
    %509 = vmatprep.subr.mxu0 0.0
    %510 = vmatpush1.xpose.msra.mxu0 0.0
    %511 = vmatprep.subr.mxu0 0.0
    %512 = vmatpush1.xpose.msra.mxu0 0.0
    %513 = vmatprep.subr.mxu0 0.0
    %514 = vmatpush1.xpose.msra.mxu0 0.0
    %515 = vmatprep.subr.mxu0 0.0
    %516 = vmatpush1.xpose.msra.mxu0 0.0
    %517 = vmatprep.subr.mxu0 0.0
    %518 = vmatpush1.xpose.msra.mxu0 0.0
    %519 = vmatprep.subr.mxu0 0.0
    %520 = vmatpush1.xpose.msra.mxu0 0.0
    %521 = vmatprep.subr.mxu0 0.0
    %522 = vmatpush1.xpose.msra.mxu0 0.0
    %523 = vmatprep.subr.mxu0 0.0
    %524 = vmatpush1.xpose.msra.mxu0 0.0
    %525 = vmatprep.subr.mxu0 0.0
    %526 = vmatpush1.xpose.msra.mxu0 0.0
    %527 = vmatprep.subr.mxu0 0.0
    %528 = vmatpush1.xpose.msra.mxu0 0.0
    %529 = vmatprep.subr.mxu0 0.0
    %530 = vmatpush1.xpose.msra.mxu0 0.0
    %531 = vmatprep.subr.mxu0 0.0
    %532 = vmatpush1.xpose.msra.mxu0 0.0
    %533 = vmatprep.subr.mxu0 0.0
    %534 = vmatpush1.xpose.msra.mxu0 0.0
    %535 = vmatprep.subr.mxu0 0.0
    %536 = vmatpush1.xpose.msra.mxu0 0.0
    %537 = vmatprep.subr.mxu0 0.0
    %538 = vmatpush1.xpose.msra.mxu0 0.0
    %539 = vmatprep.subr.mxu0 0.0
    %540 = vmatpush1.xpose.msra.mxu0 0.0
    %541 = vmatprep.subr.mxu0 0.0
    %542 = vmatpush1.xpose.msra.mxu0 0.0
    %543 = vmatprep.subr.mxu0 0.0
    %544 = vmatpush1.xpose.msra.mxu0 0.0
    %545 = vmatprep.mubr.f32.mxu0 0.0
    %546 = vmatmul.mubr.f32.gmra.mrb[0].mxu0 %v477
    %v547 = vpop.f32.mrb[0].mxu0
    %v548 = vadd.f32 %v466, %v547
    %v549 = vpop.f32.mrb[0].mxu0
    %550 = vdwg.mxu0
    %552 = vrot.lane.b32.xlu0 %v456, 96
    %v553 = vpop.permute.xlu0 %552
    %v555 = vsel %vm211, %v462, 0
    %v557 = vsel %vm211, %v553, 0
    %559 = vmatprep.subr.mxu0 0.0
    %560 = vmatpush1.xpose.msra.mxu0 %v557
    %561 = vmatprep.subr.mxu0 0.0
    %562 = vmatpush1.xpose.msra.mxu0 0.0
    %563 = vmatprep.subr.mxu0 0.0
    %564 = vmatpush1.xpose.msra.mxu0 0.0
    %565 = vmatprep.subr.mxu0 0.0
    %566 = vmatpush1.xpose.msra.mxu0 0.0
    %567 = vmatprep.subr.mxu0 0.0
    %568 = vmatpush1.xpose.msra.mxu0 0.0
    %569 = vmatprep.subr.mxu0 0.0
    %570 = vmatpush1.xpose.msra.mxu0 0.0
    %571 = vmatprep.subr.mxu0 0.0
    %572 = vmatpush1.xpose.msra.mxu0 0.0
    %573 = vmatprep.subr.mxu0 0.0
    %574 = vmatpush1.xpose.msra.mxu0 0.0
    %575 = vmatprep.subr.mxu0 0.0
    %576 = vmatpush1.xpose.msra.mxu0 0.0
    %577 = vmatprep.subr.mxu0 0.0
    %578 = vmatpush1.xpose.msra.mxu0 0.0
    %579 = vmatprep.subr.mxu0 0.0
    %580 = vmatpush1.xpose.msra.mxu0 0.0
    %581 = vmatprep.subr.mxu0 0.0
    %582 = vmatpush1.xpose.msra.mxu0 0.0
    %583 = vmatprep.subr.mxu0 0.0
    %584 = vmatpush1.xpose.msra.mxu0 0.0
    %585 = vmatprep.subr.mxu0 0.0
    %586 = vmatpush1.xpose.msra.mxu0 0.0
    %587 = vmatprep.subr.mxu0 0.0
    %588 = vmatpush1.xpose.msra.mxu0 0.0
    %589 = vmatprep.subr.mxu0 0.0
    %590 = vmatpush1.xpose.msra.mxu0 0.0
    %591 = vmatprep.subr.mxu0 0.0
    %592 = vmatpush1.xpose.msra.mxu0 0.0
    %593 = vmatprep.subr.mxu0 0.0
    %594 = vmatpush1.xpose.msra.mxu0 0.0
    %595 = vmatprep.subr.mxu0 0.0
    %596 = vmatpush1.xpose.msra.mxu0 0.0
    %597 = vmatprep.subr.mxu0 0.0
    %598 = vmatpush1.xpose.msra.mxu0 0.0
    %599 = vmatprep.subr.mxu0 0.0
    %600 = vmatpush1.xpose.msra.mxu0 0.0
    %601 = vmatprep.subr.mxu0 0.0
    %602 = vmatpush1.xpose.msra.mxu0 0.0
    %603 = vmatprep.subr.mxu0 0.0
    %604 = vmatpush1.xpose.msra.mxu0 0.0
    %605 = vmatprep.subr.mxu0 0.0
    %606 = vmatpush1.xpose.msra.mxu0 0.0
    %607 = vmatprep.subr.mxu0 0.0
    %608 = vmatpush1.xpose.msra.mxu0 0.0
    %609 = vmatprep.subr.mxu0 0.0
    %610 = vmatpush1.xpose.msra.mxu0 0.0
    %611 = vmatprep.subr.mxu0 0.0
    %612 = vmatpush1.xpose.msra.mxu0 0.0
    %613 = vmatprep.subr.mxu0 0.0
    %614 = vmatpush1.xpose.msra.mxu0 0.0
    %615 = vmatprep.subr.mxu0 0.0
    %616 = vmatpush1.xpose.msra.mxu0 0.0
    %617 = vmatprep.subr.mxu0 0.0
    %618 = vmatpush1.xpose.msra.mxu0 0.0
    %619 = vmatprep.subr.mxu0 0.0
    %620 = vmatpush1.xpose.msra.mxu0 0.0
    %621 = vmatprep.subr.mxu0 0.0
    %622 = vmatpush1.xpose.msra.mxu0 0.0
    %623 = vmatprep.mubr.f32.mxu0 0.0
    %624 = vmatmul.mubr.f32.gmra.mrb[0].mxu0 %v555
    %v625 = vpop.f32.mrb[0].mxu0
    %v626 = vadd.f32 %v470, %v625
    %v627 = vpop.f32.mrb[0].mxu0
    %628 = vdwg.mxu0
    %vm629 = vcmask 64512
    %v630 = vsel %vm629, %v548, -inf
    %631 = vmax.xlane.f32.xlu0 %v630
    %v632 = vpop.xlane.xlu0 %631
    %v633 = vsel %vm629, %v626, -inf
    %634 = vmax.xlane.f32.xlu0 %v633
    %v635 = vpop.xlane.xlu0 %634
    %v636 = vsub.f32 %v548, %v632
    %v637 = vsub.f32 %v626, %v635
    %v638 = vmul.f32 %v636, 1.442695
    %v639 = vpow.pop %v638
    %v640 = vmul.f32 %v637, 1.442695
    %v641 = vpow.pop %v640
    %v642 = vsel %vm629, %v639, 0.0
    %643 = vadd.xlane.f32.xlu0 %v642
    %v644 = vpop.xlane.xlu0 %643
    %v645 = vsel %vm629, %v641, 0.0
    %646 = vadd.xlane.f32.xlu0 %v645
    %v647 = vpop.xlane.xlu0 %646
    %v648 = vrcp.pop %v644
    %v649 = vrcp.pop %v647
    %v650 = vmul.f32 %v639, %v648
    %v651 = vmul.f32 %v641, %v649
    %653 = vrot.lane.b32.xlu0 %v375, 64
    %v654 = vpop.permute.xlu0 %653
    %v656 = vmul.f32 %v453, %v654
    %v657 = vmul.f32 %v456, %v654
    %v658 = vmul.f32 %v459, %v380
    %v659 = vmul.f32 %v460, %v380
    %v661 = vsel %vm211, %v658, 0
    %663 = vmatprep.subr.mxu0 0.0
    %664 = vmatpush1.xpose.msra.mxu0 %v479
    %665 = vmatprep.subr.mxu0 0.0
    %666 = vmatpush1.xpose.msra.mxu0 0.0
    %667 = vmatprep.subr.mxu0 0.0
    %668 = vmatpush1.xpose.msra.mxu0 0.0
    %669 = vmatprep.subr.mxu0 0.0
    %670 = vmatpush1.xpose.msra.mxu0 0.0
    %671 = vmatprep.subr.mxu0 0.0
    %672 = vmatpush1.xpose.msra.mxu0 0.0
    %673 = vmatprep.subr.mxu0 0.0
    %674 = vmatpush1.xpose.msra.mxu0 0.0
    %675 = vmatprep.subr.mxu0 0.0
    %676 = vmatpush1.xpose.msra.mxu0 0.0
    %677 = vmatprep.subr.mxu0 0.0
    %678 = vmatpush1.xpose.msra.mxu0 0.0
    %679 = vmatprep.subr.mxu0 0.0
    %680 = vmatpush1.xpose.msra.mxu0 0.0
    %681 = vmatprep.subr.mxu0 0.0
    %682 = vmatpush1.xpose.msra.mxu0 0.0
    %683 = vmatprep.subr.mxu0 0.0
    %684 = vmatpush1.xpose.msra.mxu0 0.0
    %685 = vmatprep.subr.mxu0 0.0
    %686 = vmatpush1.xpose.msra.mxu0 0.0
    %687 = vmatprep.subr.mxu0 0.0
    %688 = vmatpush1.xpose.msra.mxu0 0.0
    %689 = vmatprep.subr.mxu0 0.0
    %690 = vmatpush1.xpose.msra.mxu0 0.0
    %691 = vmatprep.subr.mxu0 0.0
    %692 = vmatpush1.xpose.msra.mxu0 0.0
    %693 = vmatprep.subr.mxu0 0.0
    %694 = vmatpush1.xpose.msra.mxu0 0.0
    %695 = vmatprep.subr.mxu0 0.0
    %696 = vmatpush1.xpose.msra.mxu0 0.0
    %697 = vmatprep.subr.mxu0 0.0
    %698 = vmatpush1.xpose.msra.mxu0 0.0
    %699 = vmatprep.subr.mxu0 0.0
    %700 = vmatpush1.xpose.msra.mxu0 0.0
    %701 = vmatprep.subr.mxu0 0.0
    %702 = vmatpush1.xpose.msra.mxu0 0.0
    %703 = vmatprep.subr.mxu0 0.0
    %704 = vmatpush1.xpose.msra.mxu0 0.0
    %705 = vmatprep.subr.mxu0 0.0
    %706 = vmatpush1.xpose.msra.mxu0 0.0
    %707 = vmatprep.subr.mxu0 0.0
    %708 = vmatpush1.xpose.msra.mxu0 0.0
    %709 = vmatprep.subr.mxu0 0.0
    %710 = vmatpush1.xpose.msra.mxu0 0.0
    %711 = vmatprep.subr.mxu0 0.0
    %712 = vmatpush1.xpose.msra.mxu0 0.0
    %713 = vmatprep.subr.mxu0 0.0
    %714 = vmatpush1.xpose.msra.mxu0 0.0
    %715 = vmatprep.subr.mxu0 0.0
    %716 = vmatpush1.xpose.msra.mxu0 0.0
    %717 = vmatprep.subr.mxu0 0.0
    %718 = vmatpush1.xpose.msra.mxu0 0.0
    %719 = vmatprep.subr.mxu0 0.0
    %720 = vmatpush1.xpose.msra.mxu0 0.0
    %721 = vmatprep.subr.mxu0 0.0
    %722 = vmatpush1.xpose.msra.mxu0 0.0
    %723 = vmatprep.subr.mxu0 0.0
    %724 = vmatpush1.xpose.msra.mxu0 0.0
    %725 = vmatprep.subr.mxu0 0.0
    %726 = vmatpush1.xpose.msra.mxu0 0.0
    %727 = vmatprep.mubr.f32.mxu0 0.0
    %728 = vmatmul.mubr.f32.gmra.mrb[0].mxu0 %v661
    %v729 = vpop.f32.mrb[0].mxu0
    %v730 = vadd.f32 %v466, %v729
    %v731 = vpop.f32.mrb[0].mxu0
    %732 = vdwg.mxu0
    %v734 = vsel %vm211, %v659, 0
    %736 = vmatprep.subr.mxu0 0.0
    %737 = vmatpush1.xpose.msra.mxu0 %v557
    %738 = vmatprep.subr.mxu0 0.0
    %739 = vmatpush1.xpose.msra.mxu0 0.0
    %740 = vmatprep.subr.mxu0 0.0
    %741 = vmatpush1.xpose.msra.mxu0 0.0
    %742 = vmatprep.subr.mxu0 0.0
    %743 = vmatpush1.xpose.msra.mxu0 0.0
    %744 = vmatprep.subr.mxu0 0.0
    %745 = vmatpush1.xpose.msra.mxu0 0.0
    %746 = vmatprep.subr.mxu0 0.0
    %747 = vmatpush1.xpose.msra.mxu0 0.0
    %748 = vmatprep.subr.mxu0 0.0
    %749 = vmatpush1.xpose.msra.mxu0 0.0
    %750 = vmatprep.subr.mxu0 0.0
    %751 = vmatpush1.xpose.msra.mxu0 0.0
    %752 = vmatprep.subr.mxu0 0.0
    %753 = vmatpush1.xpose.msra.mxu0 0.0
    %754 = vmatprep.subr.mxu0 0.0
    %755 = vmatpush1.xpose.msra.mxu0 0.0
    %756 = vmatprep.subr.mxu0 0.0
    %757 = vmatpush1.xpose.msra.mxu0 0.0
    %758 = vmatprep.subr.mxu0 0.0
    %759 = vmatpush1.xpose.msra.mxu0 0.0
    %760 = vmatprep.subr.mxu0 0.0
    %761 = vmatpush1.xpose.msra.mxu0 0.0
    %762 = vmatprep.subr.mxu0 0.0
    %763 = vmatpush1.xpose.msra.mxu0 0.0
    %764 = vmatprep.subr.mxu0 0.0
    %765 = vmatpush1.xpose.msra.mxu0 0.0
    %766 = vmatprep.subr.mxu0 0.0
    %767 = vmatpush1.xpose.msra.mxu0 0.0
    %768 = vmatprep.subr.mxu0 0.0
    %769 = vmatpush1.xpose.msra.mxu0 0.0
    %770 = vmatprep.subr.mxu0 0.0
    %771 = vmatpush1.xpose.msra.mxu0 0.0
    %772 = vmatprep.subr.mxu0 0.0
    %773 = vmatpush1.xpose.msra.mxu0 0.0
    %774 = vmatprep.subr.mxu0 0.0
    %775 = vmatpush1.xpose.msra.mxu0 0.0
    %776 = vmatprep.subr.mxu0 0.0
    %777 = vmatpush1.xpose.msra.mxu0 0.0
    %778 = vmatprep.subr.mxu0 0.0
    %779 = vmatpush1.xpose.msra.mxu0 0.0
    %780 = vmatprep.subr.mxu0 0.0
    %781 = vmatpush1.xpose.msra.mxu0 0.0
    %782 = vmatprep.subr.mxu0 0.0
    %783 = vmatpush1.xpose.msra.mxu0 0.0
    %784 = vmatprep.subr.mxu0 0.0
    %785 = vmatpush1.xpose.msra.mxu0 0.0
    %786 = vmatprep.subr.mxu0 0.0
    %787 = vmatpush1.xpose.msra.mxu0 0.0
    %788 = vmatprep.subr.mxu0 0.0
    %789 = vmatpush1.xpose.msra.mxu0 0.0
    %790 = vmatprep.subr.mxu0 0.0
    %791 = vmatpush1.xpose.msra.mxu0 0.0
    %792 = vmatprep.subr.mxu0 0.0
    %793 = vmatpush1.xpose.msra.mxu0 0.0
    %794 = vmatprep.subr.mxu0 0.0
    %795 = vmatpush1.xpose.msra.mxu0 0.0
    %796 = vmatprep.subr.mxu0 0.0
    %797 = vmatpush1.xpose.msra.mxu0 0.0
    %798 = vmatprep.subr.mxu0 0.0
    %799 = vmatpush1.xpose.msra.mxu0 0.0
    %800 = vmatprep.mubr.f32.mxu0 0.0
    %801 = vmatmul.mubr.f32.gmra.mrb[0].mxu0 %v734
    %v802 = vpop.f32.mrb[0].mxu0
    %v803 = vadd.f32 %v470, %v802
    %v804 = vpop.f32.mrb[0].mxu0
    %805 = vdwg.mxu0
    %v806 = vsel %vm629, %v730, -inf
    %807 = vmax.xlane.f32.xlu0 %v806
    %v808 = vpop.xlane.xlu0 %807
    %v809 = vsel %vm629, %v803, -inf
    %810 = vmax.xlane.f32.xlu0 %v809
    %v811 = vpop.xlane.xlu0 %810
    %v812 = vsub.f32 %v730, %v808
    %v813 = vsub.f32 %v803, %v811
    %v814 = vmul.f32 %v812, 1.442695
    %v815 = vpow.pop %v814
    %v816 = vmul.f32 %v813, 1.442695
    %v817 = vpow.pop %v816
    %v818 = vsel %vm629, %v815, 0.0
    %819 = vadd.xlane.f32.xlu0 %v818
    %v820 = vpop.xlane.xlu0 %819
    %v821 = vsel %vm629, %v817, 0.0
    %822 = vadd.xlane.f32.xlu0 %v821
    %v823 = vpop.xlane.xlu0 %822
    %v824 = vrcp.pop %v820
    %v825 = vrcp.pop %v823
    %v826 = vmul.f32 %v815, %v824
    %v827 = vmul.f32 %v817, %v825
    %829 = vrot.lane.b32.xlu0 %v380, 64
    %v830 = vpop.permute.xlu0 %829
    %v832 = vmul.f32 %v453, %v830
    %v833 = vmul.f32 %v456, %v830
    %835 = vrot.lane.b32.xlu0 %v832, 64
    %v836 = vpop.permute.xlu0 %835
    %v839 = vsel %vm629, %v826, 0
    %841 = vmatprep.subr.mxu0 0.0
    %842 = vmatpush1.msra.mxu0 %v836
    %843 = vmatprep.subr.mxu0 0.0
    %844 = vmatpush1.msra.mxu0 0.0
    %845 = vmatprep.subr.mxu0 0.0
    %846 = vmatpush1.msra.mxu0 0.0
    %847 = vmatprep.subr.mxu0 0.0
    %848 = vmatpush1.msra.mxu0 0.0
    %849 = vmatprep.subr.mxu0 0.0
    %850 = vmatpush1.msra.mxu0 0.0
    %851 = vmatprep.subr.mxu0 0.0
    %852 = vmatpush1.msra.mxu0 0.0
    %853 = vmatprep.subr.mxu0 0.0
    %854 = vmatpush1.msra.mxu0 0.0
    %855 = vmatprep.subr.mxu0 0.0
    %856 = vmatpush1.msra.mxu0 0.0
    %857 = vmatprep.subr.mxu0 0.0
    %858 = vmatpush1.msra.mxu0 0.0
    %859 = vmatprep.subr.mxu0 0.0
    %860 = vmatpush1.msra.mxu0 0.0
    %861 = vmatprep.subr.mxu0 0.0
    %862 = vmatpush1.msra.mxu0 0.0
    %863 = vmatprep.subr.mxu0 0.0
    %864 = vmatpush1.msra.mxu0 0.0
    %865 = vmatprep.subr.mxu0 0.0
    %866 = vmatpush1.msra.mxu0 0.0
    %867 = vmatprep.subr.mxu0 0.0
    %868 = vmatpush1.msra.mxu0 0.0
    %869 = vmatprep.subr.mxu0 0.0
    %870 = vmatpush1.msra.mxu0 0.0
    %871 = vmatprep.subr.mxu0 0.0
    %872 = vmatpush1.msra.mxu0 0.0
    %873 = vmatprep.subr.mxu0 0.0
    %874 = vmatpush1.msra.mxu0 0.0
    %875 = vmatprep.subr.mxu0 0.0
    %876 = vmatpush1.msra.mxu0 0.0
    %877 = vmatprep.subr.mxu0 0.0
    %878 = vmatpush1.msra.mxu0 0.0
    %879 = vmatprep.subr.mxu0 0.0
    %880 = vmatpush1.msra.mxu0 0.0
    %881 = vmatprep.subr.mxu0 0.0
    %882 = vmatpush1.msra.mxu0 0.0
    %883 = vmatprep.subr.mxu0 0.0
    %884 = vmatpush1.msra.mxu0 0.0
    %885 = vmatprep.subr.mxu0 0.0
    %886 = vmatpush1.msra.mxu0 0.0
    %887 = vmatprep.subr.mxu0 0.0
    %888 = vmatpush1.msra.mxu0 0.0
    %889 = vmatprep.subr.mxu0 0.0
    %890 = vmatpush1.msra.mxu0 0.0
    %891 = vmatprep.subr.mxu0 0.0
    %892 = vmatpush1.msra.mxu0 0.0
    %893 = vmatprep.subr.mxu0 0.0
    %894 = vmatpush1.msra.mxu0 0.0
    %895 = vmatprep.subr.mxu0 0.0
    %896 = vmatpush1.msra.mxu0 0.0
    %897 = vmatprep.subr.mxu0 0.0
    %898 = vmatpush1.msra.mxu0 0.0
    %899 = vmatprep.subr.mxu0 0.0
    %900 = vmatpush1.msra.mxu0 0.0
    %901 = vmatprep.subr.mxu0 0.0
    %902 = vmatpush1.msra.mxu0 0.0
    %903 = vmatprep.subr.mxu0 0.0
    %904 = vmatpush1.msra.mxu0 0.0
    %905 = vmatprep.mubr.f32.mxu0 0.0
    %906 = vmatmul.mubr.f32.gmra.mrb[0].mxu0 %v839
    %v907 = vpop.f32.mrb[0].mxu0
    %v908 = vadd.f32 0.0, %v907
    %v909 = vpop.f32.mrb[0].mxu0
    %910 = vdwg.mxu0
    %912 = vrot.lane.b32.xlu0 %v833, 64
    %v913 = vpop.permute.xlu0 %912
    %v916 = vsel %vm629, %v827, 0
    %918 = vmatprep.subr.mxu0 0.0
    %919 = vmatpush1.msra.mxu0 %v913
    %920 = vmatprep.subr.mxu0 0.0
    %921 = vmatpush1.msra.mxu0 0.0
    %922 = vmatprep.subr.mxu0 0.0
    %923 = vmatpush1.msra.mxu0 0.0
    %924 = vmatprep.subr.mxu0 0.0
    %925 = vmatpush1.msra.mxu0 0.0
    %926 = vmatprep.subr.mxu0 0.0
    %927 = vmatpush1.msra.mxu0 0.0
    %928 = vmatprep.subr.mxu0 0.0
    %929 = vmatpush1.msra.mxu0 0.0
    %930 = vmatprep.subr.mxu0 0.0
    %931 = vmatpush1.msra.mxu0 0.0
    %932 = vmatprep.subr.mxu0 0.0
    %933 = vmatpush1.msra.mxu0 0.0
    %934 = vmatprep.subr.mxu0 0.0
    %935 = vmatpush1.msra.mxu0 0.0
    %936 = vmatprep.subr.mxu0 0.0
    %937 = vmatpush1.msra.mxu0 0.0
    %938 = vmatprep.subr.mxu0 0.0
    %939 = vmatpush1.msra.mxu0 0.0
    %940 = vmatprep.subr.mxu0 0.0
    %941 = vmatpush1.msra.mxu0 0.0
    %942 = vmatprep.subr.mxu0 0.0
    %943 = vmatpush1.msra.mxu0 0.0
    %944 = vmatprep.subr.mxu0 0.0
    %945 = vmatpush1.msra.mxu0 0.0
    %946 = vmatprep.subr.mxu0 0.0
    %947 = vmatpush1.msra.mxu0 0.0
    %948 = vmatprep.subr.mxu0 0.0
    %949 = vmatpush1.msra.mxu0 0.0
    %950 = vmatprep.subr.mxu0 0.0
    %951 = vmatpush1.msra.mxu0 0.0
    %952 = vmatprep.subr.mxu0 0.0
    %953 = vmatpush1.msra.mxu0 0.0
    %954 = vmatprep.subr.mxu0 0.0
    %955 = vmatpush1.msra.mxu0 0.0
    %956 = vmatprep.subr.mxu0 0.0
    %957 = vmatpush1.msra.mxu0 0.0
    %958 = vmatprep.subr.mxu0 0.0
    %959 = vmatpush1.msra.mxu0 0.0
    %960 = vmatprep.subr.mxu0 0.0
    %961 = vmatpush1.msra.mxu0 0.0
    %962 = vmatprep.subr.mxu0 0.0
    %963 = vmatpush1.msra.mxu0 0.0
    %964 = vmatprep.subr.mxu0 0.0
    %965 = vmatpush1.msra.mxu0 0.0
    %966 = vmatprep.subr.mxu0 0.0
    %967 = vmatpush1.msra.mxu0 0.0
    %968 = vmatprep.subr.mxu0 0.0
    %969 = vmatpush1.msra.mxu0 0.0
    %970 = vmatprep.subr.mxu0 0.0
    %971 = vmatpush1.msra.mxu0 0.0
    %972 = vmatprep.subr.mxu0 0.0
    %973 = vmatpush1.msra.mxu0 0.0
    %974 = vmatprep.subr.mxu0 0.0
    %975 = vmatpush1.msra.mxu0 0.0
    %976 = vmatprep.subr.mxu0 0.0
    %977 = vmatpush1.msra.mxu0 0.0
    %978 = vmatprep.subr.mxu0 0.0
    %979 = vmatpush1.msra.mxu0 0.0
    %980 = vmatprep.subr.mxu0 0.0
    %981 = vmatpush1.msra.mxu0 0.0
    %982 = vmatprep.mubr.f32.mxu0 0.0
    %983 = vmatmul.mubr.f32.gmra.mrb[0].mxu0 %v916
    %v984 = vpop.f32.mrb[0].mxu0
    %v985 = vadd.f32 0.0, %v984
    %v986 = vpop.f32.mrb[0].mxu0
    %987 = vdwg.mxu0
    %989 = vrot.lane.b32.xlu0 %v656, 64
    %v990 = vpop.permute.xlu0 %989
    %v993 = vsel %vm629, %v650, 0
    %995 = vmatprep.subr.mxu0 0.0
    %996 = vmatpush1.msra.mxu0 %v990
    %997 = vmatprep.subr.mxu0 0.0
    %998 = vmatpush1.msra.mxu0 0.0
    %999 = vmatprep.subr.mxu0 0.0
    %1000 = vmatpush1.msra.mxu0 0.0
    %1001 = vmatprep.subr.mxu0 0.0
    %1002 = vmatpush1.msra.mxu0 0.0
    %1003 = vmatprep.subr.mxu0 0.0
    %1004 = vmatpush1.msra.mxu0 0.0
    %1005 = vmatprep.subr.mxu0 0.0
    %1006 = vmatpush1.msra.mxu0 0.0
    %1007 = vmatprep.subr.mxu0 0.0
    %1008 = vmatpush1.msra.mxu0 0.0
    %1009 = vmatprep.subr.mxu0 0.0
    %1010 = vmatpush1.msra.mxu0 0.0
    %1011 = vmatprep.subr.mxu0 0.0
    %1012 = vmatpush1.msra.mxu0 0.0
    %1013 = vmatprep.subr.mxu0 0.0
    %1014 = vmatpush1.msra.mxu0 0.0
    %1015 = vmatprep.subr.mxu0 0.0
    %1016 = vmatpush1.msra.mxu0 0.0
    %1017 = vmatprep.subr.mxu0 0.0
    %1018 = vmatpush1.msra.mxu0 0.0
    %1019 = vmatprep.subr.mxu0 0.0
    %1020 = vmatpush1.msra.mxu0 0.0
    %1021 = vmatprep.subr.mxu0 0.0
    %1022 = vmatpush1.msra.mxu0 0.0
    %1023 = vmatprep.subr.mxu0 0.0
    %1024 = vmatpush1.msra.mxu0 0.0
    %1025 = vmatprep.subr.mxu0 0.0
    %1026 = vmatpush1.msra.mxu0 0.0
    %1027 = vmatprep.subr.mxu0 0.0
    %1028 = vmatpush1.msra.mxu0 0.0
    %1029 = vmatprep.subr.mxu0 0.0
    %1030 = vmatpush1.msra.mxu0 0.0
    %1031 = vmatprep.subr.mxu0 0.0
    %1032 = vmatpush1.msra.mxu0 0.0
    %1033 = vmatprep.subr.mxu0 0.0
    %1034 = vmatpush1.msra.mxu0 0.0
    %1035 = vmatprep.subr.mxu0 0.0
    %1036 = vmatpush1.msra.mxu0 0.0
    %1037 = vmatprep.subr.mxu0 0.0
    %1038 = vmatpush1.msra.mxu0 0.0
    %1039 = vmatprep.subr.mxu0 0.0
    %1040 = vmatpush1.msra.mxu0 0.0
    %1041 = vmatprep.subr.mxu0 0.0
    %1042 = vmatpush1.msra.mxu0 0.0
    %1043 = vmatprep.subr.mxu0 0.0
    %1044 = vmatpush1.msra.mxu0 0.0
    %1045 = vmatprep.subr.mxu0 0.0
    %1046 = vmatpush1.msra.mxu0 0.0
    %1047 = vmatprep.subr.mxu0 0.0
    %1048 = vmatpush1.msra.mxu0 0.0
    %1049 = vmatprep.subr.mxu0 0.0
    %1050 = vmatpush1.msra.mxu0 0.0
    %1051 = vmatprep.subr.mxu0 0.0
    %1052 = vmatpush1.msra.mxu0 0.0
    %1053 = vmatprep.subr.mxu0 0.0
    %1054 = vmatpush1.msra.mxu0 0.0
    %1055 = vmatprep.subr.mxu0 0.0
    %1056 = vmatpush1.msra.mxu0 0.0
    %1057 = vmatprep.subr.mxu0 0.0
    %1058 = vmatpush1.msra.mxu0 0.0
    %1059 = vmatprep.mubr.f32.mxu0 0.0
    %1060 = vmatmul.mubr.f32.gmra.mrb[0].mxu0 %v993
    %v1061 = vpop.f32.mrb[0].mxu0
    %v1062 = vadd.f32 %v908, %v1061
    %v1063 = vpop.f32.mrb[0].mxu0
    %1064 = vdwg.mxu0
    %1066 = vrot.lane.b32.xlu0 %v657, 64
    %v1067 = vpop.permute.xlu0 %1066
    %v1070 = vsel %vm629, %v651, 0
    %1072 = vmatprep.subr.mxu0 0.0
    %1073 = vmatpush1.msra.mxu0 %v1067
    %1074 = vmatprep.subr.mxu0 0.0
    %1075 = vmatpush1.msra.mxu0 0.0
    %1076 = vmatprep.subr.mxu0 0.0
    %1077 = vmatpush1.msra.mxu0 0.0
    %1078 = vmatprep.subr.mxu0 0.0
    %1079 = vmatpush1.msra.mxu0 0.0
    %1080 = vmatprep.subr.mxu0 0.0
    %1081 = vmatpush1.msra.mxu0 0.0
    %1082 = vmatprep.subr.mxu0 0.0
    %1083 = vmatpush1.msra.mxu0 0.0
    %1084 = vmatprep.subr.mxu0 0.0
    %1085 = vmatpush1.msra.mxu0 0.0
    %1086 = vmatprep.subr.mxu0 0.0
    %1087 = vmatpush1.msra.mxu0 0.0
    %1088 = vmatprep.subr.mxu0 0.0
    %1089 = vmatpush1.msra.mxu0 0.0
    %1090 = vmatprep.subr.mxu0 0.0
    %1091 = vmatpush1.msra.mxu0 0.0
    %1092 = vmatprep.subr.mxu0 0.0
    %1093 = vmatpush1.msra.mxu0 0.0
    %1094 = vmatprep.subr.mxu0 0.0
    %1095 = vmatpush1.msra.mxu0 0.0
    %1096 = vmatprep.subr.mxu0 0.0
    %1097 = vmatpush1.msra.mxu0 0.0
    %1098 = vmatprep.subr.mxu0 0.0
    %1099 = vmatpush1.msra.mxu0 0.0
    %1100 = vmatprep.subr.mxu0 0.0
    %1101 = vmatpush1.msra.mxu0 0.0
    %1102 = vmatprep.subr.mxu0 0.0
    %1103 = vmatpush1.msra.mxu0 0.0
    %1104 = vmatprep.subr.mxu0 0.0
    %1105 = vmatpush1.msra.mxu0 0.0
    %1106 = vmatprep.subr.mxu0 0.0
    %1107 = vmatpush1.msra.mxu0 0.0
    %1108 = vmatprep.subr.mxu0 0.0
    %1109 = vmatpush1.msra.mxu0 0.0
    %1110 = vmatprep.subr.mxu0 0.0
    %1111 = vmatpush1.msra.mxu0 0.0
    %1112 = vmatprep.subr.mxu0 0.0
    %1113 = vmatpush1.msra.mxu0 0.0
    %1114 = vmatprep.subr.mxu0 0.0
    %1115 = vmatpush1.msra.mxu0 0.0
    %1116 = vmatprep.subr.mxu0 0.0
    %1117 = vmatpush1.msra.mxu0 0.0
    %1118 = vmatprep.subr.mxu0 0.0
    %1119 = vmatpush1.msra.mxu0 0.0
    %1120 = vmatprep.subr.mxu0 0.0
    %1121 = vmatpush1.msra.mxu0 0.0
    %1122 = vmatprep.subr.mxu0 0.0
    %1123 = vmatpush1.msra.mxu0 0.0
    %1124 = vmatprep.subr.mxu0 0.0
    %1125 = vmatpush1.msra.mxu0 0.0
    %1126 = vmatprep.subr.mxu0 0.0
    %1127 = vmatpush1.msra.mxu0 0.0
    %1128 = vmatprep.subr.mxu0 0.0
    %1129 = vmatpush1.msra.mxu0 0.0
    %1130 = vmatprep.subr.mxu0 0.0
    %1131 = vmatpush1.msra.mxu0 0.0
    %1132 = vmatprep.subr.mxu0 0.0
    %1133 = vmatpush1.msra.mxu0 0.0
    %1134 = vmatprep.subr.mxu0 0.0
    %1135 = vmatpush1.msra.mxu0 0.0
    %1136 = vmatprep.mubr.f32.mxu0 0.0
    %1137 = vmatmul.mubr.f32.gmra.mrb[0].mxu0 %v1070
    %v1138 = vpop.f32.mrb[0].mxu0
    %v1139 = vadd.f32 %v985, %v1138
    %v1140 = vpop.f32.mrb[0].mxu0
    %1141 = vdwg.mxu0
    %v1142 = vmul.f32 %v459, %v385
    %v1143 = vmul.f32 %v460, %v385
    %v1145 = vsel %vm211, %v1142, 0
    %1147 = vmatprep.subr.mxu0 0.0
    %1148 = vmatpush1.xpose.msra.mxu0 %v479
    %1149 = vmatprep.subr.mxu0 0.0
    %1150 = vmatpush1.xpose.msra.mxu0 0.0
    %1151 = vmatprep.subr.mxu0 0.0
    %1152 = vmatpush1.xpose.msra.mxu0 0.0
    %1153 = vmatprep.subr.mxu0 0.0
    %1154 = vmatpush1.xpose.msra.mxu0 0.0
    %1155 = vmatprep.subr.mxu0 0.0
    %1156 = vmatpush1.xpose.msra.mxu0 0.0
    %1157 = vmatprep.subr.mxu0 0.0
    %1158 = vmatpush1.xpose.msra.mxu0 0.0
    %1159 = vmatprep.subr.mxu0 0.0
    %1160 = vmatpush1.xpose.msra.mxu0 0.0
    %1161 = vmatprep.subr.mxu0 0.0
    %1162 = vmatpush1.xpose.msra.mxu0 0.0
    %1163 = vmatprep.subr.mxu0 0.0
    %1164 = vmatpush1.xpose.msra.mxu0 0.0
    %1165 = vmatprep.subr.mxu0 0.0
    %1166 = vmatpush1.xpose.msra.mxu0 0.0
    %1167 = vmatprep.subr.mxu0 0.0
    %1168 = vmatpush1.xpose.msra.mxu0 0.0
    %1169 = vmatprep.subr.mxu0 0.0
    %1170 = vmatpush1.xpose.msra.mxu0 0.0
    %1171 = vmatprep.subr.mxu0 0.0
    %1172 = vmatpush1.xpose.msra.mxu0 0.0
    %1173 = vmatprep.subr.mxu0 0.0
    %1174 = vmatpush1.xpose.msra.mxu0 0.0
    %1175 = vmatprep.subr.mxu0 0.0
    %1176 = vmatpush1.xpose.msra.mxu0 0.0
    %1177 = vmatprep.subr.mxu0 0.0
    %1178 = vmatpush1.xpose.msra.mxu0 0.0
    %1179 = vmatprep.subr.mxu0 0.0
    %1180 = vmatpush1.xpose.msra.mxu0 0.0
    %1181 = vmatprep.subr.mxu0 0.0
    %1182 = vmatpush1.xpose.msra.mxu0 0.0
    %1183 = vmatprep.subr.mxu0 0.0
    %1184 = vmatpush1.xpose.msra.mxu0 0.0
    %1185 = vmatprep.subr.mxu0 0.0
    %1186 = vmatpush1.xpose.msra.mxu0 0.0
    %1187 = vmatprep.subr.mxu0 0.0
    %1188 = vmatpush1.xpose.msra.mxu0 0.0
    %1189 = vmatprep.subr.mxu0 0.0
    %1190 = vmatpush1.xpose.msra.mxu0 0.0
    %1191 = vmatprep.subr.mxu0 0.0
    %1192 = vmatpush1.xpose.msra.mxu0 0.0
    %1193 = vmatprep.subr.mxu0 0.0
    %1194 = vmatpush1.xpose.msra.mxu0 0.0
    %1195 = vmatprep.subr.mxu0 0.0
    %1196 = vmatpush1.xpose.msra.mxu0 0.0
    %1197 = vmatprep.subr.mxu0 0.0
    %1198 = vmatpush1.xpose.msra.mxu0 0.0
    %1199 = vmatprep.subr.mxu0 0.0
    %1200 = vmatpush1.xpose.msra.mxu0 0.0
    %1201 = vmatprep.subr.mxu0 0.0
    %1202 = vmatpush1.xpose.msra.mxu0 0.0
    %1203 = vmatprep.subr.mxu0 0.0
    %1204 = vmatpush1.xpose.msra.mxu0 0.0
    %1205 = vmatprep.subr.mxu0 0.0
    %1206 = vmatpush1.xpose.msra.mxu0 0.0
    %1207 = vmatprep.subr.mxu0 0.0
    %1208 = vmatpush1.xpose.msra.mxu0 0.0
    %1209 = vmatprep.subr.mxu0 0.0
    %1210 = vmatpush1.xpose.msra.mxu0 0.0
    %1211 = vmatprep.mubr.f32.mxu0 0.0
    %1212 = vmatmul.mubr.f32.gmra.mrb[0].mxu0 %v1145
    %v1213 = vpop.f32.mrb[0].mxu0
    %v1214 = vadd.f32 %v466, %v1213
    %v1215 = vpop.f32.mrb[0].mxu0
    %1216 = vdwg.mxu0
    %v1218 = vsel %vm211, %v1143, 0
    %1220 = vmatprep.subr.mxu0 0.0
    %1221 = vmatpush1.xpose.msra.mxu0 %v557
    %1222 = vmatprep.subr.mxu0 0.0
    %1223 = vmatpush1.xpose.msra.mxu0 0.0
    %1224 = vmatprep.subr.mxu0 0.0
    %1225 = vmatpush1.xpose.msra.mxu0 0.0
    %1226 = vmatprep.subr.mxu0 0.0
    %1227 = vmatpush1.xpose.msra.mxu0 0.0
    %1228 = vmatprep.subr.mxu0 0.0
    %1229 = vmatpush1.xpose.msra.mxu0 0.0
    %1230 = vmatprep.subr.mxu0 0.0
    %1231 = vmatpush1.xpose.msra.mxu0 0.0
    %1232 = vmatprep.subr.mxu0 0.0
    %1233 = vmatpush1.xpose.msra.mxu0 0.0
    %1234 = vmatprep.subr.mxu0 0.0
    %1235 = vmatpush1.xpose.msra.mxu0 0.0
    %1236 = vmatprep.subr.mxu0 0.0
    %1237 = vmatpush1.xpose.msra.mxu0 0.0
    %1238 = vmatprep.subr.mxu0 0.0
    %1239 = vmatpush1.xpose.msra.mxu0 0.0
    %1240 = vmatprep.subr.mxu0 0.0
    %1241 = vmatpush1.xpose.msra.mxu0 0.0
    %1242 = vmatprep.subr.mxu0 0.0
    %1243 = vmatpush1.xpose.msra.mxu0 0.0
    %1244 = vmatprep.subr.mxu0 0.0
    %1245 = vmatpush1.xpose.msra.mxu0 0.0
    %1246 = vmatprep.subr.mxu0 0.0
    %1247 = vmatpush1.xpose.msra.mxu0 0.0
    %1248 = vmatprep.subr.mxu0 0.0
    %1249 = vmatpush1.xpose.msra.mxu0 0.0
    %1250 = vmatprep.subr.mxu0 0.0
    %1251 = vmatpush1.xpose.msra.mxu0 0.0
    %1252 = vmatprep.subr.mxu0 0.0
    %1253 = vmatpush1.xpose.msra.mxu0 0.0
    %1254 = vmatprep.subr.mxu0 0.0
    %1255 = vmatpush1.xpose.msra.mxu0 0.0
    %1256 = vmatprep.subr.mxu0 0.0
    %1257 = vmatpush1.xpose.msra.mxu0 0.0
    %1258 = vmatprep.subr.mxu0 0.0
    %1259 = vmatpush1.xpose.msra.mxu0 0.0
    %1260 = vmatprep.subr.mxu0 0.0
    %1261 = vmatpush1.xpose.msra.mxu0 0.0
    %1262 = vmatprep.subr.mxu0 0.0
    %1263 = vmatpush1.xpose.msra.mxu0 0.0
    %1264 = vmatprep.subr.mxu0 0.0
    %1265 = vmatpush1.xpose.msra.mxu0 0.0
    %1266 = vmatprep.subr.mxu0 0.0
    %1267 = vmatpush1.xpose.msra.mxu0 0.0
    %1268 = vmatprep.subr.mxu0 0.0
    %1269 = vmatpush1.xpose.msra.mxu0 0.0
    %1270 = vmatprep.subr.mxu0 0.0
    %1271 = vmatpush1.xpose.msra.mxu0 0.0
    %1272 = vmatprep.subr.mxu0 0.0
    %1273 = vmatpush1.xpose.msra.mxu0 0.0
    %1274 = vmatprep.subr.mxu0 0.0
    %1275 = vmatpush1.xpose.msra.mxu0 0.0
    %1276 = vmatprep.subr.mxu0 0.0
    %1277 = vmatpush1.xpose.msra.mxu0 0.0
    %1278 = vmatprep.subr.mxu0 0.0
    %1279 = vmatpush1.xpose.msra.mxu0 0.0
    %1280 = vmatprep.subr.mxu0 0.0
    %1281 = vmatpush1.xpose.msra.mxu0 0.0
    %1282 = vmatprep.subr.mxu0 0.0
    %1283 = vmatpush1.xpose.msra.mxu0 0.0
    %1284 = vmatprep.mubr.f32.mxu0 0.0
    %1285 = vmatmul.mubr.f32.gmra.mrb[0].mxu0 %v1218
    %v1286 = vpop.f32.mrb[0].mxu0
    %v1287 = vadd.f32 %v470, %v1286
    %v1288 = vpop.f32.mrb[0].mxu0
    %1289 = vdwg.mxu0
    %v1290 = vsel %vm629, %v1214, -inf
    %1291 = vmax.xlane.f32.xlu0 %v1290
    %v1292 = vpop.xlane.xlu0 %1291
    %v1293 = vsel %vm629, %v1287, -inf
    %1294 = vmax.xlane.f32.xlu0 %v1293
    %v1295 = vpop.xlane.xlu0 %1294
    %v1296 = vsub.f32 %v1214, %v1292
    %v1297 = vsub.f32 %v1287, %v1295
    %v1298 = vmul.f32 %v1296, 1.442695
    %v1299 = vpow.pop %v1298
    %v1300 = vmul.f32 %v1297, 1.442695
    %v1301 = vpow.pop %v1300
    %v1302 = vsel %vm629, %v1299, 0.0
    %1303 = vadd.xlane.f32.xlu0 %v1302
    %v1304 = vpop.xlane.xlu0 %1303
    %v1305 = vsel %vm629, %v1301, 0.0
    %1306 = vadd.xlane.f32.xlu0 %v1305
    %v1307 = vpop.xlane.xlu0 %1306
    %v1308 = vrcp.pop %v1304
    %v1309 = vrcp.pop %v1307
    %v1310 = vmul.f32 %v1299, %v1308
    %v1311 = vmul.f32 %v1301, %v1309
    %1313 = vrot.lane.b32.xlu0 %v385, 64
    %v1314 = vpop.permute.xlu0 %1313
    %v1316 = vmul.f32 %v453, %v1314
    %v1317 = vmul.f32 %v456, %v1314
    %1319 = vrot.lane.b32.xlu0 %v1316, 64
    %v1320 = vpop.permute.xlu0 %1319
    %v1323 = vsel %vm629, %v1310, 0
    %1325 = vmatprep.subr.mxu0 0.0
    %1326 = vmatpush1.msra.mxu0 %v1320
    %1327 = vmatprep.subr.mxu0 0.0
    %1328 = vmatpush1.msra.mxu0 0.0
    %1329 = vmatprep.subr.mxu0 0.0
    %1330 = vmatpush1.msra.mxu0 0.0
    %1331 = vmatprep.subr.mxu0 0.0
    %1332 = vmatpush1.msra.mxu0 0.0
    %1333 = vmatprep.subr.mxu0 0.0
    %1334 = vmatpush1.msra.mxu0 0.0
    %1335 = vmatprep.subr.mxu0 0.0
    %1336 = vmatpush1.msra.mxu0 0.0
    %1337 = vmatprep.subr.mxu0 0.0
    %1338 = vmatpush1.msra.mxu0 0.0
    %1339 = vmatprep.subr.mxu0 0.0
    %1340 = vmatpush1.msra.mxu0 0.0
    %1341 = vmatprep.subr.mxu0 0.0
    %1342 = vmatpush1.msra.mxu0 0.0
    %1343 = vmatprep.subr.mxu0 0.0
    %1344 = vmatpush1.msra.mxu0 0.0
    %1345 = vmatprep.subr.mxu0 0.0
    %1346 = vmatpush1.msra.mxu0 0.0
    %1347 = vmatprep.subr.mxu0 0.0
    %1348 = vmatpush1.msra.mxu0 0.0
    %1349 = vmatprep.subr.mxu0 0.0
    %1350 = vmatpush1.msra.mxu0 0.0
    %1351 = vmatprep.subr.mxu0 0.0
    %1352 = vmatpush1.msra.mxu0 0.0
    %1353 = vmatprep.subr.mxu0 0.0
    %1354 = vmatpush1.msra.mxu0 0.0
    %1355 = vmatprep.subr.mxu0 0.0
    %1356 = vmatpush1.msra.mxu0 0.0
    %1357 = vmatprep.subr.mxu0 0.0
    %1358 = vmatpush1.msra.mxu0 0.0
    %1359 = vmatprep.subr.mxu0 0.0
    %1360 = vmatpush1.msra.mxu0 0.0
    %1361 = vmatprep.subr.mxu0 0.0
    %1362 = vmatpush1.msra.mxu0 0.0
    %1363 = vmatprep.subr.mxu0 0.0
    %1364 = vmatpush1.msra.mxu0 0.0
    %1365 = vmatprep.subr.mxu0 0.0
    %1366 = vmatpush1.msra.mxu0 0.0
    %1367 = vmatprep.subr.mxu0 0.0
    %1368 = vmatpush1.msra.mxu0 0.0
    %1369 = vmatprep.subr.mxu0 0.0
    %1370 = vmatpush1.msra.mxu0 0.0
    %1371 = vmatprep.subr.mxu0 0.0
    %1372 = vmatpush1.msra.mxu0 0.0
    %1373 = vmatprep.subr.mxu0 0.0
    %1374 = vmatpush1.msra.mxu0 0.0
    %1375 = vmatprep.subr.mxu0 0.0
    %1376 = vmatpush1.msra.mxu0 0.0
    %1377 = vmatprep.subr.mxu0 0.0
    %1378 = vmatpush1.msra.mxu0 0.0
    %1379 = vmatprep.subr.mxu0 0.0
    %1380 = vmatpush1.msra.mxu0 0.0
    %1381 = vmatprep.subr.mxu0 0.0
    %1382 = vmatpush1.msra.mxu0 0.0
    %1383 = vmatprep.subr.mxu0 0.0
    %1384 = vmatpush1.msra.mxu0 0.0
    %1385 = vmatprep.subr.mxu0 0.0
    %1386 = vmatpush1.msra.mxu0 0.0
    %1387 = vmatprep.subr.mxu0 0.0
    %1388 = vmatpush1.msra.mxu0 0.0
    %1389 = vmatprep.mubr.f32.mxu0 0.0
    %1390 = vmatmul.mubr.f32.gmra.mrb[0].mxu0 %v1323
    %v1391 = vpop.f32.mrb[0].mxu0
    %v1392 = vadd.f32 0.0, %v1391
    %v1393 = vpop.f32.mrb[0].mxu0
    %1394 = vdwg.mxu0
    %1396 = vrot.lane.b32.xlu0 %v1317, 64
    %v1397 = vpop.permute.xlu0 %1396
    %v1400 = vsel %vm629, %v1311, 0
    %1402 = vmatprep.subr.mxu0 0.0
    %1403 = vmatpush1.msra.mxu0 %v1397
    %1404 = vmatprep.subr.mxu0 0.0
    %1405 = vmatpush1.msra.mxu0 0.0
    %1406 = vmatprep.subr.mxu0 0.0
    %1407 = vmatpush1.msra.mxu0 0.0
    %1408 = vmatprep.subr.mxu0 0.0
    %1409 = vmatpush1.msra.mxu0 0.0
    %1410 = vmatprep.subr.mxu0 0.0
    %1411 = vmatpush1.msra.mxu0 0.0
    %1412 = vmatprep.subr.mxu0 0.0
    %1413 = vmatpush1.msra.mxu0 0.0
    %1414 = vmatprep.subr.mxu0 0.0
    %1415 = vmatpush1.msra.mxu0 0.0
    %1416 = vmatprep.subr.mxu0 0.0
    %1417 = vmatpush1.msra.mxu0 0.0
    %1418 = vmatprep.subr.mxu0 0.0
    %1419 = vmatpush1.msra.mxu0 0.0
    %1420 = vmatprep.subr.mxu0 0.0
    %1421 = vmatpush1.msra.mxu0 0.0
    %1422 = vmatprep.subr.mxu0 0.0
    %1423 = vmatpush1.msra.mxu0 0.0
    %1424 = vmatprep.subr.mxu0 0.0
    %1425 = vmatpush1.msra.mxu0 0.0
    %1426 = vmatprep.subr.mxu0 0.0
    %1427 = vmatpush1.msra.mxu0 0.0
    %1428 = vmatprep.subr.mxu0 0.0
    %1429 = vmatpush1.msra.mxu0 0.0
    %1430 = vmatprep.subr.mxu0 0.0
    %1431 = vmatpush1.msra.mxu0 0.0
    %1432 = vmatprep.subr.mxu0 0.0
    %1433 = vmatpush1.msra.mxu0 0.0
    %1434 = vmatprep.subr.mxu0 0.0
    %1435 = vmatpush1.msra.mxu0 0.0
    %1436 = vmatprep.subr.mxu0 0.0
    %1437 = vmatpush1.msra.mxu0 0.0
    %1438 = vmatprep.subr.mxu0 0.0
    %1439 = vmatpush1.msra.mxu0 0.0
    %1440 = vmatprep.subr.mxu0 0.0
    %1441 = vmatpush1.msra.mxu0 0.0
    %1442 = vmatprep.subr.mxu0 0.0
    %1443 = vmatpush1.msra.mxu0 0.0
    %1444 = vmatprep.subr.mxu0 0.0
    %1445 = vmatpush1.msra.mxu0 0.0
    %1446 = vmatprep.subr.mxu0 0.0
    %1447 = vmatpush1.msra.mxu0 0.0
    %1448 = vmatprep.subr.mxu0 0.0
    %1449 = vmatpush1.msra.mxu0 0.0
    %1450 = vmatprep.subr.mxu0 0.0
    %1451 = vmatpush1.msra.mxu0 0.0
    %1452 = vmatprep.subr.mxu0 0.0
    %1453 = vmatpush1.msra.mxu0 0.0
    %1454 = vmatprep.subr.mxu0 0.0
    %1455 = vmatpush1.msra.mxu0 0.0
    %1456 = vmatprep.subr.mxu0 0.0
    %1457 = vmatpush1.msra.mxu0 0.0
    %1458 = vmatprep.subr.mxu0 0.0
    %1459 = vmatpush1.msra.mxu0 0.0
    %1460 = vmatprep.subr.mxu0 0.0
    %1461 = vmatpush1.msra.mxu0 0.0
    %1462 = vmatprep.subr.mxu0 0.0
    %1463 = vmatpush1.msra.mxu0 0.0
    %1464 = vmatprep.subr.mxu0 0.0
    %1465 = vmatpush1.msra.mxu0 0.0
    %1466 = vmatprep.mubr.f32.mxu0 0.0
    %1467 = vmatmul.mubr.f32.gmra.mrb[0].mxu0 %v1400
    %v1468 = vpop.f32.mrb[0].mxu0
    %v1469 = vadd.f32 0.0, %v1468
    %v1470 = vpop.f32.mrb[0].mxu0
    %1471 = vdwg.mxu0
    %v1472 = vadd.f32 %v1062, %v1392
    %v1473 = vadd.f32 %v1139, %v1469
    %v1474 = vmul.f32 %v459, %v390
    %v1475 = vmul.f32 %v460, %v390
    %v1477 = vsel %vm211, %v1474, 0
    %1479 = vmatprep.subr.mxu0 0.0
    %1480 = vmatpush1.xpose.msra.mxu0 %v479
    %1481 = vmatprep.subr.mxu0 0.0
    %1482 = vmatpush1.xpose.msra.mxu0 0.0
    %1483 = vmatprep.subr.mxu0 0.0
    %1484 = vmatpush1.xpose.msra.mxu0 0.0
    %1485 = vmatprep.subr.mxu0 0.0
    %1486 = vmatpush1.xpose.msra.mxu0 0.0
    %1487 = vmatprep.subr.mxu0 0.0
    %1488 = vmatpush1.xpose.msra.mxu0 0.0
    %1489 = vmatprep.subr.mxu0 0.0
    %1490 = vmatpush1.xpose.msra.mxu0 0.0
    %1491 = vmatprep.subr.mxu0 0.0
    %1492 = vmatpush1.xpose.msra.mxu0 0.0
    %1493 = vmatprep.subr.mxu0 0.0
    %1494 = vmatpush1.xpose.msra.mxu0 0.0
    %1495 = vmatprep.subr.mxu0 0.0
    %1496 = vmatpush1.xpose.msra.mxu0 0.0
    %1497 = vmatprep.subr.mxu0 0.0
    %1498 = vmatpush1.xpose.msra.mxu0 0.0
    %1499 = vmatprep.subr.mxu0 0.0
    %1500 = vmatpush1.xpose.msra.mxu0 0.0
    %1501 = vmatprep.subr.mxu0 0.0
    %1502 = vmatpush1.xpose.msra.mxu0 0.0
    %1503 = vmatprep.subr.mxu0 0.0
    %1504 = vmatpush1.xpose.msra.mxu0 0.0
    %1505 = vmatprep.subr.mxu0 0.0
    %1506 = vmatpush1.xpose.msra.mxu0 0.0
    %1507 = vmatprep.subr.mxu0 0.0
    %1508 = vmatpush1.xpose.msra.mxu0 0.0
    %1509 = vmatprep.subr.mxu0 0.0
    %1510 = vmatpush1.xpose.msra.mxu0 0.0
    %1511 = vmatprep.subr.mxu0 0.0
    %1512 = vmatpush1.xpose.msra.mxu0 0.0
    %1513 = vmatprep.subr.mxu0 0.0
    %1514 = vmatpush1.xpose.msra.mxu0 0.0
    %1515 = vmatprep.subr.mxu0 0.0
    %1516 = vmatpush1.xpose.msra.mxu0 0.0
    %1517 = vmatprep.subr.mxu0 0.0
    %1518 = vmatpush1.xpose.msra.mxu0 0.0
    %1519 = vmatprep.subr.mxu0 0.0
    %1520 = vmatpush1.xpose.msra.mxu0 0.0
    %1521 = vmatprep.subr.mxu0 0.0
    %1522 = vmatpush1.xpose.msra.mxu0 0.0
    %1523 = vmatprep.subr.mxu0 0.0
    %1524 = vmatpush1.xpose.msra.mxu0 0.0
    %1525 = vmatprep.subr.mxu0 0.0
    %1526 = vmatpush1.xpose.msra.mxu0 0.0
    %1527 = vmatprep.subr.mxu0 0.0
    %1528 = vmatpush1.xpose.msra.mxu0 0.0
    %1529 = vmatprep.subr.mxu0 0.0
    %1530 = vmatpush1.xpose.msra.mxu0 0.0
    %1531 = vmatprep.subr.mxu0 0.0
    %1532 = vmatpush1.xpose.msra.mxu0 0.0
    %1533 = vmatprep.subr.mxu0 0.0
    %1534 = vmatpush1.xpose.msra.mxu0 0.0
    %1535 = vmatprep.subr.mxu0 0.0
    %1536 = vmatpush1.xpose.msra.mxu0 0.0
    %1537 = vmatprep.subr.mxu0 0.0
    %1538 = vmatpush1.xpose.msra.mxu0 0.0
    %1539 = vmatprep.subr.mxu0 0.0
    %1540 = vmatpush1.xpose.msra.mxu0 0.0
    %1541 = vmatprep.subr.mxu0 0.0
    %1542 = vmatpush1.xpose.msra.mxu0 0.0
    %1543 = vmatprep.mubr.f32.mxu0 0.0
    %1544 = vmatmul.mubr.f32.gmra.mrb[0].mxu0 %v1477
    %v1545 = vpop.f32.mrb[0].mxu0
    %v1546 = vadd.f32 %v466, %v1545
    %v1547 = vpop.f32.mrb[0].mxu0
    %1548 = vdwg.mxu0
    %v1550 = vsel %vm211, %v1475, 0
    %1552 = vmatprep.subr.mxu0 0.0
    %1553 = vmatpush1.xpose.msra.mxu0 %v557
    %1554 = vmatprep.subr.mxu0 0.0
    %1555 = vmatpush1.xpose.msra.mxu0 0.0
    %1556 = vmatprep.subr.mxu0 0.0
    %1557 = vmatpush1.xpose.msra.mxu0 0.0
    %1558 = vmatprep.subr.mxu0 0.0
    %1559 = vmatpush1.xpose.msra.mxu0 0.0
    %1560 = vmatprep.subr.mxu0 0.0
    %1561 = vmatpush1.xpose.msra.mxu0 0.0
    %1562 = vmatprep.subr.mxu0 0.0
    %1563 = vmatpush1.xpose.msra.mxu0 0.0
    %1564 = vmatprep.subr.mxu0 0.0
    %1565 = vmatpush1.xpose.msra.mxu0 0.0
    %1566 = vmatprep.subr.mxu0 0.0
    %1567 = vmatpush1.xpose.msra.mxu0 0.0
    %1568 = vmatprep.subr.mxu0 0.0
    %1569 = vmatpush1.xpose.msra.mxu0 0.0
    %1570 = vmatprep.subr.mxu0 0.0
    %1571 = vmatpush1.xpose.msra.mxu0 0.0
    %1572 = vmatprep.subr.mxu0 0.0
    %1573 = vmatpush1.xpose.msra.mxu0 0.0
    %1574 = vmatprep.subr.mxu0 0.0
    %1575 = vmatpush1.xpose.msra.mxu0 0.0
    %1576 = vmatprep.subr.mxu0 0.0
    %1577 = vmatpush1.xpose.msra.mxu0 0.0
    %1578 = vmatprep.subr.mxu0 0.0
    %1579 = vmatpush1.xpose.msra.mxu0 0.0
    %1580 = vmatprep.subr.mxu0 0.0
    %1581 = vmatpush1.xpose.msra.mxu0 0.0
    %1582 = vmatprep.subr.mxu0 0.0
    %1583 = vmatpush1.xpose.msra.mxu0 0.0
    %1584 = vmatprep.subr.mxu0 0.0
    %1585 = vmatpush1.xpose.msra.mxu0 0.0
    %1586 = vmatprep.subr.mxu0 0.0
    %1587 = vmatpush1.xpose.msra.mxu0 0.0
    %1588 = vmatprep.subr.mxu0 0.0
    %1589 = vmatpush1.xpose.msra.mxu0 0.0
    %1590 = vmatprep.subr.mxu0 0.0
    %1591 = vmatpush1.xpose.msra.mxu0 0.0
    %1592 = vmatprep.subr.mxu0 0.0
    %1593 = vmatpush1.xpose.msra.mxu0 0.0
    %1594 = vmatprep.subr.mxu0 0.0
    %1595 = vmatpush1.xpose.msra.mxu0 0.0
    %1596 = vmatprep.subr.mxu0 0.0
    %1597 = vmatpush1.xpose.msra.mxu0 0.0
    %1598 = vmatprep.subr.mxu0 0.0
    %1599 = vmatpush1.xpose.msra.mxu0 0.0
    %1600 = vmatprep.subr.mxu0 0.0
    %1601 = vmatpush1.xpose.msra.mxu0 0.0
    %1602 = vmatprep.subr.mxu0 0.0
    %1603 = vmatpush1.xpose.msra.mxu0 0.0
    %1604 = vmatprep.subr.mxu0 0.0
    %1605 = vmatpush1.xpose.msra.mxu0 0.0
    %1606 = vmatprep.subr.mxu0 0.0
    %1607 = vmatpush1.xpose.msra.mxu0 0.0
    %1608 = vmatprep.subr.mxu0 0.0
    %1609 = vmatpush1.xpose.msra.mxu0 0.0
    %1610 = vmatprep.subr.mxu0 0.0
    %1611 = vmatpush1.xpose.msra.mxu0 0.0
    %1612 = vmatprep.subr.mxu0 0.0
    %1613 = vmatpush1.xpose.msra.mxu0 0.0
    %1614 = vmatprep.subr.mxu0 0.0
    %1615 = vmatpush1.xpose.msra.mxu0 0.0
    %1616 = vmatprep.mubr.f32.mxu0 0.0
    %1617 = vmatmul.mubr.f32.gmra.mrb[0].mxu0 %v1550
    %v1618 = vpop.f32.mrb[0].mxu0
    %v1619 = vadd.f32 %v470, %v1618
    %v1620 = vpop.f32.mrb[0].mxu0
    %1621 = vdwg.mxu0
    %v1622 = vsel %vm629, %v1546, -inf
    %1623 = vmax.xlane.f32.xlu0 %v1622
    %v1624 = vpop.xlane.xlu0 %1623
    %v1625 = vsel %vm629, %v1619, -inf
    %1626 = vmax.xlane.f32.xlu0 %v1625
    %v1627 = vpop.xlane.xlu0 %1626
    %v1628 = vsub.f32 %v1546, %v1624
    %v1629 = vsub.f32 %v1619, %v1627
    %v1630 = vmul.f32 %v1628, 1.442695
    %v1631 = vpow.pop %v1630
    %v1632 = vmul.f32 %v1629, 1.442695
    %v1633 = vpow.pop %v1632
    %v1634 = vsel %vm629, %v1631, 0.0
    %1635 = vadd.xlane.f32.xlu0 %v1634
    %v1636 = vpop.xlane.xlu0 %1635
    %v1637 = vsel %vm629, %v1633, 0.0
    %1638 = vadd.xlane.f32.xlu0 %v1637
    %v1639 = vpop.xlane.xlu0 %1638
    %v1640 = vrcp.pop %v1636
    %v1641 = vrcp.pop %v1639
    %v1642 = vmul.f32 %v1631, %v1640
    %v1643 = vmul.f32 %v1633, %v1641
    %1645 = vrot.lane.b32.xlu0 %v390, 64
    %v1646 = vpop.permute.xlu0 %1645
    %v1648 = vmul.f32 %v453, %v1646
    %v1649 = vmul.f32 %v456, %v1646
    %1651 = vrot.lane.b32.xlu0 %v1648, 64
    %v1652 = vpop.permute.xlu0 %1651
    %v1655 = vsel %vm629, %v1642, 0
    %1657 = vmatprep.subr.mxu0 0.0
    %1658 = vmatpush1.msra.mxu0 %v1652
    %1659 = vmatprep.subr.mxu0 0.0
    %1660 = vmatpush1.msra.mxu0 0.0
    %1661 = vmatprep.subr.mxu0 0.0
    %1662 = vmatpush1.msra.mxu0 0.0
    %1663 = vmatprep.subr.mxu0 0.0
    %1664 = vmatpush1.msra.mxu0 0.0
    %1665 = vmatprep.subr.mxu0 0.0
    %1666 = vmatpush1.msra.mxu0 0.0
    %1667 = vmatprep.subr.mxu0 0.0
    %1668 = vmatpush1.msra.mxu0 0.0
    %1669 = vmatprep.subr.mxu0 0.0
    %1670 = vmatpush1.msra.mxu0 0.0
    %1671 = vmatprep.subr.mxu0 0.0
    %1672 = vmatpush1.msra.mxu0 0.0
    %1673 = vmatprep.subr.mxu0 0.0
    %1674 = vmatpush1.msra.mxu0 0.0
    %1675 = vmatprep.subr.mxu0 0.0
    %1676 = vmatpush1.msra.mxu0 0.0
    %1677 = vmatprep.subr.mxu0 0.0
    %1678 = vmatpush1.msra.mxu0 0.0
    %1679 = vmatprep.subr.mxu0 0.0
    %1680 = vmatpush1.msra.mxu0 0.0
    %1681 = vmatprep.subr.mxu0 0.0
    %1682 = vmatpush1.msra.mxu0 0.0
    %1683 = vmatprep.subr.mxu0 0.0
    %1684 = vmatpush1.msra.mxu0 0.0
    %1685 = vmatprep.subr.mxu0 0.0
    %1686 = vmatpush1.msra.mxu0 0.0
    %1687 = vmatprep.subr.mxu0 0.0
    %1688 = vmatpush1.msra.mxu0 0.0
    %1689 = vmatprep.subr.mxu0 0.0
    %1690 = vmatpush1.msra.mxu0 0.0
    %1691 = vmatprep.subr.mxu0 0.0
    %1692 = vmatpush1.msra.mxu0 0.0
    %1693 = vmatprep.subr.mxu0 0.0
    %1694 = vmatpush1.msra.mxu0 0.0
    %1695 = vmatprep.subr.mxu0 0.0
    %1696 = vmatpush1.msra.mxu0 0.0
    %1697 = vmatprep.subr.mxu0 0.0
    %1698 = vmatpush1.msra.mxu0 0.0
    %1699 = vmatprep.subr.mxu0 0.0
    %1700 = vmatpush1.msra.mxu0 0.0
    %1701 = vmatprep.subr.mxu0 0.0
    %1702 = vmatpush1.msra.mxu0 0.0
    %1703 = vmatprep.subr.mxu0 0.0
    %1704 = vmatpush1.msra.mxu0 0.0
    %1705 = vmatprep.subr.mxu0 0.0
    %1706 = vmatpush1.msra.mxu0 0.0
    %1707 = vmatprep.subr.mxu0 0.0
    %1708 = vmatpush1.msra.mxu0 0.0
    %1709 = vmatprep.subr.mxu0 0.0
    %1710 = vmatpush1.msra.mxu0 0.0
    %1711 = vmatprep.subr.mxu0 0.0
    %1712 = vmatpush1.msra.mxu0 0.0
    %1713 = vmatprep.subr.mxu0 0.0
    %1714 = vmatpush1.msra.mxu0 0.0
    %1715 = vmatprep.subr.mxu0 0.0
    %1716 = vmatpush1.msra.mxu0 0.0
    %1717 = vmatprep.subr.mxu0 0.0
    %1718 = vmatpush1.msra.mxu0 0.0
    %1719 = vmatprep.subr.mxu0 0.0
    %1720 = vmatpush1.msra.mxu0 0.0
    %1721 = vmatprep.mubr.f32.mxu0 0.0
    %1722 = vmatmul.mubr.f32.gmra.mrb[0].mxu0 %v1655
    %v1723 = vpop.f32.mrb[0].mxu0
    %v1724 = vadd.f32 0.0, %v1723
    %v1725 = vpop.f32.mrb[0].mxu0
    %1726 = vdwg.mxu0
    %1728 = vrot.lane.b32.xlu0 %v1649, 64
    %v1729 = vpop.permute.xlu0 %1728
    %v1732 = vsel %vm629, %v1643, 0
    %1734 = vmatprep.subr.mxu0 0.0
    %1735 = vmatpush1.msra.mxu0 %v1729
    %1736 = vmatprep.subr.mxu0 0.0
    %1737 = vmatpush1.msra.mxu0 0.0
    %1738 = vmatprep.subr.mxu0 0.0
    %1739 = vmatpush1.msra.mxu0 0.0
    %1740 = vmatprep.subr.mxu0 0.0
    %1741 = vmatpush1.msra.mxu0 0.0
    %1742 = vmatprep.subr.mxu0 0.0
    %1743 = vmatpush1.msra.mxu0 0.0
    %1744 = vmatprep.subr.mxu0 0.0
    %1745 = vmatpush1.msra.mxu0 0.0
    %1746 = vmatprep.subr.mxu0 0.0
    %1747 = vmatpush1.msra.mxu0 0.0
    %1748 = vmatprep.subr.mxu0 0.0
    %1749 = vmatpush1.msra.mxu0 0.0
    %1750 = vmatprep.subr.mxu0 0.0
    %1751 = vmatpush1.msra.mxu0 0.0
    %1752 = vmatprep.subr.mxu0 0.0
    %1753 = vmatpush1.msra.mxu0 0.0
    %1754 = vmatprep.subr.mxu0 0.0
    %1755 = vmatpush1.msra.mxu0 0.0
    %1756 = vmatprep.subr.mxu0 0.0
    %1757 = vmatpush1.msra.mxu0 0.0
    %1758 = vmatprep.subr.mxu0 0.0
    %1759 = vmatpush1.msra.mxu0 0.0
    %1760 = vmatprep.subr.mxu0 0.0
    %1761 = vmatpush1.msra.mxu0 0.0
    %1762 = vmatprep.subr.mxu0 0.0
    %1763 = vmatpush1.msra.mxu0 0.0
    %1764 = vmatprep.subr.mxu0 0.0
    %1765 = vmatpush1.msra.mxu0 0.0
    %1766 = vmatprep.subr.mxu0 0.0
    %1767 = vmatpush1.msra.mxu0 0.0
    %1768 = vmatprep.subr.mxu0 0.0
    %1769 = vmatpush1.msra.mxu0 0.0
    %1770 = vmatprep.subr.mxu0 0.0
    %1771 = vmatpush1.msra.mxu0 0.0
    %1772 = vmatprep.subr.mxu0 0.0
    %1773 = vmatpush1.msra.mxu0 0.0
    %1774 = vmatprep.subr.mxu0 0.0
    %1775 = vmatpush1.msra.mxu0 0.0
    %1776 = vmatprep.subr.mxu0 0.0
    %1777 = vmatpush1.msra.mxu0 0.0
    %1778 = vmatprep.subr.mxu0 0.0
    %1779 = vmatpush1.msra.mxu0 0.0
    %1780 = vmatprep.subr.mxu0 0.0
    %1781 = vmatpush1.msra.mxu0 0.0
    %1782 = vmatprep.subr.mxu0 0.0
    %1783 = vmatpush1.msra.mxu0 0.0
    %1784 = vmatprep.subr.mxu0 0.0
    %1785 = vmatpush1.msra.mxu0 0.0
    %1786 = vmatprep.subr.mxu0 0.0
    %1787 = vmatpush1.msra.mxu0 0.0
    %1788 = vmatprep.subr.mxu0 0.0
    %1789 = vmatpush1.msra.mxu0 0.0
    %1790 = vmatprep.subr.mxu0 0.0
    %1791 = vmatpush1.msra.mxu0 0.0
    %1792 = vmatprep.subr.mxu0 0.0
    %1793 = vmatpush1.msra.mxu0 0.0
    %1794 = vmatprep.subr.mxu0 0.0
    %1795 = vmatpush1.msra.mxu0 0.0
    %1796 = vmatprep.subr.mxu0 0.0
    %1797 = vmatpush1.msra.mxu0 0.0
    %1798 = vmatprep.mubr.f32.mxu0 0.0
    %1799 = vmatmul.mubr.f32.gmra.mrb[0].mxu0 %v1732
    %v1800 = vpop.f32.mrb[0].mxu0
    %v1801 = vadd.f32 0.0, %v1800
    %v1802 = vpop.f32.mrb[0].mxu0
    %1803 = vdwg.mxu0
    %v1804 = vadd.f32 %v1472, %v1724
    %v1805 = vadd.f32 %v1473, %v1801
    %v1806 = vld [vmem:[%s9] sm:$0xf]
    %v1807 = vld [vmem:[%s9 + $0x4] sm:$0xf]
    %v1808 = vld [vmem:[%s9 + $0x8] sm:$0xf]
    %v1809 = vld [vmem:[%s9 + $0xc] sm:$0xf]
    %v1810 = vpack.c.bf16 %v1805, %v1804
    %v1811 = vld [vmem:[#allocation13] sm:$0x1]
    %v1813 = vlaneseq
    %v1814 = vshrl.u32 %v1813, 7
    %v1815 = vsub.s32 0, %v1814
    %v1816 = vrot.slane %v1811, %v1815
    %v1822 = vunpack.c.l.b16 %v1806
    %v1823 = vunpack.c.l.b16 %v1807
    %v1824 = vunpack.c.l.b16 %v1808
    %v1825 = vunpack.c.l.b16 %v1809
    %v1826 = vpack.c.b16 %v1823, %v1822
    %v1827 = vpack.c.b16 %v1825, %v1824
    %v1831 = vsel %vm211, %v1810, 0
    %1833 = vmatprep.subr.bf16.mxu0 0
    %1834 = vmatpush1.bf16.msra.mxu0 %v1826
    %1835 = vmatprep.subr.bf16.mxu0 0
    %1836 = vmatpush1.bf16.msra.mxu0 %v1827
    %1837 = vmatprep.subr.bf16.mxu0 0
    %1838 = vmatpush1.bf16.msra.mxu0 0
    %1839 = vmatprep.subr.bf16.mxu0 0
    %1840 = vmatpush1.bf16.msra.mxu0 0
    %1841 = vmatprep.subr.bf16.mxu0 0
    %1842 = vmatpush1.bf16.msra.mxu0 0
    %1843 = vmatprep.subr.bf16.mxu0 0
    %1844 = vmatpush1.bf16.msra.mxu0 0
    %1845 = vmatprep.subr.bf16.mxu0 0
    %1846 = vmatpush1.bf16.msra.mxu0 0
    %1847 = vmatprep.subr.bf16.mxu0 0
    %1848 = vmatpush1.bf16.msra.mxu0 0
    %1849 = vmatprep.subr.bf16.mxu0 0
    %1850 = vmatpush1.bf16.msra.mxu0 0
    %1851 = vmatprep.subr.bf16.mxu0 0
    %1852 = vmatpush1.bf16.msra.mxu0 0
    %1853 = vmatprep.subr.bf16.mxu0 0
    %1854 = vmatpush1.bf16.msra.mxu0 0
    %1855 = vmatprep.subr.bf16.mxu0 0
    %1856 = vmatpush1.bf16.msra.mxu0 0
    %1857 = vmatprep.subr.bf16.mxu0 0
    %1858 = vmatpush1.bf16.msra.mxu0 0
    %1859 = vmatprep.subr.bf16.mxu0 0
    %1860 = vmatpush1.bf16.msra.mxu0 0
    %1861 = vmatprep.subr.bf16.mxu0 0
    %1862 = vmatpush1.bf16.msra.mxu0 0
    %1863 = vmatprep.subr.bf16.mxu0 0
    %1864 = vmatpush1.bf16.msra.mxu0 0
    %1865 = vmatprep.mubr.bf16.mxu0 0
    %1866 = vmatmul.mubr.bf16.gmra.mrb[0].mxu0 %v1831
    %v1867 = vpop.f32.mrb[0].mxu0
    %v1868 = vadd.f32 %v1816, %v1867
    %v1869 = vpop.f32.mrb[0].mxu0
    %v1870 = vpop.f32.mrb[0].mxu0
    %v1871 = vadd.f32 %v1816, %v1870
    %v1872 = vpop.f32.mrb[0].mxu0
    %1873 = vdwg.mxu0
    %v1874 = vadd.f32 %v1868, %v343
    %v1875 = vadd.f32 %v1871, %v344
    %v1876 = vld [vmem:[#allocation14] sm:$0x1]
    %v1877 = vld [vmem:[#allocation16] sm:$0x1]
    %v1878 = vsel %vm211, %v1874, 0.0
    %1879 = vadd.xlane.f32.xlu0 %v1878
    %v1880 = vpop.xlane.xlu0 %1879
    %v1881 = vsel %vm211, %v1875, 0.0
    %1882 = vadd.xlane.f32.xlu0 %v1881
    %v1883 = vpop.xlane.xlu0 %1882
    %v1884 = vmul.f32 %v1880, %v308
    %v1885 = vmul.f32 %v1883, %v308
    %v1886 = vsub.f32 %v1874, %v1884
    %v1887 = vsub.f32 %v1875, %v1885
    %v1888 = vmul.f32 %v1886, %v1886
    %v1889 = vmul.f32 %v1887, %v1887
    %v1890 = vsel %vm211, %v1888, 0.0
    %1891 = vadd.xlane.f32.xlu0 %v1890
    %v1892 = vpop.xlane.xlu0 %1891
    %v1893 = vsel %vm211, %v1889, 0.0
    %1894 = vadd.xlane.f32.xlu0 %v1893
    %v1895 = vpop.xlane.xlu0 %1894
    %v1896 = vmul.f32 %v1892, %v308
    %v1897 = vmul.f32 %v1895, %v308
    %v1898 = vadd.f32 %v1896, 1e-12
    %v1899 = vadd.f32 %v1897, 1e-12
    %v1900 = vrsqrt.pop %v1898
    %v1901 = vrsqrt.pop %v1899
    %v1902 = vmul.f32 %v1886, %v1900
    %v1903 = vmul.f32 %v1887, %v1901
    %v1905 = vlaneseq
    %v1906 = vshrl.u32 %v1905, 7
    %v1907 = vsub.s32 0, %v1906
    %v1908 = vrot.slane %v1876, %v1907
    %v1910 = vmul.f32 %v1902, %v1908
    %v1911 = vmul.f32 %v1903, %v1908
    %v1913 = vlaneseq
    %v1914 = vshrl.u32 %v1913, 7
    %v1915 = vsub.s32 0, %v1914
    %v1916 = vrot.slane %v1877, %v1915
    %v1918 = vadd.f32 %v1910, %v1916
    %v1919 = vadd.f32 %v1911, %v1916
    %v1920 = vld [vmem:[%s13] sm:$0xf]
    %v1921 = vld [vmem:[%s13 + $0x4] sm:$0xf]
    %v1922 = vld [vmem:[%s13 + $0x8] sm:$0xf]
    %v1923 = vld [vmem:[%s13 + $0xc] sm:$0xf]
    %v1924 = vpack.c.bf16 %v1919, %v1918
    %v1925 = vld [vmem:[%s14] sm:$0x1]
    %v1927 = vlaneseq
    %v1928 = vshrl.u32 %v1927, 7
    %v1929 = vsub.s32 0, %v1928
    %v1930 = vrot.slane %v1925, %v1929
    %v1936 = vunpack.c.l.b16 %v1920
    %v1937 = vunpack.c.l.b16 %v1921
    %v1938 = vunpack.c.l.b16 %v1922
    %v1939 = vunpack.c.l.b16 %v1923
    %v1940 = vpack.c.b16 %v1937, %v1936
    %v1941 = vpack.c.b16 %v1939, %v1938
    %v1945 = vsel %vm211, %v1924, 0
    %1947 = vmatprep.subr.bf16.mxu0 0
    %1948 = vmatpush1.bf16.msra.mxu0 %v1940
    %1949 = vmatprep.subr.bf16.mxu0 0
    %1950 = vmatpush1.bf16.msra.mxu0 %v1941
    %1951 = vmatprep.subr.bf16.mxu0 0
    %1952 = vmatpush1.bf16.msra.mxu0 0
    %1953 = vmatprep.subr.bf16.mxu0 0
    %1954 = vmatpush1.bf16.msra.mxu0 0
    %1955 = vmatprep.subr.bf16.mxu0 0
    %1956 = vmatpush1.bf16.msra.mxu0 0
    %1957 = vmatprep.subr.bf16.mxu0 0
    %1958 = vmatpush1.bf16.msra.mxu0 0
    %1959 = vmatprep.subr.bf16.mxu0 0
    %1960 = vmatpush1.bf16.msra.mxu0 0
    %1961 = vmatprep.subr.bf16.mxu0 0
    %1962 = vmatpush1.bf16.msra.mxu0 0
    %1963 = vmatprep.subr.bf16.mxu0 0
    %1964 = vmatpush1.bf16.msra.mxu0 0
    %1965 = vmatprep.subr.bf16.mxu0 0
    %1966 = vmatpush1.bf16.msra.mxu0 0
    %1967 = vmatprep.subr.bf16.mxu0 0
    %1968 = vmatpush1.bf16.msra.mxu0 0
    %1969 = vmatprep.subr.bf16.mxu0 0
    %1970 = vmatpush1.bf16.msra.mxu0 0
    %1971 = vmatprep.subr.bf16.mxu0 0
    %1972 = vmatpush1.bf16.msra.mxu0 0
    %1973 = vmatprep.subr.bf16.mxu0 0
    %1974 = vmatpush1.bf16.msra.mxu0 0
    %1975 = vmatprep.subr.bf16.mxu0 0
    %1976 = vmatpush1.bf16.msra.mxu0 0
    %1977 = vmatprep.subr.bf16.mxu0 0
    %1978 = vmatpush1.bf16.msra.mxu0 0
    %1979 = vmatprep.mubr.bf16.mxu0 0
    %1980 = vmatmul.mubr.bf16.gmra.mrb[0].mxu0 %v1945
    %v1981 = vpop.f32.mrb[0].mxu0
    %v1982 = vadd.f32 %v1930, %v1981
    %v1983 = vpop.f32.mrb[0].mxu0
    %v1984 = vpop.f32.mrb[0].mxu0
    %v1985 = vadd.f32 %v1930, %v1984
    %v1986 = vpop.f32.mrb[0].mxu0
    %1987 = vdwg.mxu0
    %v1988 = vmul.f32 %v1982, %v1982
    %v1989 = vmul.f32 %v1985, %v1985
    %v1990 = vmul.f32 %v1982, %v1988
    %v1991 = vmul.f32 %v1985, %v1989
    %v1992 = vmul.f32 %v1990, 0.044715
    %v1993 = vmul.f32 %v1991, 0.044715
    %v1994 = vadd.f32 %v1982, %v1992
    %v1995 = vadd.f32 %v1985, %v1993
    %v1996 = vmul.f32 %v1994, 0.7978846
    %v1997 = vmul.f32 %v1995, 0.7978846
    %v1998 = vtanh.pop %v1996
    %v1999 = vtanh.pop %v1997
    %v2000 = vadd.f32 %v1998, 1.0
    %v2001 = vadd.f32 %v1999, 1.0
    %v2002 = vmul.f32 %v2000, 0.5
    %v2003 = vmul.f32 %v2001, 0.5
    %v2004 = vmul.f32 %v1982, %v2002
    %v2005 = vmul.f32 %v1985, %v2003
    %v2006 = vld [vmem:[%s15] sm:$0xf]
    %v2007 = vld [vmem:[%s15 + $0x4] sm:$0xf]
    %v2008 = vld [vmem:[%s15 + $0x8] sm:$0xf]
    %v2009 = vld [vmem:[%s15 + $0xc] sm:$0xf]
    %v2010 = vld [vmem:[%s15 + $0x10] sm:$0xf]
    %v2011 = vld [vmem:[%s15 + $0x14] sm:$0xf]
    %v2012 = vld [vmem:[%s15 + $0x18] sm:$0xf]
    %v2013 = vld [vmem:[%s15 + $0x1c] sm:$0xf]
    %v2014 = vpack.c.bf16 %v2005, %v2004
    %v2015 = vld [vmem:[%s16] sm:$0x1]
    %v2017 = vlaneseq
    %v2018 = vshrl.u32 %v2017, 7
    %v2019 = vsub.s32 0, %v2018
    %v2020 = vrot.slane %v2015, %v2019
    %v2030 = vunpack.c.l.b16 %v2006
    %v2031 = vunpack.c.l.b16 %v2007
    %v2032 = vunpack.c.l.b16 %v2008
    %v2033 = vunpack.c.l.b16 %v2009
    %v2034 = vunpack.c.l.b16 %v2010
    %v2035 = vunpack.c.l.b16 %v2011
    %v2036 = vunpack.c.l.b16 %v2012
    %v2037 = vunpack.c.l.b16 %v2013
    %v2038 = vpack.c.b16 %v2031, %v2030
    %v2039 = vpack.c.b16 %v2033, %v2032
    %v2040 = vpack.c.b16 %v2035, %v2034
    %v2041 = vpack.c.b16 %v2037, %v2036
    %vm2046 = vcmask 523264
    %v2048 = vsel %vm2046, %v2014, 0
    %2050 = vmatprep.subr.bf16.mxu0 0
    %2051 = vmatpush1.bf16.msra.mxu0 %v2038
    %2052 = vmatprep.subr.bf16.mxu0 0
    %2053 = vmatpush1.bf16.msra.mxu0 %v2039
    %2054 = vmatprep.subr.bf16.mxu0 0
    %2055 = vmatpush1.bf16.msra.mxu0 %v2040
    %2056 = vmatprep.subr.bf16.mxu0 0
    %2057 = vmatpush1.bf16.msra.mxu0 %v2041
    %2058 = vmatprep.subr.bf16.mxu0 0
    %2059 = vmatpush1.bf16.msra.mxu0 0
    %2060 = vmatprep.subr.bf16.mxu0 0
    %2061 = vmatpush1.bf16.msra.mxu0 0
    %2062 = vmatprep.subr.bf16.mxu0 0
    %2063 = vmatpush1.bf16.msra.mxu0 0
    %2064 = vmatprep.subr.bf16.mxu0 0
    %2065 = vmatpush1.bf16.msra.mxu0 0
    %2066 = vmatprep.subr.bf16.mxu0 0
    %2067 = vmatpush1.bf16.msra.mxu0 0
    %2068 = vmatprep.subr.bf16.mxu0 0
    %2069 = vmatpush1.bf16.msra.mxu0 0
    %2070 = vmatprep.subr.bf16.mxu0 0
    %2071 = vmatpush1.bf16.msra.mxu0 0
    %2072 = vmatprep.subr.bf16.mxu0 0
    %2073 = vmatpush1.bf16.msra.mxu0 0
    %2074 = vmatprep.subr.bf16.mxu0 0
    %2075 = vmatpush1.bf16.msra.mxu0 0
    %2076 = vmatprep.subr.bf16.mxu0 0
    %2077 = vmatpush1.bf16.msra.mxu0 0
    %2078 = vmatprep.subr.bf16.mxu0 0
    %2079 = vmatpush1.bf16.msra.mxu0 0
    %2080 = vmatprep.subr.bf16.mxu0 0
    %2081 = vmatpush1.bf16.msra.mxu0 0
    %2082 = vmatprep.mubr.bf16.mxu0 0
    %2083 = vmatmul.mubr.bf16.gmra.mrb[0].mxu0 %v2048
    %v2084 = vpop.f32.mrb[0].mxu0
    %v2085 = vadd.f32 %v2020, %v2084
    %v2086 = vpop.f32.mrb[0].mxu0
    %v2087 = vpop.f32.mrb[0].mxu0
    %v2088 = vadd.f32 %v2020, %v2087
    %v2089 = vpop.f32.mrb[0].mxu0
    %2090 = vdwg.mxu0
    %v2091 = vadd.f32 %v2085, %v1918
    %v2092 = vadd.f32 %v2088, %v1919
    %v2093 = vld [vmem:[%s17] sm:$0x1]
    %v2094 = vld [vmem:[%s18] sm:$0x1]
    %v2095 = vsel %vm211, %v2091, 0.0
    %2096 = vadd.xlane.f32.xlu0 %v2095
    %v2097 = vpop.xlane.xlu0 %2096
    %v2098 = vsel %vm211, %v2092, 0.0
    %2099 = vadd.xlane.f32.xlu0 %v2098
    %v2100 = vpop.xlane.xlu0 %2099
    %v2101 = vmul.f32 %v2097, %v308
    %v2102 = vmul.f32 %v2100, %v308
    %v2103 = vsub.f32 %v2091, %v2101
    %v2104 = vsub.f32 %v2092, %v2102
    %v2105 = vmul.f32 %v2103, %v2103
    %v2106 = vmul.f32 %v2104, %v2104
    %v2107 = vsel %vm211, %v2105, 0.0
    %2108 = vadd.xlane.f32.xlu0 %v2107
    %v2109 = vpop.xlane.xlu0 %2108
    %v2110 = vsel %vm211, %v2106, 0.0
    %2111 = vadd.xlane.f32.xlu0 %v2110
    %v2112 = vpop.xlane.xlu0 %2111
    %v2113 = vmul.f32 %v2109, %v308
    %v2114 = vmul.f32 %v2112, %v308
    %v2115 = vadd.f32 %v2113, 1e-12
    %v2116 = vadd.f32 %v2114, 1e-12
    %v2117 = vrsqrt.pop %v2115
    %v2118 = vrsqrt.pop %v2116
    %v2119 = vmul.f32 %v2103, %v2117
    %v2120 = vmul.f32 %v2104, %v2118
    %v2122 = vlaneseq
    %v2123 = vshrl.u32 %v2122, 7
    %v2124 = vsub.s32 0, %v2123
    %v2125 = vrot.slane %v2093, %v2124
    %v2127 = vmul.f32 %v2119, %v2125
    %v2128 = vmul.f32 %v2120, %v2125
    %v2130 = vlaneseq
    %v2131 = vshrl.u32 %v2130, 7
    %v2132 = vsub.s32 0, %v2131
    %v2133 = vrot.slane %v2094, %v2132
    %v2135 = vadd.f32 %v2127, %v2133
    %v2136 = vadd.f32 %v2128, %v2133
    %s2137 = scalar_lea.vmem %s7, 16
    %v2138 = vld [vmem:[%s2137] sm:$0xf]
    %v2139 = vld [vmem:[%s2137 + $0x4] sm:$0xf]
    %v2140 = vld [vmem:[%s2137 + $0x8] sm:$0xf]
    %v2141 = vld [vmem:[%s2137 + $0xc] sm:$0xf]
    %v2142 = vpack.c.bf16 %v2136, %v2135
    %s2143 = scalar_lea.vmem [#allocation11], 1
    %v2144 = vld [vmem:[%s2143] sm:$0x1]
    %v2146 = vlaneseq
    %v2147 = vshrl.u32 %v2146, 7
    %v2148 = vsub.s32 0, %v2147
    %v2149 = vrot.slane %v2144, %v2148
    %v2155 = vunpack.c.l.b16 %v2138
    %v2156 = vunpack.c.l.b16 %v2139
    %v2157 = vunpack.c.l.b16 %v2140
    %v2158 = vunpack.c.l.b16 %v2141
    %v2159 = vpack.c.b16 %v2156, %v2155
    %v2160 = vpack.c.b16 %v2158, %v2157
    %v2164 = vsel %vm211, %v2142, 0
    %2166 = vmatprep.subr.bf16.mxu0 0
    %2167 = vmatpush1.bf16.msra.mxu0 %v2159
    %2168 = vmatprep.subr.bf16.mxu0 0
    %2169 = vmatpush1.bf16.msra.mxu0 %v2160
    %2170 = vmatprep.subr.bf16.mxu0 0
    %2171 = vmatpush1.bf16.msra.mxu0 0
    %2172 = vmatprep.subr.bf16.mxu0 0
    %2173 = vmatpush1.bf16.msra.mxu0 0
    %2174 = vmatprep.subr.bf16.mxu0 0
    %2175 = vmatpush1.bf16.msra.mxu0 0
    %2176 = vmatprep.subr.bf16.mxu0 0
    %2177 = vmatpush1.bf16.msra.mxu0 0
    %2178 = vmatprep.subr.bf16.mxu0 0
    %2179 = vmatpush1.bf16.msra.mxu0 0
    %2180 = vmatprep.subr.bf16.mxu0 0
    %2181 = vmatpush1.bf16.msra.mxu0 0
    %2182 = vmatprep.subr.bf16.mxu0 0
    %2183 = vmatpush1.bf16.msra.mxu0 0
    %2184 = vmatprep.subr.bf16.mxu0 0
    %2185 = vmatpush1.bf16.msra.mxu0 0
    %2186 = vmatprep.subr.bf16.mxu0 0
    %2187 = vmatpush1.bf16.msra.mxu0 0
    %2188 = vmatprep.subr.bf16.mxu0 0
    %2189 = vmatpush1.bf16.msra.mxu0 0
    %2190 = vmatprep.subr.bf16.mxu0 0
    %2191 = vmatpush1.bf16.msra.mxu0 0
    %2192 = vmatprep.subr.bf16.mxu0 0
    %2193 = vmatpush1.bf16.msra.mxu0 0
    %2194 = vmatprep.subr.bf16.mxu0 0
    %2195 = vmatpush1.bf16.msra.mxu0 0
    %2196 = vmatprep.subr.bf16.mxu0 0
    %2197 = vmatpush1.bf16.msra.mxu0 0
    %2198 = vmatprep.mubr.bf16.mxu0 0
    %2199 = vmatmul.mubr.bf16.gmra.mrb[0].mxu0 %v2164
    %v2200 = vpop.f32.mrb[0].mxu0
    %v2201 = vadd.f32 %v2149, %v2200
    %v2202 = vpop.f32.mrb[0].mxu0
    %v2203 = vpop.f32.mrb[0].mxu0
    %v2204 = vadd.f32 %v2149, %v2203
    %v2205 = vpop.f32.mrb[0].mxu0
    %2206 = vdwg.mxu0
    %v2207 = vmul.f32 %v2201, 0.35355338
    %v2208 = vmul.f32 %v2204, 0.35355338
    %v2209 = vmul.f32 %v2207, %v375
    %v2210 = vmul.f32 %v2208, %v375
    %2212 = vrot.lane.b32.xlu0 %v2201, 96
    %v2213 = vpop.permute.xlu0 %2212
    %v2215 = vsel %vm211, %v2209, 0
    %v2217 = vsel %vm211, %v2213, 0
    %2219 = vmatprep.subr.mxu0 0.0
    %2220 = vmatpush1.xpose.msra.mxu0 %v2217
    %2221 = vmatprep.subr.mxu0 0.0
    %2222 = vmatpush1.xpose.msra.mxu0 0.0
    %2223 = vmatprep.subr.mxu0 0.0
    %2224 = vmatpush1.xpose.msra.mxu0 0.0
    %2225 = vmatprep.subr.mxu0 0.0
    %2226 = vmatpush1.xpose.msra.mxu0 0.0
    %2227 = vmatprep.subr.mxu0 0.0
    %2228 = vmatpush1.xpose.msra.mxu0 0.0
    %2229 = vmatprep.subr.mxu0 0.0
    %2230 = vmatpush1.xpose.msra.mxu0 0.0
    %2231 = vmatprep.subr.mxu0 0.0
    %2232 = vmatpush1.xpose.msra.mxu0 0.0
    %2233 = vmatprep.subr.mxu0 0.0
    %2234 = vmatpush1.xpose.msra.mxu0 0.0
    %2235 = vmatprep.subr.mxu0 0.0
    %2236 = vmatpush1.xpose.msra.mxu0 0.0
    %2237 = vmatprep.subr.mxu0 0.0
    %2238 = vmatpush1.xpose.msra.mxu0 0.0
    %2239 = vmatprep.subr.mxu0 0.0
    %2240 = vmatpush1.xpose.msra.mxu0 0.0
    %2241 = vmatprep.subr.mxu0 0.0
    %2242 = vmatpush1.xpose.msra.mxu0 0.0
    %2243 = vmatprep.subr.mxu0 0.0
    %2244 = vmatpush1.xpose.msra.mxu0 0.0
    %2245 = vmatprep.subr.mxu0 0.0
    %2246 = vmatpush1.xpose.msra.mxu0 0.0
    %2247 = vmatprep.subr.mxu0 0.0
    %2248 = vmatpush1.xpose.msra.mxu0 0.0
    %2249 = vmatprep.subr.mxu0 0.0
    %2250 = vmatpush1.xpose.msra.mxu0 0.0
    %2251 = vmatprep.subr.mxu0 0.0
    %2252 = vmatpush1.xpose.msra.mxu0 0.0
    %2253 = vmatprep.subr.mxu0 0.0
    %2254 = vmatpush1.xpose.msra.mxu0 0.0
    %2255 = vmatprep.subr.mxu0 0.0
    %2256 = vmatpush1.xpose.msra.mxu0 0.0
    %2257 = vmatprep.subr.mxu0 0.0
    %2258 = vmatpush1.xpose.msra.mxu0 0.0
    %2259 = vmatprep.subr.mxu0 0.0
    %2260 = vmatpush1.xpose.msra.mxu0 0.0
    %2261 = vmatprep.subr.mxu0 0.0
    %2262 = vmatpush1.xpose.msra.mxu0 0.0
    %2263 = vmatprep.subr.mxu0 0.0
    %2264 = vmatpush1.xpose.msra.mxu0 0.0
    %2265 = vmatprep.subr.mxu0 0.0
    %2266 = vmatpush1.xpose.msra.mxu0 0.0
    %2267 = vmatprep.subr.mxu0 0.0
    %2268 = vmatpush1.xpose.msra.mxu0 0.0
    %2269 = vmatprep.subr.mxu0 0.0
    %2270 = vmatpush1.xpose.msra.mxu0 0.0
    %2271 = vmatprep.subr.mxu0 0.0
    %2272 = vmatpush1.xpose.msra.mxu0 0.0
    %2273 = vmatprep.subr.mxu0 0.0
    %2274 = vmatpush1.xpose.msra.mxu0 0.0
    %2275 = vmatprep.subr.mxu0 0.0
    %2276 = vmatpush1.xpose.msra.mxu0 0.0
    %2277 = vmatprep.subr.mxu0 0.0
    %2278 = vmatpush1.xpose.msra.mxu0 0.0
    %2279 = vmatprep.subr.mxu0 0.0
    %2280 = vmatpush1.xpose.msra.mxu0 0.0
    %2281 = vmatprep.subr.mxu0 0.0
    %2282 = vmatpush1.xpose.msra.mxu0 0.0
    %2283 = vmatprep.mubr.f32.mxu0 0.0
    %2284 = vmatmul.mubr.f32.gmra.mrb[0].mxu0 %v2215
    %v2285 = vpop.f32.mrb[0].mxu0
    %v2286 = vadd.f32 %v466, %v2285
    %v2287 = vpop.f32.mrb[0].mxu0
    %2288 = vdwg.mxu0
    %2290 = vrot.lane.b32.xlu0 %v2204, 96
    %v2291 = vpop.permute.xlu0 %2290
    %v2293 = vsel %vm211, %v2210, 0
    %v2295 = vsel %vm211, %v2291, 0
    %2297 = vmatprep.subr.mxu0 0.0
    %2298 = vmatpush1.xpose.msra.mxu0 %v2295
    %2299 = vmatprep.subr.mxu0 0.0
    %2300 = vmatpush1.xpose.msra.mxu0 0.0
    %2301 = vmatprep.subr.mxu0 0.0
    %2302 = vmatpush1.xpose.msra.mxu0 0.0
    %2303 = vmatprep.subr.mxu0 0.0
    %2304 = vmatpush1.xpose.msra.mxu0 0.0
    %2305 = vmatprep.subr.mxu0 0.0
    %2306 = vmatpush1.xpose.msra.mxu0 0.0
    %2307 = vmatprep.subr.mxu0 0.0
    %2308 = vmatpush1.xpose.msra.mxu0 0.0
    %2309 = vmatprep.subr.mxu0 0.0
    %2310 = vmatpush1.xpose.msra.mxu0 0.0
    %2311 = vmatprep.subr.mxu0 0.0
    %2312 = vmatpush1.xpose.msra.mxu0 0.0
    %2313 = vmatprep.subr.mxu0 0.0
    %2314 = vmatpush1.xpose.msra.mxu0 0.0
    %2315 = vmatprep.subr.mxu0 0.0
    %2316 = vmatpush1.xpose.msra.mxu0 0.0
    %2317 = vmatprep.subr.mxu0 0.0
    %2318 = vmatpush1.xpose.msra.mxu0 0.0
    %2319 = vmatprep.subr.mxu0 0.0
    %2320 = vmatpush1.xpose.msra.mxu0 0.0
    %2321 = vmatprep.subr.mxu0 0.0
    %2322 = vmatpush1.xpose.msra.mxu0 0.0
    %2323 = vmatprep.subr.mxu0 0.0
    %2324 = vmatpush1.xpose.msra.mxu0 0.0
    %2325 = vmatprep.subr.mxu0 0.0
    %2326 = vmatpush1.xpose.msra.mxu0 0.0
    %2327 = vmatprep.subr.mxu0 0.0
    %2328 = vmatpush1.xpose.msra.mxu0 0.0
    %2329 = vmatprep.subr.mxu0 0.0
    %2330 = vmatpush1.xpose.msra.mxu0 0.0
    %2331 = vmatprep.subr.mxu0 0.0
    %2332 = vmatpush1.xpose.msra.mxu0 0.0
    %2333 = vmatprep.subr.mxu0 0.0
    %2334 = vmatpush1.xpose.msra.mxu0 0.0
    %2335 = vmatprep.subr.mxu0 0.0
    %2336 = vmatpush1.xpose.msra.mxu0 0.0
    %2337 = vmatprep.subr.mxu0 0.0
    %2338 = vmatpush1.xpose.msra.mxu0 0.0
    %2339 = vmatprep.subr.mxu0 0.0
    %2340 = vmatpush1.xpose.msra.mxu0 0.0
    %2341 = vmatprep.subr.mxu0 0.0
    %2342 = vmatpush1.xpose.msra.mxu0 0.0
    %2343 = vmatprep.subr.mxu0 0.0
    %2344 = vmatpush1.xpose.msra.mxu0 0.0
    %2345 = vmatprep.subr.mxu0 0.0
    %2346 = vmatpush1.xpose.msra.mxu0 0.0
    %2347 = vmatprep.subr.mxu0 0.0
    %2348 = vmatpush1.xpose.msra.mxu0 0.0
    %2349 = vmatprep.subr.mxu0 0.0
    %2350 = vmatpush1.xpose.msra.mxu0 0.0
    %2351 = vmatprep.subr.mxu0 0.0
    %2352 = vmatpush1.xpose.msra.mxu0 0.0
    %2353 = vmatprep.subr.mxu0 0.0
    %2354 = vmatpush1.xpose.msra.mxu0 0.0
    %2355 = vmatprep.subr.mxu0 0.0
    %2356 = vmatpush1.xpose.msra.mxu0 0.0
    %2357 = vmatprep.subr.mxu0 0.0
    %2358 = vmatpush1.xpose.msra.mxu0 0.0
    %2359 = vmatprep.subr.mxu0 0.0
    %2360 = vmatpush1.xpose.msra.mxu0 0.0
    %2361 = vmatprep.mubr.f32.mxu0 0.0
    %2362 = vmatmul.mubr.f32.gmra.mrb[0].mxu0 %v2293
    %v2363 = vpop.f32.mrb[0].mxu0
    %v2364 = vadd.f32 %v470, %v2363
    %v2365 = vpop.f32.mrb[0].mxu0
    %2366 = vdwg.mxu0
    %v2367 = vsel %vm629, %v2286, -inf
    %2368 = vmax.xlane.f32.xlu0 %v2367
    %v2369 = vpop.xlane.xlu0 %2368
    %v2370 = vsel %vm629, %v2364, -inf
    %2371 = vmax.xlane.f32.xlu0 %v2370
    %v2372 = vpop.xlane.xlu0 %2371
    %v2373 = vsub.f32 %v2286, %v2369
    %v2374 = vsub.f32 %v2364, %v2372
    %v2375 = vmul.f32 %v2373, 1.442695
    %v2376 = vpow.pop %v2375
    %v2377 = vmul.f32 %v2374, 1.442695
    %v2378 = vpow.pop %v2377
    %v2379 = vsel %vm629, %v2376, 0.0
    %2380 = vadd.xlane.f32.xlu0 %v2379
    %v2381 = vpop.xlane.xlu0 %2380
    %v2382 = vsel %vm629, %v2378, 0.0
    %2383 = vadd.xlane.f32.xlu0 %v2382
    %v2384 = vpop.xlane.xlu0 %2383
    %v2385 = vrcp.pop %v2381
    %v2386 = vrcp.pop %v2384
    %v2387 = vmul.f32 %v2376, %v2385
    %v2388 = vmul.f32 %v2378, %v2386
    %v2389 = vmul.f32 %v2201, %v654
    %v2390 = vmul.f32 %v2204, %v654
    %v2391 = vmul.f32 %v2207, %v380
    %v2392 = vmul.f32 %v2208, %v380
    %v2394 = vsel %vm211, %v2391, 0
    %2396 = vmatprep.subr.mxu0 0.0
    %2397 = vmatpush1.xpose.msra.mxu0 %v2217
    %2398 = vmatprep.subr.mxu0 0.0
    %2399 = vmatpush1.xpose.msra.mxu0 0.0
    %2400 = vmatprep.subr.mxu0 0.0
    %2401 = vmatpush1.xpose.msra.mxu0 0.0
    %2402 = vmatprep.subr.mxu0 0.0
    %2403 = vmatpush1.xpose.msra.mxu0 0.0
    %2404 = vmatprep.subr.mxu0 0.0
    %2405 = vmatpush1.xpose.msra.mxu0 0.0
    %2406 = vmatprep.subr.mxu0 0.0
    %2407 = vmatpush1.xpose.msra.mxu0 0.0
    %2408 = vmatprep.subr.mxu0 0.0
    %2409 = vmatpush1.xpose.msra.mxu0 0.0
    %2410 = vmatprep.subr.mxu0 0.0
    %2411 = vmatpush1.xpose.msra.mxu0 0.0
    %2412 = vmatprep.subr.mxu0 0.0
    %2413 = vmatpush1.xpose.msra.mxu0 0.0
    %2414 = vmatprep.subr.mxu0 0.0
    %2415 = vmatpush1.xpose.msra.mxu0 0.0
    %2416 = vmatprep.subr.mxu0 0.0
    %2417 = vmatpush1.xpose.msra.mxu0 0.0
    %2418 = vmatprep.subr.mxu0 0.0
    %2419 = vmatpush1.xpose.msra.mxu0 0.0
    %2420 = vmatprep.subr.mxu0 0.0
    %2421 = vmatpush1.xpose.msra.mxu0 0.0
    %2422 = vmatprep.subr.mxu0 0.0
    %2423 = vmatpush1.xpose.msra.mxu0 0.0
    %2424 = vmatprep.subr.mxu0 0.0
    %2425 = vmatpush1.xpose.msra.mxu0 0.0
    %2426 = vmatprep.subr.mxu0 0.0
    %2427 = vmatpush1.xpose.msra.mxu0 0.0
    %2428 = vmatprep.subr.mxu0 0.0
    %2429 = vmatpush1.xpose.msra.mxu0 0.0
    %2430 = vmatprep.subr.mxu0 0.0
    %2431 = vmatpush1.xpose.msra.mxu0 0.0
    %2432 = vmatprep.subr.mxu0 0.0
    %2433 = vmatpush1.xpose.msra.mxu0 0.0
    %2434 = vmatprep.subr.mxu0 0.0
    %2435 = vmatpush1.xpose.msra.mxu0 0.0
    %2436 = vmatprep.subr.mxu0 0.0
    %2437 = vmatpush1.xpose.msra.mxu0 0.0
    %2438 = vmatprep.subr.mxu0 0.0
    %2439 = vmatpush1.xpose.msra.mxu0 0.0
    %2440 = vmatprep.subr.mxu0 0.0
    %2441 = vmatpush1.xpose.msra.mxu0 0.0
    %2442 = vmatprep.subr.mxu0 0.0
    %2443 = vmatpush1.xpose.msra.mxu0 0.0
    %2444 = vmatprep.subr.mxu0 0.0
    %2445 = vmatpush1.xpose.msra.mxu0 0.0
    %2446 = vmatprep.subr.mxu0 0.0
    %2447 = vmatpush1.xpose.msra.mxu0 0.0
    %2448 = vmatprep.subr.mxu0 0.0
    %2449 = vmatpush1.xpose.msra.mxu0 0.0
    %2450 = vmatprep.subr.mxu0 0.0
    %2451 = vmatpush1.xpose.msra.mxu0 0.0
    %2452 = vmatprep.subr.mxu0 0.0
    %2453 = vmatpush1.xpose.msra.mxu0 0.0
    %2454 = vmatprep.subr.mxu0 0.0
    %2455 = vmatpush1.xpose.msra.mxu0 0.0
    %2456 = vmatprep.subr.mxu0 0.0
    %2457 = vmatpush1.xpose.msra.mxu0 0.0
    %2458 = vmatprep.subr.mxu0 0.0
    %2459 = vmatpush1.xpose.msra.mxu0 0.0
    %2460 = vmatprep.mubr.f32.mxu0 0.0
    %2461 = vmatmul.mubr.f32.gmra.mrb[0].mxu0 %v2394
    %v2462 = vpop.f32.mrb[0].mxu0
    %v2463 = vadd.f32 %v466, %v2462
    %v2464 = vpop.f32.mrb[0].mxu0
    %2465 = vdwg.mxu0
    %v2467 = vsel %vm211, %v2392, 0
    %2469 = vmatprep.subr.mxu0 0.0
    %2470 = vmatpush1.xpose.msra.mxu0 %v2295
    %2471 = vmatprep.subr.mxu0 0.0
    %2472 = vmatpush1.xpose.msra.mxu0 0.0
    %2473 = vmatprep.subr.mxu0 0.0
    %2474 = vmatpush1.xpose.msra.mxu0 0.0
    %2475 = vmatprep.subr.mxu0 0.0
    %2476 = vmatpush1.xpose.msra.mxu0 0.0
    %2477 = vmatprep.subr.mxu0 0.0
    %2478 = vmatpush1.xpose.msra.mxu0 0.0
    %2479 = vmatprep.subr.mxu0 0.0
    %2480 = vmatpush1.xpose.msra.mxu0 0.0
    %2481 = vmatprep.subr.mxu0 0.0
    %2482 = vmatpush1.xpose.msra.mxu0 0.0
    %2483 = vmatprep.subr.mxu0 0.0
    %2484 = vmatpush1.xpose.msra.mxu0 0.0
    %2485 = vmatprep.subr.mxu0 0.0
    %2486 = vmatpush1.xpose.msra.mxu0 0.0
    %2487 = vmatprep.subr.mxu0 0.0
    %2488 = vmatpush1.xpose.msra.mxu0 0.0
    %2489 = vmatprep.subr.mxu0 0.0
    %2490 = vmatpush1.xpose.msra.mxu0 0.0
    %2491 = vmatprep.subr.mxu0 0.0
    %2492 = vmatpush1.xpose.msra.mxu0 0.0
    %2493 = vmatprep.subr.mxu0 0.0
    %2494 = vmatpush1.xpose.msra.mxu0 0.0
    %2495 = vmatprep.subr.mxu0 0.0
    %2496 = vmatpush1.xpose.msra.mxu0 0.0
    %2497 = vmatprep.subr.mxu0 0.0
    %2498 = vmatpush1.xpose.msra.mxu0 0.0
    %2499 = vmatprep.subr.mxu0 0.0
    %2500 = vmatpush1.xpose.msra.mxu0 0.0
    %2501 = vmatprep.subr.mxu0 0.0
    %2502 = vmatpush1.xpose.msra.mxu0 0.0
    %2503 = vmatprep.subr.mxu0 0.0
    %2504 = vmatpush1.xpose.msra.mxu0 0.0
    %2505 = vmatprep.subr.mxu0 0.0
    %2506 = vmatpush1.xpose.msra.mxu0 0.0
    %2507 = vmatprep.subr.mxu0 0.0
    %2508 = vmatpush1.xpose.msra.mxu0 0.0
    %2509 = vmatprep.subr.mxu0 0.0
    %2510 = vmatpush1.xpose.msra.mxu0 0.0
    %2511 = vmatprep.subr.mxu0 0.0
    %2512 = vmatpush1.xpose.msra.mxu0 0.0
    %2513 = vmatprep.subr.mxu0 0.0
    %2514 = vmatpush1.xpose.msra.mxu0 0.0
    %2515 = vmatprep.subr.mxu0 0.0
    %2516 = vmatpush1.xpose.msra.mxu0 0.0
    %2517 = vmatprep.subr.mxu0 0.0
    %2518 = vmatpush1.xpose.msra.mxu0 0.0
    %2519 = vmatprep.subr.mxu0 0.0
    %2520 = vmatpush1.xpose.msra.mxu0 0.0
    %2521 = vmatprep.subr.mxu0 0.0
    %2522 = vmatpush1.xpose.msra.mxu0 0.0
    %2523 = vmatprep.subr.mxu0 0.0
    %2524 = vmatpush1.xpose.msra.mxu0 0.0
    %2525 = vmatprep.subr.mxu0 0.0
    %2526 = vmatpush1.xpose.msra.mxu0 0.0
    %2527 = vmatprep.subr.mxu0 0.0
    %2528 = vmatpush1.xpose.msra.mxu0 0.0
    %2529 = vmatprep.subr.mxu0 0.0
    %2530 = vmatpush1.xpose.msra.mxu0 0.0
    %2531 = vmatprep.subr.mxu0 0.0
    %2532 = vmatpush1.xpose.msra.mxu0 0.0
    %2533 = vmatprep.mubr.f32.mxu0 0.0
    %2534 = vmatmul.mubr.f32.gmra.mrb[0].mxu0 %v2467
    %v2535 = vpop.f32.mrb[0].mxu0
    %v2536 = vadd.f32 %v470, %v2535
    %v2537 = vpop.f32.mrb[0].mxu0
    %2538 = vdwg.mxu0
    %v2539 = vsel %vm629, %v2463, -inf
    %2540 = vmax.xlane.f32.xlu0 %v2539
    %v2541 = vpop.xlane.xlu0 %2540
    %v2542 = vsel %vm629, %v2536, -inf
    %2543 = vmax.xlane.f32.xlu0 %v2542
    %v2544 = vpop.xlane.xlu0 %2543
    %v2545 = vsub.f32 %v2463, %v2541
    %v2546 = vsub.f32 %v2536, %v2544
    %v2547 = vmul.f32 %v2545, 1.442695
    %v2548 = vpow.pop %v2547
    %v2549 = vmul.f32 %v2546, 1.442695
    %v2550 = vpow.pop %v2549
    %v2551 = vsel %vm629, %v2548, 0.0
    %2552 = vadd.xlane.f32.xlu0 %v2551
    %v2553 = vpop.xlane.xlu0 %2552
    %v2554 = vsel %vm629, %v2550, 0.0
    %2555 = vadd.xlane.f32.xlu0 %v2554
    %v2556 = vpop.xlane.xlu0 %2555
    %v2557 = vrcp.pop %v2553
    %v2558 = vrcp.pop %v2556
    %v2559 = vmul.f32 %v2548, %v2557
    %v2560 = vmul.f32 %v2550, %v2558
    %v2561 = vmul.f32 %v2201, %v830
    %v2562 = vmul.f32 %v2204, %v830
    %2564 = vrot.lane.b32.xlu0 %v2561, 64
    %v2565 = vpop.permute.xlu0 %2564
    %v2568 = vsel %vm629, %v2559, 0
    %2570 = vmatprep.subr.mxu0 0.0
    %2571 = vmatpush1.msra.mxu0 %v2565
    %2572 = vmatprep.subr.mxu0 0.0
    %2573 = vmatpush1.msra.mxu0 0.0
    %2574 = vmatprep.subr.mxu0 0.0
    %2575 = vmatpush1.msra.mxu0 0.0
    %2576 = vmatprep.subr.mxu0 0.0
    %2577 = vmatpush1.msra.mxu0 0.0
    %2578 = vmatprep.subr.mxu0 0.0
    %2579 = vmatpush1.msra.mxu0 0.0
    %2580 = vmatprep.subr.mxu0 0.0
    %2581 = vmatpush1.msra.mxu0 0.0
    %2582 = vmatprep.subr.mxu0 0.0
    %2583 = vmatpush1.msra.mxu0 0.0
    %2584 = vmatprep.subr.mxu0 0.0
    %2585 = vmatpush1.msra.mxu0 0.0
    %2586 = vmatprep.subr.mxu0 0.0
    %2587 = vmatpush1.msra.mxu0 0.0
    %2588 = vmatprep.subr.mxu0 0.0
    %2589 = vmatpush1.msra.mxu0 0.0
    %2590 = vmatprep.subr.mxu0 0.0
    %2591 = vmatpush1.msra.mxu0 0.0
    %2592 = vmatprep.subr.mxu0 0.0
    %2593 = vmatpush1.msra.mxu0 0.0
    %2594 = vmatprep.subr.mxu0 0.0
    %2595 = vmatpush1.msra.mxu0 0.0
    %2596 = vmatprep.subr.mxu0 0.0
    %2597 = vmatpush1.msra.mxu0 0.0
    %2598 = vmatprep.subr.mxu0 0.0
    %2599 = vmatpush1.msra.mxu0 0.0
    %2600 = vmatprep.subr.mxu0 0.0
    %2601 = vmatpush1.msra.mxu0 0.0
    %2602 = vmatprep.subr.mxu0 0.0
    %2603 = vmatpush1.msra.mxu0 0.0
    %2604 = vmatprep.subr.mxu0 0.0
    %2605 = vmatpush1.msra.mxu0 0.0
    %2606 = vmatprep.subr.mxu0 0.0
    %2607 = vmatpush1.msra.mxu0 0.0
    %2608 = vmatprep.subr.mxu0 0.0
    %2609 = vmatpush1.msra.mxu0 0.0
    %2610 = vmatprep.subr.mxu0 0.0
    %2611 = vmatpush1.msra.mxu0 0.0
    %2612 = vmatprep.subr.mxu0 0.0
    %2613 = vmatpush1.msra.mxu0 0.0
    %2614 = vmatprep.subr.mxu0 0.0
    %2615 = vmatpush1.msra.mxu0 0.0
    %2616 = vmatprep.subr.mxu0 0.0
    %2617 = vmatpush1.msra.mxu0 0.0
    %2618 = vmatprep.subr.mxu0 0.0
    %2619 = vmatpush1.msra.mxu0 0.0
    %2620 = vmatprep.subr.mxu0 0.0
    %2621 = vmatpush1.msra.mxu0 0.0
    %2622 = vmatprep.subr.mxu0 0.0
    %2623 = vmatpush1.msra.mxu0 0.0
    %2624 = vmatprep.subr.mxu0 0.0
    %2625 = vmatpush1.msra.mxu0 0.0
    %2626 = vmatprep.subr.mxu0 0.0
    %2627 = vmatpush1.msra.mxu0 0.0
    %2628 = vmatprep.subr.mxu0 0.0
    %2629 = vmatpush1.msra.mxu0 0.0
    %2630 = vmatprep.subr.mxu0 0.0
    %2631 = vmatpush1.msra.mxu0 0.0
    %2632 = vmatprep.subr.mxu0 0.0
    %2633 = vmatpush1.msra.mxu0 0.0
    %2634 = vmatprep.mubr.f32.mxu0 0.0
    %2635 = vmatmul.mubr.f32.gmra.mrb[0].mxu0 %v2568
    %v2636 = vpop.f32.mrb[0].mxu0
    %v2637 = vadd.f32 0.0, %v2636
    %v2638 = vpop.f32.mrb[0].mxu0
    %2639 = vdwg.mxu0
    %2641 = vrot.lane.b32.xlu0 %v2562, 64
    %v2642 = vpop.permute.xlu0 %2641
    %v2645 = vsel %vm629, %v2560, 0
    %2647 = vmatprep.subr.mxu0 0.0
    %2648 = vmatpush1.msra.mxu0 %v2642
    %2649 = vmatprep.subr.mxu0 0.0
    %2650 = vmatpush1.msra.mxu0 0.0
    %2651 = vmatprep.subr.mxu0 0.0
    %2652 = vmatpush1.msra.mxu0 0.0
    %2653 = vmatprep.subr.mxu0 0.0
    %2654 = vmatpush1.msra.mxu0 0.0
    %2655 = vmatprep.subr.mxu0 0.0
    %2656 = vmatpush1.msra.mxu0 0.0
    %2657 = vmatprep.subr.mxu0 0.0
    %2658 = vmatpush1.msra.mxu0 0.0
    %2659 = vmatprep.subr.mxu0 0.0
    %2660 = vmatpush1.msra.mxu0 0.0
    %2661 = vmatprep.subr.mxu0 0.0
    %2662 = vmatpush1.msra.mxu0 0.0
    %2663 = vmatprep.subr.mxu0 0.0
    %2664 = vmatpush1.msra.mxu0 0.0
    %2665 = vmatprep.subr.mxu0 0.0
    %2666 = vmatpush1.msra.mxu0 0.0
    %2667 = vmatprep.subr.mxu0 0.0
    %2668 = vmatpush1.msra.mxu0 0.0
    %2669 = vmatprep.subr.mxu0 0.0
    %2670 = vmatpush1.msra.mxu0 0.0
    %2671 = vmatprep.subr.mxu0 0.0
    %2672 = vmatpush1.msra.mxu0 0.0
    %2673 = vmatprep.subr.mxu0 0.0
    %2674 = vmatpush1.msra.mxu0 0.0
    %2675 = vmatprep.subr.mxu0 0.0
    %2676 = vmatpush1.msra.mxu0 0.0
    %2677 = vmatprep.subr.mxu0 0.0
    %2678 = vmatpush1.msra.mxu0 0.0
    %2679 = vmatprep.subr.mxu0 0.0
    %2680 = vmatpush1.msra.mxu0 0.0
    %2681 = vmatprep.subr.mxu0 0.0
    %2682 = vmatpush1.msra.mxu0 0.0
    %2683 = vmatprep.subr.mxu0 0.0
    %2684 = vmatpush1.msra.mxu0 0.0
    %2685 = vmatprep.subr.mxu0 0.0
    %2686 = vmatpush1.msra.mxu0 0.0
    %2687 = vmatprep.subr.mxu0 0.0
    %2688 = vmatpush1.msra.mxu0 0.0
    %2689 = vmatprep.subr.mxu0 0.0
    %2690 = vmatpush1.msra.mxu0 0.0
    %2691 = vmatprep.subr.mxu0 0.0
    %2692 = vmatpush1.msra.mxu0 0.0
    %2693 = vmatprep.subr.mxu0 0.0
    %2694 = vmatpush1.msra.mxu0 0.0
    %2695 = vmatprep.subr.mxu0 0.0
    %2696 = vmatpush1.msra.mxu0 0.0
    %2697 = vmatprep.subr.mxu0 0.0
    %2698 = vmatpush1.msra.mxu0 0.0
    %2699 = vmatprep.subr.mxu0 0.0
    %2700 = vmatpush1.msra.mxu0 0.0
    %2701 = vmatprep.subr.mxu0 0.0
    %2702 = vmatpush1.msra.mxu0 0.0
    %2703 = vmatprep.subr.mxu0 0.0
    %2704 = vmatpush1.msra.mxu0 0.0
    %2705 = vmatprep.subr.mxu0 0.0
    %2706 = vmatpush1.msra.mxu0 0.0
    %2707 = vmatprep.subr.mxu0 0.0
    %2708 = vmatpush1.msra.mxu0 0.0
    %2709 = vmatprep.subr.mxu0 0.0
    %2710 = vmatpush1.msra.mxu0 0.0
    %2711 = vmatprep.mubr.f32.mxu0 0.0
    %2712 = vmatmul.mubr.f32.gmra.mrb[0].mxu0 %v2645
    %v2713 = vpop.f32.mrb[0].mxu0
    %v2714 = vadd.f32 0.0, %v2713
    %v2715 = vpop.f32.mrb[0].mxu0
    %2716 = vdwg.mxu0
    %2718 = vrot.lane.b32.xlu0 %v2389, 64
    %v2719 = vpop.permute.xlu0 %2718
    %v2722 = vsel %vm629, %v2387, 0
    %2724 = vmatprep.subr.mxu0 0.0
    %2725 = vmatpush1.msra.mxu0 %v2719
    %2726 = vmatprep.subr.mxu0 0.0
    %2727 = vmatpush1.msra.mxu0 0.0
    %2728 = vmatprep.subr.mxu0 0.0
    %2729 = vmatpush1.msra.mxu0 0.0
    %2730 = vmatprep.subr.mxu0 0.0
    %2731 = vmatpush1.msra.mxu0 0.0
    %2732 = vmatprep.subr.mxu0 0.0
    %2733 = vmatpush1.msra.mxu0 0.0
    %2734 = vmatprep.subr.mxu0 0.0
    %2735 = vmatpush1.msra.mxu0 0.0
    %2736 = vmatprep.subr.mxu0 0.0
    %2737 = vmatpush1.msra.mxu0 0.0
    %2738 = vmatprep.subr.mxu0 0.0
    %2739 = vmatpush1.msra.mxu0 0.0
    %2740 = vmatprep.subr.mxu0 0.0
    %2741 = vmatpush1.msra.mxu0 0.0
    %2742 = vmatprep.subr.mxu0 0.0
    %2743 = vmatpush1.msra.mxu0 0.0
    %2744 = vmatprep.subr.mxu0 0.0
    %2745 = vmatpush1.msra.mxu0 0.0
    %2746 = vmatprep.subr.mxu0 0.0
    %2747 = vmatpush1.msra.mxu0 0.0
    %2748 = vmatprep.subr.mxu0 0.0
    %2749 = vmatpush1.msra.mxu0 0.0
    %2750 = vmatprep.subr.mxu0 0.0
    %2751 = vmatpush1.msra.mxu0 0.0
    %2752 = vmatprep.subr.mxu0 0.0
    %2753 = vmatpush1.msra.mxu0 0.0
    %2754 = vmatprep.subr.mxu0 0.0
    %2755 = vmatpush1.msra.mxu0 0.0
    %2756 = vmatprep.subr.mxu0 0.0
    %2757 = vmatpush1.msra.mxu0 0.0
    %2758 = vmatprep.subr.mxu0 0.0
    %2759 = vmatpush1.msra.mxu0 0.0
    %2760 = vmatprep.subr.mxu0 0.0
    %2761 = vmatpush1.msra.mxu0 0.0
    %2762 = vmatprep.subr.mxu0 0.0
    %2763 = vmatpush1.msra.mxu0 0.0
    %2764 = vmatprep.subr.mxu0 0.0
    %2765 = vmatpush1.msra.mxu0 0.0
    %2766 = vmatprep.subr.mxu0 0.0
    %2767 = vmatpush1.msra.mxu0 0.0
    %2768 = vmatprep.subr.mxu0 0.0
    %2769 = vmatpush1.msra.mxu0 0.0
    %2770 = vmatprep.subr.mxu0 0.0
    %2771 = vmatpush1.msra.mxu0 0.0
    %2772 = vmatprep.subr.mxu0 0.0
    %2773 = vmatpush1.msra.mxu0 0.0
    %2774 = vmatprep.subr.mxu0 0.0
    %2775 = vmatpush1.msra.mxu0 0.0
    %2776 = vmatprep.subr.mxu0 0.0
    %2777 = vmatpush1.msra.mxu0 0.0
    %2778 = vmatprep.subr.mxu0 0.0
    %2779 = vmatpush1.msra.mxu0 0.0
    %2780 = vmatprep.subr.mxu0 0.0
    %2781 = vmatpush1.msra.mxu0 0.0
    %2782 = vmatprep.subr.mxu0 0.0
    %2783 = vmatpush1.msra.mxu0 0.0
    %2784 = vmatprep.subr.mxu0 0.0
    %2785 = vmatpush1.msra.mxu0 0.0
    %2786 = vmatprep.subr.mxu0 0.0
    %2787 = vmatpush1.msra.mxu0 0.0
    %2788 = vmatprep.mubr.f32.mxu0 0.0
    %2789 = vmatmul.mubr.f32.gmra.mrb[0].mxu0 %v2722
    %v2790 = vpop.f32.mrb[0].mxu0
    %v2791 = vadd.f32 %v2637, %v2790
    %v2792 = vpop.f32.mrb[0].mxu0
    %2793 = vdwg.mxu0
    %2795 = vrot.lane.b32.xlu0 %v2390, 64
    %v2796 = vpop.permute.xlu0 %2795
    %v2799 = vsel %vm629, %v2388, 0
    %2801 = vmatprep.subr.mxu0 0.0
    %2802 = vmatpush1.msra.mxu0 %v2796
    %2803 = vmatprep.subr.mxu0 0.0
    %2804 = vmatpush1.msra.mxu0 0.0
    %2805 = vmatprep.subr.mxu0 0.0
    %2806 = vmatpush1.msra.mxu0 0.0
    %2807 = vmatprep.subr.mxu0 0.0
    %2808 = vmatpush1.msra.mxu0 0.0
    %2809 = vmatprep.subr.mxu0 0.0
    %2810 = vmatpush1.msra.mxu0 0.0
    %2811 = vmatprep.subr.mxu0 0.0
    %2812 = vmatpush1.msra.mxu0 0.0
    %2813 = vmatprep.subr.mxu0 0.0
    %2814 = vmatpush1.msra.mxu0 0.0
    %2815 = vmatprep.subr.mxu0 0.0
    %2816 = vmatpush1.msra.mxu0 0.0
    %2817 = vmatprep.subr.mxu0 0.0
    %2818 = vmatpush1.msra.mxu0 0.0
    %2819 = vmatprep.subr.mxu0 0.0
    %2820 = vmatpush1.msra.mxu0 0.0
    %2821 = vmatprep.subr.mxu0 0.0
    %2822 = vmatpush1.msra.mxu0 0.0
    %2823 = vmatprep.subr.mxu0 0.0
    %2824 = vmatpush1.msra.mxu0 0.0
    %2825 = vmatprep.subr.mxu0 0.0
    %2826 = vmatpush1.msra.mxu0 0.0
    %2827 = vmatprep.subr.mxu0 0.0
    %2828 = vmatpush1.msra.mxu0 0.0
    %2829 = vmatprep.subr.mxu0 0.0
    %2830 = vmatpush1.msra.mxu0 0.0
    %2831 = vmatprep.subr.mxu0 0.0
    %2832 = vmatpush1.msra.mxu0 0.0
    %2833 = vmatprep.subr.mxu0 0.0
    %2834 = vmatpush1.msra.mxu0 0.0
    %2835 = vmatprep.subr.mxu0 0.0
    %2836 = vmatpush1.msra.mxu0 0.0
    %2837 = vmatprep.subr.mxu0 0.0
    %2838 = vmatpush1.msra.mxu0 0.0
    %2839 = vmatprep.subr.mxu0 0.0
    %2840 = vmatpush1.msra.mxu0 0.0
    %2841 = vmatprep.subr.mxu0 0.0
    %2842 = vmatpush1.msra.mxu0 0.0
    %2843 = vmatprep.subr.mxu0 0.0
    %2844 = vmatpush1.msra.mxu0 0.0
    %2845 = vmatprep.subr.mxu0 0.0
    %2846 = vmatpush1.msra.mxu0 0.0
    %2847 = vmatprep.subr.mxu0 0.0
    %2848 = vmatpush1.msra.mxu0 0.0
    %2849 = vmatprep.subr.mxu0 0.0
    %2850 = vmatpush1.msra.mxu0 0.0
    %2851 = vmatprep.subr.mxu0 0.0
    %2852 = vmatpush1.msra.mxu0 0.0
    %2853 = vmatprep.subr.mxu0 0.0
    %2854 = vmatpush1.msra.mxu0 0.0
    %2855 = vmatprep.subr.mxu0 0.0
    %2856 = vmatpush1.msra.mxu0 0.0
    %2857 = vmatprep.subr.mxu0 0.0
    %2858 = vmatpush1.msra.mxu0 0.0
    %2859 = vmatprep.subr.mxu0 0.0
    %2860 = vmatpush1.msra.mxu0 0.0
    %2861 = vmatprep.subr.mxu0 0.0
    %2862 = vmatpush1.msra.mxu0 0.0
    %2863 = vmatprep.subr.mxu0 0.0
    %2864 = vmatpush1.msra.mxu0 0.0
    %2865 = vmatprep.mubr.f32.mxu0 0.0
    %2866 = vmatmul.mubr.f32.gmra.mrb[0].mxu0 %v2799
    %v2867 = vpop.f32.mrb[0].mxu0
    %v2868 = vadd.f32 %v2714, %v2867
    %v2869 = vpop.f32.mrb[0].mxu0
    %2870 = vdwg.mxu0
    %v2871 = vmul.f32 %v2207, %v385
    %v2872 = vmul.f32 %v2208, %v385
    %v2874 = vsel %vm211, %v2871, 0
    %2876 = vmatprep.subr.mxu0 0.0
    %2877 = vmatpush1.xpose.msra.mxu0 %v2217
    %2878 = vmatprep.subr.mxu0 0.0
    %2879 = vmatpush1.xpose.msra.mxu0 0.0
    %2880 = vmatprep.subr.mxu0 0.0
    %2881 = vmatpush1.xpose.msra.mxu0 0.0
    %2882 = vmatprep.subr.mxu0 0.0
    %2883 = vmatpush1.xpose.msra.mxu0 0.0
    %2884 = vmatprep.subr.mxu0 0.0
    %2885 = vmatpush1.xpose.msra.mxu0 0.0
    %2886 = vmatprep.subr.mxu0 0.0
    %2887 = vmatpush1.xpose.msra.mxu0 0.0
    %2888 = vmatprep.subr.mxu0 0.0
    %2889 = vmatpush1.xpose.msra.mxu0 0.0
    %2890 = vmatprep.subr.mxu0 0.0
    %2891 = vmatpush1.xpose.msra.mxu0 0.0
    %2892 = vmatprep.subr.mxu0 0.0
    %2893 = vmatpush1.xpose.msra.mxu0 0.0
    %2894 = vmatprep.subr.mxu0 0.0
    %2895 = vmatpush1.xpose.msra.mxu0 0.0
    %2896 = vmatprep.subr.mxu0 0.0
    %2897 = vmatpush1.xpose.msra.mxu0 0.0
    %2898 = vmatprep.subr.mxu0 0.0
    %2899 = vmatpush1.xpose.msra.mxu0 0.0
    %2900 = vmatprep.subr.mxu0 0.0
    %2901 = vmatpush1.xpose.msra.mxu0 0.0
    %2902 = vmatprep.subr.mxu0 0.0
    %2903 = vmatpush1.xpose.msra.mxu0 0.0
    %2904 = vmatprep.subr.mxu0 0.0
    %2905 = vmatpush1.xpose.msra.mxu0 0.0
    %2906 = vmatprep.subr.mxu0 0.0
    %2907 = vmatpush1.xpose.msra.mxu0 0.0
    %2908 = vmatprep.subr.mxu0 0.0
    %2909 = vmatpush1.xpose.msra.mxu0 0.0
    %2910 = vmatprep.subr.mxu0 0.0
    %2911 = vmatpush1.xpose.msra.mxu0 0.0
    %2912 = vmatprep.subr.mxu0 0.0
    %2913 = vmatpush1.xpose.msra.mxu0 0.0
    %2914 = vmatprep.subr.mxu0 0.0
    %2915 = vmatpush1.xpose.msra.mxu0 0.0
    %2916 = vmatprep.subr.mxu0 0.0
    %2917 = vmatpush1.xpose.msra.mxu0 0.0
    %2918 = vmatprep.subr.mxu0 0.0
    %2919 = vmatpush1.xpose.msra.mxu0 0.0
    %2920 = vmatprep.subr.mxu0 0.0
    %2921 = vmatpush1.xpose.msra.mxu0 0.0
    %2922 = vmatprep.subr.mxu0 0.0
    %2923 = vmatpush1.xpose.msra.mxu0 0.0
    %2924 = vmatprep.subr.mxu0 0.0
    %2925 = vmatpush1.xpose.msra.mxu0 0.0
    %2926 = vmatprep.subr.mxu0 0.0
    %2927 = vmatpush1.xpose.msra.mxu0 0.0
    %2928 = vmatprep.subr.mxu0 0.0
    %2929 = vmatpush1.xpose.msra.mxu0 0.0
    %2930 = vmatprep.subr.mxu0 0.0
    %2931 = vmatpush1.xpose.msra.mxu0 0.0
    %2932 = vmatprep.subr.mxu0 0.0
    %2933 = vmatpush1.xpose.msra.mxu0 0.0
    %2934 = vmatprep.subr.mxu0 0.0
    %2935 = vmatpush1.xpose.msra.mxu0 0.0
    %2936 = vmatprep.subr.mxu0 0.0
    %2937 = vmatpush1.xpose.msra.mxu0 0.0
    %2938 = vmatprep.subr.mxu0 0.0
    %2939 = vmatpush1.xpose.msra.mxu0 0.0
    %2940 = vmatprep.mubr.f32.mxu0 0.0
    %2941 = vmatmul.mubr.f32.gmra.mrb[0].mxu0 %v2874
    %v2942 = vpop.f32.mrb[0].mxu0
    %v2943 = vadd.f32 %v466, %v2942
    %v2944 = vpop.f32.mrb[0].mxu0
    %2945 = vdwg.mxu0
    %v2947 = vsel %vm211, %v2872, 0
    %2949 = vmatprep.subr.mxu0 0.0
    %2950 = vmatpush1.xpose.msra.mxu0 %v2295
    %2951 = vmatprep.subr.mxu0 0.0
    %2952 = vmatpush1.xpose.msra.mxu0 0.0
    %2953 = vmatprep.subr.mxu0 0.0
    %2954 = vmatpush1.xpose.msra.mxu0 0.0
    %2955 = vmatprep.subr.mxu0 0.0
    %2956 = vmatpush1.xpose.msra.mxu0 0.0
    %2957 = vmatprep.subr.mxu0 0.0
    %2958 = vmatpush1.xpose.msra.mxu0 0.0
    %2959 = vmatprep.subr.mxu0 0.0
    %2960 = vmatpush1.xpose.msra.mxu0 0.0
    %2961 = vmatprep.subr.mxu0 0.0
    %2962 = vmatpush1.xpose.msra.mxu0 0.0
    %2963 = vmatprep.subr.mxu0 0.0
    %2964 = vmatpush1.xpose.msra.mxu0 0.0
    %2965 = vmatprep.subr.mxu0 0.0
    %2966 = vmatpush1.xpose.msra.mxu0 0.0
    %2967 = vmatprep.subr.mxu0 0.0
    %2968 = vmatpush1.xpose.msra.mxu0 0.0
    %2969 = vmatprep.subr.mxu0 0.0
    %2970 = vmatpush1.xpose.msra.mxu0 0.0
    %2971 = vmatprep.subr.mxu0 0.0
    %2972 = vmatpush1.xpose.msra.mxu0 0.0
    %2973 = vmatprep.subr.mxu0 0.0
    %2974 = vmatpush1.xpose.msra.mxu0 0.0
    %2975 = vmatprep.subr.mxu0 0.0
    %2976 = vmatpush1.xpose.msra.mxu0 0.0
    %2977 = vmatprep.subr.mxu0 0.0
    %2978 = vmatpush1.xpose.msra.mxu0 0.0
    %2979 = vmatprep.subr.mxu0 0.0
    %2980 = vmatpush1.xpose.msra.mxu0 0.0
    %2981 = vmatprep.subr.mxu0 0.0
    %2982 = vmatpush1.xpose.msra.mxu0 0.0
    %2983 = vmatprep.subr.mxu0 0.0
    %2984 = vmatpush1.xpose.msra.mxu0 0.0
    %2985 = vmatprep.subr.mxu0 0.0
    %2986 = vmatpush1.xpose.msra.mxu0 0.0
    %2987 = vmatprep.subr.mxu0 0.0
    %2988 = vmatpush1.xpose.msra.mxu0 0.0
    %2989 = vmatprep.subr.mxu0 0.0
    %2990 = vmatpush1.xpose.msra.mxu0 0.0
    %2991 = vmatprep.subr.mxu0 0.0
    %2992 = vmatpush1.xpose.msra.mxu0 0.0
    %2993 = vmatprep.subr.mxu0 0.0
    %2994 = vmatpush1.xpose.msra.mxu0 0.0
    %2995 = vmatprep.subr.mxu0 0.0
    %2996 = vmatpush1.xpose.msra.mxu0 0.0
    %2997 = vmatprep.subr.mxu0 0.0
    %2998 = vmatpush1.xpose.msra.mxu0 0.0
    %2999 = vmatprep.subr.mxu0 0.0
    %3000 = vmatpush1.xpose.msra.mxu0 0.0
    %3001 = vmatprep.subr.mxu0 0.0
    %3002 = vmatpush1.xpose.msra.mxu0 0.0
    %3003 = vmatprep.subr.mxu0 0.0
    %3004 = vmatpush1.xpose.msra.mxu0 0.0
    %3005 = vmatprep.subr.mxu0 0.0
    %3006 = vmatpush1.xpose.msra.mxu0 0.0
    %3007 = vmatprep.subr.mxu0 0.0
    %3008 = vmatpush1.xpose.msra.mxu0 0.0
    %3009 = vmatprep.subr.mxu0 0.0
    %3010 = vmatpush1.xpose.msra.mxu0 0.0
    %3011 = vmatprep.subr.mxu0 0.0
    %3012 = vmatpush1.xpose.msra.mxu0 0.0
    %3013 = vmatprep.mubr.f32.mxu0 0.0
    %3014 = vmatmul.mubr.f32.gmra.mrb[0].mxu0 %v2947
    %v3015 = vpop.f32.mrb[0].mxu0
    %v3016 = vadd.f32 %v470, %v3015
    %v3017 = vpop.f32.mrb[0].mxu0
    %3018 = vdwg.mxu0
    %v3019 = vsel %vm629, %v2943, -inf
    %3020 = vmax.xlane.f32.xlu0 %v3019
    %v3021 = vpop.xlane.xlu0 %3020
    %v3022 = vsel %vm629, %v3016, -inf
    %3023 = vmax.xlane.f32.xlu0 %v3022
    %v3024 = vpop.xlane.xlu0 %3023
    %v3025 = vsub.f32 %v2943, %v3021
    %v3026 = vsub.f32 %v3016, %v3024
    %v3027 = vmul.f32 %v3025, 1.442695
    %v3028 = vpow.pop %v3027
    %v3029 = vmul.f32 %v3026, 1.442695
    %v3030 = vpow.pop %v3029
    %v3031 = vsel %vm629, %v3028, 0.0
    %3032 = vadd.xlane.f32.xlu0 %v3031
    %v3033 = vpop.xlane.xlu0 %3032
    %v3034 = vsel %vm629, %v3030, 0.0
    %3035 = vadd.xlane.f32.xlu0 %v3034
    %v3036 = vpop.xlane.xlu0 %3035
    %v3037 = vrcp.pop %v3033
    %v3038 = vrcp.pop %v3036
    %v3039 = vmul.f32 %v3028, %v3037
    %v3040 = vmul.f32 %v3030, %v3038
    %v3041 = vmul.f32 %v2201, %v1314
    %v3042 = vmul.f32 %v2204, %v1314
    %3044 = vrot.lane.b32.xlu0 %v3041, 64
    %v3045 = vpop.permute.xlu0 %3044
    %v3048 = vsel %vm629, %v3039, 0
    %3050 = vmatprep.subr.mxu0 0.0
    %3051 = vmatpush1.msra.mxu0 %v3045
    %3052 = vmatprep.subr.mxu0 0.0
    %3053 = vmatpush1.msra.mxu0 0.0
    %3054 = vmatprep.subr.mxu0 0.0
    %3055 = vmatpush1.msra.mxu0 0.0
    %3056 = vmatprep.subr.mxu0 0.0
    %3057 = vmatpush1.msra.mxu0 0.0
    %3058 = vmatprep.subr.mxu0 0.0
    %3059 = vmatpush1.msra.mxu0 0.0
    %3060 = vmatprep.subr.mxu0 0.0
    %3061 = vmatpush1.msra.mxu0 0.0
    %3062 = vmatprep.subr.mxu0 0.0
    %3063 = vmatpush1.msra.mxu0 0.0
    %3064 = vmatprep.subr.mxu0 0.0
    %3065 = vmatpush1.msra.mxu0 0.0
    %3066 = vmatprep.subr.mxu0 0.0
    %3067 = vmatpush1.msra.mxu0 0.0
    %3068 = vmatprep.subr.mxu0 0.0
    %3069 = vmatpush1.msra.mxu0 0.0
    %3070 = vmatprep.subr.mxu0 0.0
    %3071 = vmatpush1.msra.mxu0 0.0
    %3072 = vmatprep.subr.mxu0 0.0
    %3073 = vmatpush1.msra.mxu0 0.0
    %3074 = vmatprep.subr.mxu0 0.0
    %3075 = vmatpush1.msra.mxu0 0.0
    %3076 = vmatprep.subr.mxu0 0.0
    %3077 = vmatpush1.msra.mxu0 0.0
    %3078 = vmatprep.subr.mxu0 0.0
    %3079 = vmatpush1.msra.mxu0 0.0
    %3080 = vmatprep.subr.mxu0 0.0
    %3081 = vmatpush1.msra.mxu0 0.0
    %3082 = vmatprep.subr.mxu0 0.0
    %3083 = vmatpush1.msra.mxu0 0.0
    %3084 = vmatprep.subr.mxu0 0.0
    %3085 = vmatpush1.msra.mxu0 0.0
    %3086 = vmatprep.subr.mxu0 0.0
    %3087 = vmatpush1.msra.mxu0 0.0
    %3088 = vmatprep.subr.mxu0 0.0
    %3089 = vmatpush1.msra.mxu0 0.0
    %3090 = vmatprep.subr.mxu0 0.0
    %3091 = vmatpush1.msra.mxu0 0.0
    %3092 = vmatprep.subr.mxu0 0.0
    %3093 = vmatpush1.msra.mxu0 0.0
    %3094 = vmatprep.subr.mxu0 0.0
    %3095 = vmatpush1.msra.mxu0 0.0
    %3096 = vmatprep.subr.mxu0 0.0
    %3097 = vmatpush1.msra.mxu0 0.0
    %3098 = vmatprep.subr.mxu0 0.0
    %3099 = vmatpush1.msra.mxu0 0.0
    %3100 = vmatprep.subr.mxu0 0.0
    %3101 = vmatpush1.msra.mxu0 0.0
    %3102 = vmatprep.subr.mxu0 0.0
    %3103 = vmatpush1.msra.mxu0 0.0
    %3104 = vmatprep.subr.mxu0 0.0
    %3105 = vmatpush1.msra.mxu0 0.0
    %3106 = vmatprep.subr.mxu0 0.0
    %3107 = vmatpush1.msra.mxu0 0.0
    %3108 = vmatprep.subr.mxu0 0.0
    %3109 = vmatpush1.msra.mxu0 0.0
    %3110 = vmatprep.subr.mxu0 0.0
    %3111 = vmatpush1.msra.mxu0 0.0
    %3112 = vmatprep.subr.mxu0 0.0
    %3113 = vmatpush1.msra.mxu0 0.0
    %3114 = vmatprep.mubr.f32.mxu0 0.0
    %3115 = vmatmul.mubr.f32.gmra.mrb[0].mxu0 %v3048
    %v3116 = vpop.f32.mrb[0].mxu0
    %v3117 = vadd.f32 0.0, %v3116
    %v3118 = vpop.f32.mrb[0].mxu0
    %3119 = vdwg.mxu0
    %3121 = vrot.lane.b32.xlu0 %v3042, 64
    %v3122 = vpop.permute.xlu0 %3121
    %v3125 = vsel %vm629, %v3040, 0
    %3127 = vmatprep.subr.mxu0 0.0
    %3128 = vmatpush1.msra.mxu0 %v3122
    %3129 = vmatprep.subr.mxu0 0.0
    %3130 = vmatpush1.msra.mxu0 0.0
    %3131 = vmatprep.subr.mxu0 0.0
    %3132 = vmatpush1.msra.mxu0 0.0
    %3133 = vmatprep.subr.mxu0 0.0
    %3134 = vmatpush1.msra.mxu0 0.0
    %3135 = vmatprep.subr.mxu0 0.0
    %3136 = vmatpush1.msra.mxu0 0.0
    %3137 = vmatprep.subr.mxu0 0.0
    %3138 = vmatpush1.msra.mxu0 0.0
    %3139 = vmatprep.subr.mxu0 0.0
    %3140 = vmatpush1.msra.mxu0 0.0
    %3141 = vmatprep.subr.mxu0 0.0
    %3142 = vmatpush1.msra.mxu0 0.0
    %3143 = vmatprep.subr.mxu0 0.0
    %3144 = vmatpush1.msra.mxu0 0.0
    %3145 = vmatprep.subr.mxu0 0.0
    %3146 = vmatpush1.msra.mxu0 0.0
    %3147 = vmatprep.subr.mxu0 0.0
    %3148 = vmatpush1.msra.mxu0 0.0
    %3149 = vmatprep.subr.mxu0 0.0
    %3150 = vmatpush1.msra.mxu0 0.0
    %3151 = vmatprep.subr.mxu0 0.0
    %3152 = vmatpush1.msra.mxu0 0.0
    %3153 = vmatprep.subr.mxu0 0.0
    %3154 = vmatpush1.msra.mxu0 0.0
    %3155 = vmatprep.subr.mxu0 0.0
    %3156 = vmatpush1.msra.mxu0 0.0
    %3157 = vmatprep.subr.mxu0 0.0
    %3158 = vmatpush1.msra.mxu0 0.0
    %3159 = vmatprep.subr.mxu0 0.0
    %3160 = vmatpush1.msra.mxu0 0.0
    %3161 = vmatprep.subr.mxu0 0.0
    %3162 = vmatpush1.msra.mxu0 0.0
    %3163 = vmatprep.subr.mxu0 0.0
    %3164 = vmatpush1.msra.mxu0 0.0
    %3165 = vmatprep.subr.mxu0 0.0
    %3166 = vmatpush1.msra.mxu0 0.0
    %3167 = vmatprep.subr.mxu0 0.0
    %3168 = vmatpush1.msra.mxu0 0.0
    %3169 = vmatprep.subr.mxu0 0.0
    %3170 = vmatpush1.msra.mxu0 0.0
    %3171 = vmatprep.subr.mxu0 0.0
    %3172 = vmatpush1.msra.mxu0 0.0
    %3173 = vmatprep.subr.mxu0 0.0
    %3174 = vmatpush1.msra.mxu0 0.0
    %3175 = vmatprep.subr.mxu0 0.0
    %3176 = vmatpush1.msra.mxu0 0.0
    %3177 = vmatprep.subr.mxu0 0.0
    %3178 = vmatpush1.msra.mxu0 0.0
    %3179 = vmatprep.subr.mxu0 0.0
    %3180 = vmatpush1.msra.mxu0 0.0
    %3181 = vmatprep.subr.mxu0 0.0
    %3182 = vmatpush1.msra.mxu0 0.0
    %3183 = vmatprep.subr.mxu0 0.0
    %3184 = vmatpush1.msra.mxu0 0.0
    %3185 = vmatprep.subr.mxu0 0.0
    %3186 = vmatpush1.msra.mxu0 0.0
    %3187 = vmatprep.subr.mxu0 0.0
    %3188 = vmatpush1.msra.mxu0 0.0
    %3189 = vmatprep.subr.mxu0 0.0
    %3190 = vmatpush1.msra.mxu0 0.0
    %3191 = vmatprep.mubr.f32.mxu0 0.0
    %3192 = vmatmul.mubr.f32.gmra.mrb[0].mxu0 %v3125
    %v3193 = vpop.f32.mrb[0].mxu0
    %v3194 = vadd.f32 0.0, %v3193
    %v3195 = vpop.f32.mrb[0].mxu0
    %3196 = vdwg.mxu0
    %v3197 = vadd.f32 %v2791, %v3117
    %v3198 = vadd.f32 %v2868, %v3194
    %v3199 = vmul.f32 %v2207, %v390
    %v3200 = vmul.f32 %v2208, %v390
    %v3202 = vsel %vm211, %v3199, 0
    %3204 = vmatprep.subr.mxu0 0.0
    %3205 = vmatpush1.xpose.msra.mxu0 %v2217
    %3206 = vmatprep.subr.mxu0 0.0
    %3207 = vmatpush1.xpose.msra.mxu0 0.0
    %3208 = vmatprep.subr.mxu0 0.0
    %3209 = vmatpush1.xpose.msra.mxu0 0.0
    %3210 = vmatprep.subr.mxu0 0.0
    %3211 = vmatpush1.xpose.msra.mxu0 0.0
    %3212 = vmatprep.subr.mxu0 0.0
    %3213 = vmatpush1.xpose.msra.mxu0 0.0
    %3214 = vmatprep.subr.mxu0 0.0
    %3215 = vmatpush1.xpose.msra.mxu0 0.0
    %3216 = vmatprep.subr.mxu0 0.0
    %3217 = vmatpush1.xpose.msra.mxu0 0.0
    %3218 = vmatprep.subr.mxu0 0.0
    %3219 = vmatpush1.xpose.msra.mxu0 0.0
    %3220 = vmatprep.subr.mxu0 0.0
    %3221 = vmatpush1.xpose.msra.mxu0 0.0
    %3222 = vmatprep.subr.mxu0 0.0
    %3223 = vmatpush1.xpose.msra.mxu0 0.0
    %3224 = vmatprep.subr.mxu0 0.0
    %3225 = vmatpush1.xpose.msra.mxu0 0.0
    %3226 = vmatprep.subr.mxu0 0.0
    %3227 = vmatpush1.xpose.msra.mxu0 0.0
    %3228 = vmatprep.subr.mxu0 0.0
    %3229 = vmatpush1.xpose.msra.mxu0 0.0
    %3230 = vmatprep.subr.mxu0 0.0
    %3231 = vmatpush1.xpose.msra.mxu0 0.0
    %3232 = vmatprep.subr.mxu0 0.0
    %3233 = vmatpush1.xpose.msra.mxu0 0.0
    %3234 = vmatprep.subr.mxu0 0.0
    %3235 = vmatpush1.xpose.msra.mxu0 0.0
    %3236 = vmatprep.subr.mxu0 0.0
    %3237 = vmatpush1.xpose.msra.mxu0 0.0
    %3238 = vmatprep.subr.mxu0 0.0
    %3239 = vmatpush1.xpose.msra.mxu0 0.0
    %3240 = vmatprep.subr.mxu0 0.0
    %3241 = vmatpush1.xpose.msra.mxu0 0.0
    %3242 = vmatprep.subr.mxu0 0.0
    %3243 = vmatpush1.xpose.msra.mxu0 0.0
    %3244 = vmatprep.subr.mxu0 0.0
    %3245 = vmatpush1.xpose.msra.mxu0 0.0
    %3246 = vmatprep.subr.mxu0 0.0
    %3247 = vmatpush1.xpose.msra.mxu0 0.0
    %3248 = vmatprep.subr.mxu0 0.0
    %3249 = vmatpush1.xpose.msra.mxu0 0.0
    %3250 = vmatprep.subr.mxu0 0.0
    %3251 = vmatpush1.xpose.msra.mxu0 0.0
    %3252 = vmatprep.subr.mxu0 0.0
    %3253 = vmatpush1.xpose.msra.mxu0 0.0
    %3254 = vmatprep.subr.mxu0 0.0
    %3255 = vmatpush1.xpose.msra.mxu0 0.0
    %3256 = vmatprep.subr.mxu0 0.0
    %3257 = vmatpush1.xpose.msra.mxu0 0.0
    %3258 = vmatprep.subr.mxu0 0.0
    %3259 = vmatpush1.xpose.msra.mxu0 0.0
    %3260 = vmatprep.subr.mxu0 0.0
    %3261 = vmatpush1.xpose.msra.mxu0 0.0
    %3262 = vmatprep.subr.mxu0 0.0
    %3263 = vmatpush1.xpose.msra.mxu0 0.0
    %3264 = vmatprep.subr.mxu0 0.0
    %3265 = vmatpush1.xpose.msra.mxu0 0.0
    %3266 = vmatprep.subr.mxu0 0.0
    %3267 = vmatpush1.xpose.msra.mxu0 0.0
    %3268 = vmatprep.mubr.f32.mxu0 0.0
    %3269 = vmatmul.mubr.f32.gmra.mrb[0].mxu0 %v3202
    %v3270 = vpop.f32.mrb[0].mxu0
    %v3271 = vadd.f32 %v466, %v3270
    %v3272 = vpop.f32.mrb[0].mxu0
    %3273 = vdwg.mxu0
    %v3275 = vsel %vm211, %v3200, 0
    %3277 = vmatprep.subr.mxu0 0.0
    %3278 = vmatpush1.xpose.msra.mxu0 %v2295
    %3279 = vmatprep.subr.mxu0 0.0
    %3280 = vmatpush1.xpose.msra.mxu0 0.0
    %3281 = vmatprep.subr.mxu0 0.0
    %3282 = vmatpush1.xpose.msra.mxu0 0.0
    %3283 = vmatprep.subr.mxu0 0.0
    %3284 = vmatpush1.xpose.msra.mxu0 0.0
    %3285 = vmatprep.subr.mxu0 0.0
    %3286 = vmatpush1.xpose.msra.mxu0 0.0
    %3287 = vmatprep.subr.mxu0 0.0
    %3288 = vmatpush1.xpose.msra.mxu0 0.0
    %3289 = vmatprep.subr.mxu0 0.0
    %3290 = vmatpush1.xpose.msra.mxu0 0.0
    %3291 = vmatprep.subr.mxu0 0.0
    %3292 = vmatpush1.xpose.msra.mxu0 0.0
    %3293 = vmatprep.subr.mxu0 0.0
    %3294 = vmatpush1.xpose.msra.mxu0 0.0
    %3295 = vmatprep.subr.mxu0 0.0
    %3296 = vmatpush1.xpose.msra.mxu0 0.0
    %3297 = vmatprep.subr.mxu0 0.0
    %3298 = vmatpush1.xpose.msra.mxu0 0.0
    %3299 = vmatprep.subr.mxu0 0.0
    %3300 = vmatpush1.xpose.msra.mxu0 0.0
    %3301 = vmatprep.subr.mxu0 0.0
    %3302 = vmatpush1.xpose.msra.mxu0 0.0
    %3303 = vmatprep.subr.mxu0 0.0
    %3304 = vmatpush1.xpose.msra.mxu0 0.0
    %3305 = vmatprep.subr.mxu0 0.0
    %3306 = vmatpush1.xpose.msra.mxu0 0.0
    %3307 = vmatprep.subr.mxu0 0.0
    %3308 = vmatpush1.xpose.msra.mxu0 0.0
    %3309 = vmatprep.subr.mxu0 0.0
    %3310 = vmatpush1.xpose.msra.mxu0 0.0
    %3311 = vmatprep.subr.mxu0 0.0
    %3312 = vmatpush1.xpose.msra.mxu0 0.0
    %3313 = vmatprep.subr.mxu0 0.0
    %3314 = vmatpush1.xpose.msra.mxu0 0.0
    %3315 = vmatprep.subr.mxu0 0.0
    %3316 = vmatpush1.xpose.msra.mxu0 0.0
    %3317 = vmatprep.subr.mxu0 0.0
    %3318 = vmatpush1.xpose.msra.mxu0 0.0
    %3319 = vmatprep.subr.mxu0 0.0
    %3320 = vmatpush1.xpose.msra.mxu0 0.0
    %3321 = vmatprep.subr.mxu0 0.0
    %3322 = vmatpush1.xpose.msra.mxu0 0.0
    %3323 = vmatprep.subr.mxu0 0.0
    %3324 = vmatpush1.xpose.msra.mxu0 0.0
    %3325 = vmatprep.subr.mxu0 0.0
    %3326 = vmatpush1.xpose.msra.mxu0 0.0
    %3327 = vmatprep.subr.mxu0 0.0
    %3328 = vmatpush1.xpose.msra.mxu0 0.0
    %3329 = vmatprep.subr.mxu0 0.0
    %3330 = vmatpush1.xpose.msra.mxu0 0.0
    %3331 = vmatprep.subr.mxu0 0.0
    %3332 = vmatpush1.xpose.msra.mxu0 0.0
    %3333 = vmatprep.subr.mxu0 0.0
    %3334 = vmatpush1.xpose.msra.mxu0 0.0
    %3335 = vmatprep.subr.mxu0 0.0
    %3336 = vmatpush1.xpose.msra.mxu0 0.0
    %3337 = vmatprep.subr.mxu0 0.0
    %3338 = vmatpush1.xpose.msra.mxu0 0.0
    %3339 = vmatprep.subr.mxu0 0.0
    %3340 = vmatpush1.xpose.msra.mxu0 0.0
    %3341 = vmatprep.mubr.f32.mxu0 0.0
    %3342 = vmatmul.mubr.f32.gmra.mrb[0].mxu0 %v3275
    %v3343 = vpop.f32.mrb[0].mxu0
    %v3344 = vadd.f32 %v470, %v3343
    %v3345 = vpop.f32.mrb[0].mxu0
    %3346 = vdwg.mxu0
    %v3347 = vsel %vm629, %v3271, -inf
    %3348 = vmax.xlane.f32.xlu0 %v3347
    %v3349 = vpop.xlane.xlu0 %3348
    %v3350 = vsel %vm629, %v3344, -inf
    %3351 = vmax.xlane.f32.xlu0 %v3350
    %v3352 = vpop.xlane.xlu0 %3351
    %v3353 = vsub.f32 %v3271, %v3349
    %v3354 = vsub.f32 %v3344, %v3352
    %v3355 = vmul.f32 %v3353, 1.442695
    %v3356 = vpow.pop %v3355
    %v3357 = vmul.f32 %v3354, 1.442695
    %v3358 = vpow.pop %v3357
    %v3359 = vsel %vm629, %v3356, 0.0
    %3360 = vadd.xlane.f32.xlu0 %v3359
    %v3361 = vpop.xlane.xlu0 %3360
    %v3362 = vsel %vm629, %v3358, 0.0
    %3363 = vadd.xlane.f32.xlu0 %v3362
    %v3364 = vpop.xlane.xlu0 %3363
    %v3365 = vrcp.pop %v3361
    %v3366 = vrcp.pop %v3364
    %v3367 = vmul.f32 %v3356, %v3365
    %v3368 = vmul.f32 %v3358, %v3366
    %v3369 = vmul.f32 %v2201, %v1646
    %v3370 = vmul.f32 %v2204, %v1646
    %3372 = vrot.lane.b32.xlu0 %v3369, 64
    %v3373 = vpop.permute.xlu0 %3372
    %v3376 = vsel %vm629, %v3367, 0
    %3378 = vmatprep.subr.mxu0 0.0
    %3379 = vmatpush1.msra.mxu0 %v3373
    %3380 = vmatprep.subr.mxu0 0.0
    %3381 = vmatpush1.msra.mxu0 0.0
    %3382 = vmatprep.subr.mxu0 0.0
    %3383 = vmatpush1.msra.mxu0 0.0
    %3384 = vmatprep.subr.mxu0 0.0
    %3385 = vmatpush1.msra.mxu0 0.0
    %3386 = vmatprep.subr.mxu0 0.0
    %3387 = vmatpush1.msra.mxu0 0.0
    %3388 = vmatprep.subr.mxu0 0.0
    %3389 = vmatpush1.msra.mxu0 0.0
    %3390 = vmatprep.subr.mxu0 0.0
    %3391 = vmatpush1.msra.mxu0 0.0
    %3392 = vmatprep.subr.mxu0 0.0
    %3393 = vmatpush1.msra.mxu0 0.0
    %3394 = vmatprep.subr.mxu0 0.0
    %3395 = vmatpush1.msra.mxu0 0.0
    %3396 = vmatprep.subr.mxu0 0.0
    %3397 = vmatpush1.msra.mxu0 0.0
    %3398 = vmatprep.subr.mxu0 0.0
    %3399 = vmatpush1.msra.mxu0 0.0
    %3400 = vmatprep.subr.mxu0 0.0
    %3401 = vmatpush1.msra.mxu0 0.0
    %3402 = vmatprep.subr.mxu0 0.0
    %3403 = vmatpush1.msra.mxu0 0.0
    %3404 = vmatprep.subr.mxu0 0.0
    %3405 = vmatpush1.msra.mxu0 0.0
    %3406 = vmatprep.subr.mxu0 0.0
    %3407 = vmatpush1.msra.mxu0 0.0
    %3408 = vmatprep.subr.mxu0 0.0
    %3409 = vmatpush1.msra.mxu0 0.0
    %3410 = vmatprep.subr.mxu0 0.0
    %3411 = vmatpush1.msra.mxu0 0.0
    %3412 = vmatprep.subr.mxu0 0.0
    %3413 = vmatpush1.msra.mxu0 0.0
    %3414 = vmatprep.subr.mxu0 0.0
    %3415 = vmatpush1.msra.mxu0 0.0
    %3416 = vmatprep.subr.mxu0 0.0
    %3417 = vmatpush1.msra.mxu0 0.0
    %3418 = vmatprep.subr.mxu0 0.0
    %3419 = vmatpush1.msra.mxu0 0.0
    %3420 = vmatprep.subr.mxu0 0.0
    %3421 = vmatpush1.msra.mxu0 0.0
    %3422 = vmatprep.subr.mxu0 0.0
    %3423 = vmatpush1.msra.mxu0 0.0
    %3424 = vmatprep.subr.mxu0 0.0
    %3425 = vmatpush1.msra.mxu0 0.0
    %3426 = vmatprep.subr.mxu0 0.0
    %3427 = vmatpush1.msra.mxu0 0.0
    %3428 = vmatprep.subr.mxu0 0.0
    %3429 = vmatpush1.msra.mxu0 0.0
    %3430 = vmatprep.subr.mxu0 0.0
    %3431 = vmatpush1.msra.mxu0 0.0
    %3432 = vmatprep.subr.mxu0 0.0
    %3433 = vmatpush1.msra.mxu0 0.0
    %3434 = vmatprep.subr.mxu0 0.0
    %3435 = vmatpush1.msra.mxu0 0.0
    %3436 = vmatprep.subr.mxu0 0.0
    %3437 = vmatpush1.msra.mxu0 0.0
    %3438 = vmatprep.subr.mxu0 0.0
    %3439 = vmatpush1.msra.mxu0 0.0
    %3440 = vmatprep.subr.mxu0 0.0
    %3441 = vmatpush1.msra.mxu0 0.0
    %3442 = vmatprep.mubr.f32.mxu0 0.0
    %3443 = vmatmul.mubr.f32.gmra.mrb[0].mxu0 %v3376
    %v3444 = vpop.f32.mrb[0].mxu0
    %v3445 = vadd.f32 0.0, %v3444
    %v3446 = vpop.f32.mrb[0].mxu0
    %3447 = vdwg.mxu0
    %3449 = vrot.lane.b32.xlu0 %v3370, 64
    %v3450 = vpop.permute.xlu0 %3449
    %v3453 = vsel %vm629, %v3368, 0
    %3455 = vmatprep.subr.mxu0 0.0
    %3456 = vmatpush1.msra.mxu0 %v3450
    %3457 = vmatprep.subr.mxu0 0.0
    %3458 = vmatpush1.msra.mxu0 0.0
    %3459 = vmatprep.subr.mxu0 0.0
    %3460 = vmatpush1.msra.mxu0 0.0
    %3461 = vmatprep.subr.mxu0 0.0
    %3462 = vmatpush1.msra.mxu0 0.0
    %3463 = vmatprep.subr.mxu0 0.0
    %3464 = vmatpush1.msra.mxu0 0.0
    %3465 = vmatprep.subr.mxu0 0.0
    %3466 = vmatpush1.msra.mxu0 0.0
    %3467 = vmatprep.subr.mxu0 0.0
    %3468 = vmatpush1.msra.mxu0 0.0
    %3469 = vmatprep.subr.mxu0 0.0
    %3470 = vmatpush1.msra.mxu0 0.0
    %3471 = vmatprep.subr.mxu0 0.0
    %3472 = vmatpush1.msra.mxu0 0.0
    %3473 = vmatprep.subr.mxu0 0.0
    %3474 = vmatpush1.msra.mxu0 0.0
    %3475 = vmatprep.subr.mxu0 0.0
    %3476 = vmatpush1.msra.mxu0 0.0
    %3477 = vmatprep.subr.mxu0 0.0
    %3478 = vmatpush1.msra.mxu0 0.0
    %3479 = vmatprep.subr.mxu0 0.0
    %3480 = vmatpush1.msra.mxu0 0.0
    %3481 = vmatprep.subr.mxu0 0.0
    %3482 = vmatpush1.msra.mxu0 0.0
    %3483 = vmatprep.subr.mxu0 0.0
    %3484 = vmatpush1.msra.mxu0 0.0
    %3485 = vmatprep.subr.mxu0 0.0
    %3486 = vmatpush1.msra.mxu0 0.0
    %3487 = vmatprep.subr.mxu0 0.0
    %3488 = vmatpush1.msra.mxu0 0.0
    %3489 = vmatprep.subr.mxu0 0.0
    %3490 = vmatpush1.msra.mxu0 0.0
    %3491 = vmatprep.subr.mxu0 0.0
    %3492 = vmatpush1.msra.mxu0 0.0
    %3493 = vmatprep.subr.mxu0 0.0
    %3494 = vmatpush1.msra.mxu0 0.0
    %3495 = vmatprep.subr.mxu0 0.0
    %3496 = vmatpush1.msra.mxu0 0.0
    %3497 = vmatprep.subr.mxu0 0.0
    %3498 = vmatpush1.msra.mxu0 0.0
    %3499 = vmatprep.subr.mxu0 0.0
    %3500 = vmatpush1.msra.mxu0 0.0
    %3501 = vmatprep.subr.mxu0 0.0
    %3502 = vmatpush1.msra.mxu0 0.0
    %3503 = vmatprep.subr.mxu0 0.0
    %3504 = vmatpush1.msra.mxu0 0.0
    %3505 = vmatprep.subr.mxu0 0.0
    %3506 = vmatpush1.msra.mxu0 0.0
    %3507 = vmatprep.subr.mxu0 0.0
    %3508 = vmatpush1.msra.mxu0 0.0
    %3509 = vmatprep.subr.mxu0 0.0
    %3510 = vmatpush1.msra.mxu0 0.0
    %3511 = vmatprep.subr.mxu0 0.0
    %3512 = vmatpush1.msra.mxu0 0.0
    %3513 = vmatprep.subr.mxu0 0.0
    %3514 = vmatpush1.msra.mxu0 0.0
    %3515 = vmatprep.subr.mxu0 0.0
    %3516 = vmatpush1.msra.mxu0 0.0
    %3517 = vmatprep.subr.mxu0 0.0
    %3518 = vmatpush1.msra.mxu0 0.0
    %3519 = vmatprep.mubr.f32.mxu0 0.0
    %3520 = vmatmul.mubr.f32.gmra.mrb[0].mxu0 %v3453
    %v3521 = vpop.f32.mrb[0].mxu0
    %v3522 = vadd.f32 0.0, %v3521
    %v3523 = vpop.f32.mrb[0].mxu0
    %3524 = vdwg.mxu0
    %v3525 = vadd.f32 %v3197, %v3445
    %v3526 = vadd.f32 %v3198, %v3522
    %s3527 = scalar_lea.vmem %s9, 16
    %v3528 = vld [vmem:[%s3527] sm:$0xf]
    %v3529 = vld [vmem:[%s3527 + $0x4] sm:$0xf]
    %v3530 = vld [vmem:[%s3527 + $0x8] sm:$0xf]
    %v3531 = vld [vmem:[%s3527 + $0xc] sm:$0xf]
    %v3532 = vpack.c.bf16 %v3526, %v3525
    %s3533 = scalar_lea.vmem [#allocation13], 1
    %v3534 = vld [vmem:[%s3533] sm:$0x1]
    %v3536 = vlaneseq
    %v3537 = vshrl.u32 %v3536, 7
    %v3538 = vsub.s32 0, %v3537
    %v3539 = vrot.slane %v3534, %v3538
    %v3545 = vunpack.c.l.b16 %v3528
    %v3546 = vunpack.c.l.b16 %v3529
    %v3547 = vunpack.c.l.b16 %v3530
    %v3548 = vunpack.c.l.b16 %v3531
    %v3549 = vpack.c.b16 %v3546, %v3545
    %v3550 = vpack.c.b16 %v3548, %v3547
    %v3554 = vsel %vm211, %v3532, 0
    %3556 = vmatprep.subr.bf16.mxu0 0
    %3557 = vmatpush1.bf16.msra.mxu0 %v3549
    %3558 = vmatprep.subr.bf16.mxu0 0
    %3559 = vmatpush1.bf16.msra.mxu0 %v3550
    %3560 = vmatprep.subr.bf16.mxu0 0
    %3561 = vmatpush1.bf16.msra.mxu0 0
    %3562 = vmatprep.subr.bf16.mxu0 0
    %3563 = vmatpush1.bf16.msra.mxu0 0
    %3564 = vmatprep.subr.bf16.mxu0 0
    %3565 = vmatpush1.bf16.msra.mxu0 0
    %3566 = vmatprep.subr.bf16.mxu0 0
    %3567 = vmatpush1.bf16.msra.mxu0 0
    %3568 = vmatprep.subr.bf16.mxu0 0
    %3569 = vmatpush1.bf16.msra.mxu0 0
    %3570 = vmatprep.subr.bf16.mxu0 0
    %3571 = vmatpush1.bf16.msra.mxu0 0
    %3572 = vmatprep.subr.bf16.mxu0 0
    %3573 = vmatpush1.bf16.msra.mxu0 0
    %3574 = vmatprep.subr.bf16.mxu0 0
    %3575 = vmatpush1.bf16.msra.mxu0 0
    %3576 = vmatprep.subr.bf16.mxu0 0
    %3577 = vmatpush1.bf16.msra.mxu0 0
    %3578 = vmatprep.subr.bf16.mxu0 0
    %3579 = vmatpush1.bf16.msra.mxu0 0
    %3580 = vmatprep.subr.bf16.mxu0 0
    %3581 = vmatpush1.bf16.msra.mxu0 0
    %3582 = vmatprep.subr.bf16.mxu0 0
    %3583 = vmatpush1.bf16.msra.mxu0 0
    %3584 = vmatprep.subr.bf16.mxu0 0
    %3585 = vmatpush1.bf16.msra.mxu0 0
    %3586 = vmatprep.subr.bf16.mxu0 0
    %3587 = vmatpush1.bf16.msra.mxu0 0
    %3588 = vmatprep.mubr.bf16.mxu0 0
    %3589 = vmatmul.mubr.bf16.gmra.mrb[0].mxu0 %v3554
    %v3590 = vpop.f32.mrb[0].mxu0
    %v3591 = vadd.f32 %v3539, %v3590
    %v3592 = vpop.f32.mrb[0].mxu0
    %v3593 = vpop.f32.mrb[0].mxu0
    %v3594 = vadd.f32 %v3539, %v3593
    %v3595 = vpop.f32.mrb[0].mxu0
    %3596 = vdwg.mxu0
    %v3597 = vadd.f32 %v3591, %v2135
    %v3598 = vadd.f32 %v3594, %v2136
    %s3599 = scalar_lea.vmem [#allocation14], 1
    %v3600 = vld [vmem:[%s3599] sm:$0x1]
    %s3601 = scalar_lea.vmem [#allocation16], 1
    %v3602 = vld [vmem:[%s3601] sm:$0x1]
    %v3603 = vsel %vm211, %v3597, 0.0
    %3604 = vadd.xlane.f32.xlu0 %v3603
    %v3605 = vpop.xlane.xlu0 %3604
    %v3606 = vsel %vm211, %v3598, 0.0
    %3607 = vadd.xlane.f32.xlu0 %v3606
    %v3608 = vpop.xlane.xlu0 %3607
    %v3609 = vmul.f32 %v3605, %v308
    %v3610 = vmul.f32 %v3608, %v308
    %v3611 = vsub.f32 %v3597, %v3609
    %v3612 = vsub.f32 %v3598, %v3610
    %v3613 = vmul.f32 %v3611, %v3611
    %v3614 = vmul.f32 %v3612, %v3612
    %v3615 = vsel %vm211, %v3613, 0.0
    %3616 = vadd.xlane.f32.xlu0 %v3615
    %v3617 = vpop.xlane.xlu0 %3616
    %v3618 = vsel %vm211, %v3614, 0.0
    %3619 = vadd.xlane.f32.xlu0 %v3618
    %v3620 = vpop.xlane.xlu0 %3619
    %v3621 = vmul.f32 %v3617, %v308
    %v3622 = vmul.f32 %v3620, %v308
    %v3623 = vadd.f32 %v3621, 1e-12
    %v3624 = vadd.f32 %v3622, 1e-12
    %v3625 = vrsqrt.pop %v3623
    %v3626 = vrsqrt.pop %v3624
    %v3627 = vmul.f32 %v3611, %v3625
    %v3628 = vmul.f32 %v3612, %v3626
    %v3630 = vlaneseq
    %v3631 = vshrl.u32 %v3630, 7
    %v3632 = vsub.s32 0, %v3631
    %v3633 = vrot.slane %v3600, %v3632
    %v3635 = vmul.f32 %v3627, %v3633
    %v3636 = vmul.f32 %v3628, %v3633
    %v3638 = vlaneseq
    %v3639 = vshrl.u32 %v3638, 7
    %v3640 = vsub.s32 0, %v3639
    %v3641 = vrot.slane %v3602, %v3640
    %v3643 = vadd.f32 %v3635, %v3641
    %v3644 = vadd.f32 %v3636, %v3641
    %s3645 = scalar_lea.vmem %s13, 16
    %v3646 = vld [vmem:[%s3645] sm:$0xf]
    %v3647 = vld [vmem:[%s3645 + $0x4] sm:$0xf]
    %v3648 = vld [vmem:[%s3645 + $0x8] sm:$0xf]
    %v3649 = vld [vmem:[%s3645 + $0xc] sm:$0xf]
    %v3650 = vpack.c.bf16 %v3644, %v3643
    %s3651 = scalar_lea.vmem %s14, 1
    %v3652 = vld [vmem:[%s3651] sm:$0x1]
    %v3654 = vlaneseq
    %v3655 = vshrl.u32 %v3654, 7
    %v3656 = vsub.s32 0, %v3655
    %v3657 = vrot.slane %v3652, %v3656
    %v3663 = vunpack.c.l.b16 %v3646
    %v3664 = vunpack.c.l.b16 %v3647
    %v3665 = vunpack.c.l.b16 %v3648
    %v3666 = vunpack.c.l.b16 %v3649
    %v3667 = vpack.c.b16 %v3664, %v3663
    %v3668 = vpack.c.b16 %v3666, %v3665
    %v3672 = vsel %vm211, %v3650, 0
    %3674 = vmatprep.subr.bf16.mxu0 0
    %3675 = vmatpush1.bf16.msra.mxu0 %v3667
    %3676 = vmatprep.subr.bf16.mxu0 0
    %3677 = vmatpush1.bf16.msra.mxu0 %v3668
    %3678 = vmatprep.subr.bf16.mxu0 0
    %3679 = vmatpush1.bf16.msra.mxu0 0
    %3680 = vmatprep.subr.bf16.mxu0 0
    %3681 = vmatpush1.bf16.msra.mxu0 0
    %3682 = vmatprep.subr.bf16.mxu0 0
    %3683 = vmatpush1.bf16.msra.mxu0 0
    %3684 = vmatprep.subr.bf16.mxu0 0
    %3685 = vmatpush1.bf16.msra.mxu0 0
    %3686 = vmatprep.subr.bf16.mxu0 0
    %3687 = vmatpush1.bf16.msra.mxu0 0
    %3688 = vmatprep.subr.bf16.mxu0 0
    %3689 = vmatpush1.bf16.msra.mxu0 0
    %3690 = vmatprep.subr.bf16.mxu0 0
    %3691 = vmatpush1.bf16.msra.mxu0 0
    %3692 = vmatprep.subr.bf16.mxu0 0
    %3693 = vmatpush1.bf16.msra.mxu0 0
    %3694 = vmatprep.subr.bf16.mxu0 0
    %3695 = vmatpush1.bf16.msra.mxu0 0
    %3696 = vmatprep.subr.bf16.mxu0 0
    %3697 = vmatpush1.bf16.msra.mxu0 0
    %3698 = vmatprep.subr.bf16.mxu0 0
    %3699 = vmatpush1.bf16.msra.mxu0 0
    %3700 = vmatprep.subr.bf16.mxu0 0
    %3701 = vmatpush1.bf16.msra.mxu0 0
    %3702 = vmatprep.subr.bf16.mxu0 0
    %3703 = vmatpush1.bf16.msra.mxu0 0
    %3704 = vmatprep.subr.bf16.mxu0 0
    %3705 = vmatpush1.bf16.msra.mxu0 0
    %3706 = vmatprep.mubr.bf16.mxu0 0
    %3707 = vmatmul.mubr.bf16.gmra.mrb[0].mxu0 %v3672
    %v3708 = vpop.f32.mrb[0].mxu0
    %v3709 = vadd.f32 %v3657, %v3708
    %v3710 = vpop.f32.mrb[0].mxu0
    %v3711 = vpop.f32.mrb[0].mxu0
    %v3712 = vadd.f32 %v3657, %v3711
    %v3713 = vpop.f32.mrb[0].mxu0
    %3714 = vdwg.mxu0
    %v3715 = vmul.f32 %v3709, %v3709
    %v3716 = vmul.f32 %v3712, %v3712
    %v3717 = vmul.f32 %v3709, %v3715
    %v3718 = vmul.f32 %v3712, %v3716
    %v3719 = vmul.f32 %v3717, 0.044715
    %v3720 = vmul.f32 %v3718, 0.044715
    %v3721 = vadd.f32 %v3709, %v3719
    %v3722 = vadd.f32 %v3712, %v3720
    %v3723 = vmul.f32 %v3721, 0.7978846
    %v3724 = vmul.f32 %v3722, 0.7978846
    %v3725 = vtanh.pop %v3723
    %v3726 = vtanh.pop %v3724
    %v3727 = vadd.f32 %v3725, 1.0
    %v3728 = vadd.f32 %v3726, 1.0
    %v3729 = vmul.f32 %v3727, 0.5
    %v3730 = vmul.f32 %v3728, 0.5
    %v3731 = vmul.f32 %v3709, %v3729
    %v3732 = vmul.f32 %v3712, %v3730
    %s3733 = scalar_lea.vmem %s15, 32
    %v3734 = vld [vmem:[%s3733] sm:$0xf]
    %v3735 = vld [vmem:[%s3733 + $0x4] sm:$0xf]
    %v3736 = vld [vmem:[%s3733 + $0x8] sm:$0xf]
    %v3737 = vld [vmem:[%s3733 + $0xc] sm:$0xf]
    %v3738 = vld [vmem:[%s3733 + $0x10] sm:$0xf]
    %v3739 = vld [vmem:[%s3733 + $0x14] sm:$0xf]
    %v3740 = vld [vmem:[%s3733 + $0x18] sm:$0xf]
    %v3741 = vld [vmem:[%s3733 + $0x1c] sm:$0xf]
    %v3742 = vpack.c.bf16 %v3732, %v3731
    %s3743 = scalar_lea.vmem %s16, 1
    %v3744 = vld [vmem:[%s3743] sm:$0x1]
    %v3746 = vlaneseq
    %v3747 = vshrl.u32 %v3746, 7
    %v3748 = vsub.s32 0, %v3747
    %v3749 = vrot.slane %v3744, %v3748
    %v3759 = vunpack.c.l.b16 %v3734
    %v3760 = vunpack.c.l.b16 %v3735
    %v3761 = vunpack.c.l.b16 %v3736
    %v3762 = vunpack.c.l.b16 %v3737
    %v3763 = vunpack.c.l.b16 %v3738
    %v3764 = vunpack.c.l.b16 %v3739
    %v3765 = vunpack.c.l.b16 %v3740
    %v3766 = vunpack.c.l.b16 %v3741
    %v3767 = vpack.c.b16 %v3760, %v3759
    %v3768 = vpack.c.b16 %v3762, %v3761
    %v3769 = vpack.c.b16 %v3764, %v3763
    %v3770 = vpack.c.b16 %v3766, %v3765
    %v3776 = vsel %vm2046, %v3742, 0
    %3778 = vmatprep.subr.bf16.mxu0 0
    %3779 = vmatpush1.bf16.msra.mxu0 %v3767
    %3780 = vmatprep.subr.bf16.mxu0 0
    %3781 = vmatpush1.bf16.msra.mxu0 %v3768
    %3782 = vmatprep.subr.bf16.mxu0 0
    %3783 = vmatpush1.bf16.msra.mxu0 %v3769
    %3784 = vmatprep.subr.bf16.mxu0 0
    %3785 = vmatpush1.bf16.msra.mxu0 %v3770
    %3786 = vmatprep.subr.bf16.mxu0 0
    %3787 = vmatpush1.bf16.msra.mxu0 0
    %3788 = vmatprep.subr.bf16.mxu0 0
    %3789 = vmatpush1.bf16.msra.mxu0 0
    %3790 = vmatprep.subr.bf16.mxu0 0
    %3791 = vmatpush1.bf16.msra.mxu0 0
    %3792 = vmatprep.subr.bf16.mxu0 0
    %3793 = vmatpush1.bf16.msra.mxu0 0
    %3794 = vmatprep.subr.bf16.mxu0 0
    %3795 = vmatpush1.bf16.msra.mxu0 0
    %3796 = vmatprep.subr.bf16.mxu0 0
    %3797 = vmatpush1.bf16.msra.mxu0 0
    %3798 = vmatprep.subr.bf16.mxu0 0
    %3799 = vmatpush1.bf16.msra.mxu0 0
    %3800 = vmatprep.subr.bf16.mxu0 0
    %3801 = vmatpush1.bf16.msra.mxu0 0
    %3802 = vmatprep.subr.bf16.mxu0 0
    %3803 = vmatpush1.bf16.msra.mxu0 0
    %3804 = vmatprep.subr.bf16.mxu0 0
    %3805 = vmatpush1.bf16.msra.mxu0 0
    %3806 = vmatprep.subr.bf16.mxu0 0
    %3807 = vmatpush1.bf16.msra.mxu0 0
    %3808 = vmatprep.subr.bf16.mxu0 0
    %3809 = vmatpush1.bf16.msra.mxu0 0
    %3810 = vmatprep.mubr.bf16.mxu0 0
    %3811 = vmatmul.mubr.bf16.gmra.mrb[0].mxu0 %v3776
    %v3812 = vpop.f32.mrb[0].mxu0
    %v3813 = vadd.f32 %v3749, %v3812
    %v3814 = vpop.f32.mrb[0].mxu0
    %v3815 = vpop.f32.mrb[0].mxu0
    %v3816 = vadd.f32 %v3749, %v3815
    %v3817 = vpop.f32.mrb[0].mxu0
    %3818 = vdwg.mxu0
    %v3819 = vadd.f32 %v3813, %v3643
    %v3820 = vadd.f32 %v3816, %v3644
    %s3821 = scalar_lea.vmem %s17, 1
    %v3822 = vld [vmem:[%s3821] sm:$0x1]
    %s3823 = scalar_lea.vmem %s18, 1
    %v3824 = vld [vmem:[%s3823] sm:$0x1]
    %v3825 = vsel %vm211, %v3819, 0.0
    %3826 = vadd.xlane.f32.xlu0 %v3825
    %v3827 = vpop.xlane.xlu0 %3826
    %v3828 = vsel %vm211, %v3820, 0.0
    %3829 = vadd.xlane.f32.xlu0 %v3828
    %v3830 = vpop.xlane.xlu0 %3829
    %v3831 = vmul.f32 %v3827, %v308
    %v3832 = vmul.f32 %v3830, %v308
    %v3833 = vsub.f32 %v3819, %v3831
    %v3834 = vsub.f32 %v3820, %v3832
    %v3835 = vmul.f32 %v3833, %v3833
    %v3836 = vmul.f32 %v3834, %v3834
    %v3837 = vsel %vm211, %v3835, 0.0
    %3838 = vadd.xlane.f32.xlu0 %v3837
    %v3839 = vpop.xlane.xlu0 %3838
    %v3840 = vsel %vm211, %v3836, 0.0
    %3841 = vadd.xlane.f32.xlu0 %v3840
    %v3842 = vpop.xlane.xlu0 %3841
    %v3843 = vmul.f32 %v3839, %v308
    %v3844 = vmul.f32 %v3842, %v308
    %v3845 = vadd.f32 %v3843, 1e-12
    %v3846 = vadd.f32 %v3844, 1e-12
    %v3847 = vrsqrt.pop %v3845
    %v3848 = vrsqrt.pop %v3846
    %v3849 = vmul.f32 %v3833, %v3847
    %v3850 = vmul.f32 %v3834, %v3848
    %v3852 = vlaneseq
    %v3853 = vshrl.u32 %v3852, 7
    %v3854 = vsub.s32 0, %v3853
    %v3855 = vrot.slane %v3822, %v3854
    %v3857 = vmul.f32 %v3849, %v3855
    %v3858 = vmul.f32 %v3850, %v3855
    %v3860 = vlaneseq
    %v3861 = vshrl.u32 %v3860, 7
    %v3862 = vsub.s32 0, %v3861
    %v3863 = vrot.slane %v3824, %v3862
    %v3865 = vadd.f32 %v3857, %v3863
    %v3866 = vadd.f32 %v3858, %v3863
    %v3867 = vld [vmem:[%s19] sm:$0xff]
    %v3868 = vld [vmem:[%s19 + $0x8] sm:$0xff]
    %v3869 = vld [vmem:[%s19 + $0x10] sm:$0xff]
    %v3870 = vld [vmem:[%s19 + $0x18] sm:$0xff]
    %v3871 = vld [vmem:[%s20] sm:$0x1]
    %v3873 = vlaneseq
    %v3874 = vshrl.u32 %v3873, 7
    %v3875 = vsub.s32 0, %v3874
    %v3876 = vrot.slane %v3871, %v3875
    %v3880 = vrot.slane %v3866, 7
    %vm3881 = vcmask 1041409
    %v3882 = vsel %vm3881, %v3880, %v3865
    %v3883 = vsel %vm211, %v3882, 0
    %3885 = vmatprep.subr.mxu0 0.0
    %3886 = vmatpush1.msra.mxu0 %v3867
    %3887 = vmatprep.subr.mxu0 0.0
    %3888 = vmatpush1.msra.mxu0 %v3868
    %3889 = vmatprep.subr.mxu0 0.0
    %3890 = vmatpush1.msra.mxu0 %v3869
    %3891 = vmatprep.subr.mxu0 0.0
    %3892 = vmatpush1.msra.mxu0 %v3870
    %3893 = vmatprep.subr.mxu0 0.0
    %3894 = vmatpush1.msra.mxu0 0.0
    %3895 = vmatprep.subr.mxu0 0.0
    %3896 = vmatpush1.msra.mxu0 0.0
    %3897 = vmatprep.subr.mxu0 0.0
    %3898 = vmatpush1.msra.mxu0 0.0
    %3899 = vmatprep.subr.mxu0 0.0
    %3900 = vmatpush1.msra.mxu0 0.0
    %3901 = vmatprep.subr.mxu0 0.0
    %3902 = vmatpush1.msra.mxu0 0.0
    %3903 = vmatprep.subr.mxu0 0.0
    %3904 = vmatpush1.msra.mxu0 0.0
    %3905 = vmatprep.subr.mxu0 0.0
    %3906 = vmatpush1.msra.mxu0 0.0
    %3907 = vmatprep.subr.mxu0 0.0
    %3908 = vmatpush1.msra.mxu0 0.0
    %3909 = vmatprep.subr.mxu0 0.0
    %3910 = vmatpush1.msra.mxu0 0.0
    %3911 = vmatprep.subr.mxu0 0.0
    %3912 = vmatpush1.msra.mxu0 0.0
    %3913 = vmatprep.subr.mxu0 0.0
    %3914 = vmatpush1.msra.mxu0 0.0
    %3915 = vmatprep.subr.mxu0 0.0
    %3916 = vmatpush1.msra.mxu0 0.0
    %3917 = vmatprep.subr.mxu0 0.0
    %3918 = vmatpush1.msra.mxu0 0.0
    %3919 = vmatprep.subr.mxu0 0.0
    %3920 = vmatpush1.msra.mxu0 0.0
    %3921 = vmatprep.subr.mxu0 0.0
    %3922 = vmatpush1.msra.mxu0 0.0
    %3923 = vmatprep.subr.mxu0 0.0
    %3924 = vmatpush1.msra.mxu0 0.0
    %3925 = vmatprep.subr.mxu0 0.0
    %3926 = vmatpush1.msra.mxu0 0.0
    %3927 = vmatprep.subr.mxu0 0.0
    %3928 = vmatpush1.msra.mxu0 0.0
    %3929 = vmatprep.subr.mxu0 0.0
    %3930 = vmatpush1.msra.mxu0 0.0
    %3931 = vmatprep.subr.mxu0 0.0
    %3932 = vmatpush1.msra.mxu0 0.0
    %3933 = vmatprep.subr.mxu0 0.0
    %3934 = vmatpush1.msra.mxu0 0.0
    %3935 = vmatprep.subr.mxu0 0.0
    %3936 = vmatpush1.msra.mxu0 0.0
    %3937 = vmatprep.subr.mxu0 0.0
    %3938 = vmatpush1.msra.mxu0 0.0
    %3939 = vmatprep.subr.mxu0 0.0
    %3940 = vmatpush1.msra.mxu0 0.0
    %3941 = vmatprep.subr.mxu0 0.0
    %3942 = vmatpush1.msra.mxu0 0.0
    %3943 = vmatprep.subr.mxu0 0.0
    %3944 = vmatpush1.msra.mxu0 0.0
    %3945 = vmatprep.subr.mxu0 0.0
    %3946 = vmatpush1.msra.mxu0 0.0
    %3947 = vmatprep.subr.mxu0 0.0
    %3948 = vmatpush1.msra.mxu0 0.0
    %3949 = vmatprep.mubr.f32.mxu0 0.0
    %3950 = vmatmul.mubr.f32.gmra.mrb[0].mxu0 %v3883
    %v3951 = vpop.f32.mrb[0].mxu0
    %v3952 = vadd.f32 %v3876, %v3951
    %v3953 = vpop.f32.mrb[0].mxu0
    %3954 = vdwg.mxu0
    %v3955 = vtanh.pop %v3952
    %v3956 = vld [vmem:[%s21] sm:$0xff]
    %v3957 = vld [vmem:[%s21 + $0x8] sm:$0xff]
    %v3958 = vld [vmem:[%s21 + $0x10] sm:$0xff]
    %v3959 = vld [vmem:[%s21 + $0x18] sm:$0xff]
    %v3960 = vld [vmem:[%s22] sm:$0x1]
    %v3962 = vlaneseq
    %v3963 = vshrl.u32 %v3962, 7
    %v3964 = vsub.s32 0, %v3963
    %v3965 = vrot.slane %v3960, %v3964
    %v3968 = vsel %vm211, %v3955, 0
    %3970 = vmatprep.subr.mxu0 0.0
    %3971 = vmatpush1.msra.mxu0 %v3956
    %3972 = vmatprep.subr.mxu0 0.0
    %3973 = vmatpush1.msra.mxu0 %v3957
    %3974 = vmatprep.subr.mxu0 0.0
    %3975 = vmatpush1.msra.mxu0 %v3958
    %3976 = vmatprep.subr.mxu0 0.0
    %3977 = vmatpush1.msra.mxu0 %v3959
    %3978 = vmatprep.subr.mxu0 0.0
    %3979 = vmatpush1.msra.mxu0 0.0
    %3980 = vmatprep.subr.mxu0 0.0
    %3981 = vmatpush1.msra.mxu0 0.0
    %3982 = vmatprep.subr.mxu0 0.0
    %3983 = vmatpush1.msra.mxu0 0.0
    %3984 = vmatprep.subr.mxu0 0.0
    %3985 = vmatpush1.msra.mxu0 0.0
    %3986 = vmatprep.subr.mxu0 0.0
    %3987 = vmatpush1.msra.mxu0 0.0
    %3988 = vmatprep.subr.mxu0 0.0
    %3989 = vmatpush1.msra.mxu0 0.0
    %3990 = vmatprep.subr.mxu0 0.0
    %3991 = vmatpush1.msra.mxu0 0.0
    %3992 = vmatprep.subr.mxu0 0.0
    %3993 = vmatpush1.msra.mxu0 0.0
    %3994 = vmatprep.subr.mxu0 0.0
    %3995 = vmatpush1.msra.mxu0 0.0
    %3996 = vmatprep.subr.mxu0 0.0
    %3997 = vmatpush1.msra.mxu0 0.0
    %3998 = vmatprep.subr.mxu0 0.0
    %3999 = vmatpush1.msra.mxu0 0.0
    %4000 = vmatprep.subr.mxu0 0.0
    %4001 = vmatpush1.msra.mxu0 0.0
    %4002 = vmatprep.subr.mxu0 0.0
    %4003 = vmatpush1.msra.mxu0 0.0
    %4004 = vmatprep.subr.mxu0 0.0
    %4005 = vmatpush1.msra.mxu0 0.0
    %4006 = vmatprep.subr.mxu0 0.0
    %4007 = vmatpush1.msra.mxu0 0.0
    %4008 = vmatprep.subr.mxu0 0.0
    %4009 = vmatpush1.msra.mxu0 0.0
    %4010 = vmatprep.subr.mxu0 0.0
    %4011 = vmatpush1.msra.mxu0 0.0
    %4012 = vmatprep.subr.mxu0 0.0
    %4013 = vmatpush1.msra.mxu0 0.0
    %4014 = vmatprep.subr.mxu0 0.0
    %4015 = vmatpush1.msra.mxu0 0.0
    %4016 = vmatprep.subr.mxu0 0.0
    %4017 = vmatpush1.msra.mxu0 0.0
    %4018 = vmatprep.subr.mxu0 0.0
    %4019 = vmatpush1.msra.mxu0 0.0
    %4020 = vmatprep.subr.mxu0 0.0
    %4021 = vmatpush1.msra.mxu0 0.0
    %4022 = vmatprep.subr.mxu0 0.0
    %4023 = vmatpush1.msra.mxu0 0.0
    %4024 = vmatprep.subr.mxu0 0.0
    %4025 = vmatpush1.msra.mxu0 0.0
    %4026 = vmatprep.subr.mxu0 0.0
    %4027 = vmatpush1.msra.mxu0 0.0
    %4028 = vmatprep.subr.mxu0 0.0
    %4029 = vmatpush1.msra.mxu0 0.0
    %4030 = vmatprep.subr.mxu0 0.0
    %4031 = vmatpush1.msra.mxu0 0.0
    %4032 = vmatprep.subr.mxu0 0.0
    %4033 = vmatpush1.msra.mxu0 0.0
    %4034 = vmatprep.mubr.f32.mxu0 0.0
    %4035 = vmatmul.mubr.f32.gmra.mrb[0].mxu0 %v3968
    %v4036 = vpop.f32.mrb[0].mxu0
    %v4037 = vadd.f32 %v3965, %v4036
    %v4038 = vpop.f32.mrb[0].mxu0
    %4039 = vdwg.mxu0
    %vm4040 = vcmask 9216
    %v4041 = vsel %vm4040, %v4037, -inf
    %4042 = vmax.xlane.f32.xlu0 %v4041
    %v4043 = vpop.xlane.xlu0 %4042
    %v4044 = vsub.f32 %v4037, %v4043
    %v4045 = vmul.f32 %v4044, 1.442695
    %v4046 = vpow.pop %v4045
    %v4047 = vsel %vm4040, %v4046, 0.0
    %4048 = vadd.xlane.f32.xlu0 %v4047
    %v4049 = vpop.xlane.xlu0 %4048
    %v4050 = vrcp.pop %v4049
    %v4051 = vmul.f32 %v4046, %v4050
    %4052 = vst.msk [vmem:[#allocation17] sm:$0x3] %vm4040, %v4051
    // Predicated region
    $region130: #{tpu_custom_call.1} parent=1 // pred_check
      _
    $region131: #{tpu_custom_call.1} parent=1 // pred_check_branch
      %4054 = sbr.rel (0) target = $region133
    $region132: #{tpu_custom_call.1} parent=1 // pred_region
      %s4056 = ssub.s32 32, 32
      %4057 = vsyncadd [#allocation4], %s4056
      %s4059 = sshll.u32 [#allocation17], 4
      %s4060 = int_to_ptr.vmem [resolvable:$true] %s4059
      %4062 = dma.vmem_to_hbm [thread:$0]  %s4060, 32, %s23, [#allocation4]
    $region133: #{tpu_custom_call.1} parent=1 // pred_fallthru
      _
    // Predicated region
    $region134: #{tpu_custom_call.1} parent=1 // pred_check
      _
    $region135: #{tpu_custom_call.1} parent=1 // pred_check_branch
      %4064 = sbr.rel (0) target = $region137
    $region136: #{tpu_custom_call.1} parent=1 // pred_region
      %4065 = dma.done [#allocation4], 32
    $region137: #{tpu_custom_call.1} parent=1 // pred_fallthru
      _
    %4066 = vsyncpa [#allocation3], 1
    %4067 = vsyncpa [#allocation6], 1
    %4068 = vsyncpa [#allocation9], 1
    %4069 = vsyncpa [#allocation12], 1
    %4070 = vsyncpa [#allocation15], 1
    %4071 = vsyncpa [#allocation4], 1

</llo_original>
